<compile_context>
chip_gen: v7x
topology: tpu7x:2x2x1
jax: 0.10.0
libtpu: 0.0.40
codegen_flags: <defaults>
</compile_context>

<pallas_src>
import functools

import jax
import jax.numpy as jnp
from jax.experimental import pallas as pl
from jax.experimental.pallas import tpu as pltpu


# ----------------------------- Pallas kernels ------------------------------

def _matmul_bias_relu_kernel(x_ref, w_ref, b_ref, o_ref):
    """o = relu(x @ w + b) for one M-tile; weight/bias stay VMEM-resident."""
    acc = jnp.dot(x_ref[...], w_ref[...], preferred_element_type=jnp.float32)
    o_ref[...] = jnp.maximum(acc + b_ref[...], 0.0).astype(o_ref.dtype)


def _pick_tile_m(m, target=256):
    """Largest tile <= target that evenly divides m (prefer 128/16-aligned)."""
    if m <= target:
        return m
    for step in (128, 16, 8):
        tm = (target // step) * step
        while tm >= step:
            if m % tm == 0:
                return tm
            tm -= step
    return m  # fallback: single resident block (only for awkward odd M)


def matmul_bias_relu(x, w, b, *, tm_target=256, out_dtype=jnp.bfloat16):
    """y = relu(x @ w + b); x:(M,K) bf16, w:(K,N) bf16, b:(1,N) f32."""
    M, K = x.shape
    Kw, N = w.shape
    assert K == Kw and b.shape == (1, N)
    tm = _pick_tile_m(M, tm_target)
    return pl.pallas_call(
        _matmul_bias_relu_kernel,
        out_shape=jax.ShapeDtypeStruct((M, N), out_dtype),
        grid=(M // tm,),
        in_specs=[
            pl.BlockSpec((tm, K), lambda i: (i, 0)),   # activations: M-tiled
            pl.BlockSpec((K, N), lambda i: (0, 0)),    # weight: resident
            pl.BlockSpec((1, N), lambda i: (0, 0)),    # bias: resident
        ],
        out_specs=pl.BlockSpec((tm, N), lambda i: (i, 0)),
        compiler_params=pltpu.CompilerParams(
            dimension_semantics=("parallel",),          # rows shard across TCs (v7x)
            vmem_limit_bytes=32 * 1024 * 1024,
        ),
    )(x, w, b)


def _dueling_head_kernel(x_ref, w1_ref, b1_ref, w2_ref, b2_ref, o_ref,
                         acc_ref, *, num_actions):
    """Fused dueling head, K-tiled.

    Streams the concatenated [adv1 | val1] fc1 weight over the K grid axis into
    an f32 accumulator; on the last K step applies bias+ReLU, runs the tiny
    block-diagonal second-layer matmul and the dueling combine, and writes only
    the (B, num_actions) Q-values.
    """
    k = pl.program_id(0)

    @pl.when(k == 0)
    def _():
        acc_ref[...] = jnp.zeros_like(acc_ref)

    acc_ref[...] += jnp.dot(x_ref[...], w1_ref[...],
                            preferred_element_type=jnp.float32)

    @pl.when(k == pl.num_programs(0) - 1)
    def _():
        h = jnp.maximum(acc_ref[...] + b1_ref[...], 0.0)            # (B, 1024)
        z = jnp.dot(h, w2_ref[...],
                    preferred_element_type=jnp.float32) + b2_ref[...]  # (B, A+1)
        adv = z[:, :num_actions]
        val = z[:, num_actions:num_actions + 1]
        # PyTorch module uses advantage.mean() over ALL elements (no dim=).
        o_ref[...] = (val + adv - jnp.mean(adv)).astype(o_ref.dtype)


def dueling_head(flat, w1, b1, w2, b2):
    """flat:(B,Kp) bf16, w1:(Kp,2H) bf16, b1:(1,2H), w2:(2H,A+1), b2:(1,A+1)."""
    B, Kp = flat.shape
    Kw, H2 = w1.shape
    assert Kp == Kw
    num_actions = w2.shape[1] - 1
    tk = 128
    for cand in (1024, 896, 768, 640, 512, 384, 256, 128):
        if Kp % cand == 0:
            tk = cand
            break
    kernel = functools.partial(_dueling_head_kernel, num_actions=num_actions)
    return pl.pallas_call(
        kernel,
        out_shape=jax.ShapeDtypeStruct((B, num_actions), jnp.float32),
        grid_spec=pltpu.PrefetchScalarGridSpec(
            num_scalar_prefetch=0,
            grid=(Kp // tk,),
            in_specs=[
                pl.BlockSpec((B, tk), lambda k: (0, k)),         # activations
                pl.BlockSpec((tk, H2), lambda k: (k, 0)),        # fc1 weight stream
                pl.BlockSpec((1, H2), lambda k: (0, 0)),         # fc1 bias
                pl.BlockSpec(w2.shape, lambda k: (0, 0)),        # fc2 (block-diag)
                pl.BlockSpec((1, w2.shape[1]), lambda k: (0, 0)),
            ],
            out_specs=pl.BlockSpec((B, num_actions), lambda k: (0, 0)),
            scratch_shapes=[pltpu.VMEM((B, H2), jnp.float32)],
        ),
        compiler_params=pltpu.CompilerParams(
            dimension_semantics=("arbitrary",),                  # K reduction axis
            vmem_limit_bytes=32 * 1024 * 1024,
        ),
    )(flat, w1, b1, w2, b2)


# ------------------------------- conv glue ---------------------------------

def _im2col_nhwc(x, k, s):
    """x:(B,H,W,C) -> patches (B*Ho*Wo, k*k*C); column order (kh, kw, C)."""
    B, H, W, C = x.shape
    Ho = (H - k) // s + 1
    Wo = (W - k) // s + 1
    cols = [x[:, i:i + s * Ho:s, j:j + s * Wo:s, :]
            for i in range(k) for j in range(k)]          # each (B,Ho,Wo,C)
    p = jnp.stack(cols, axis=3)                           # (B,Ho,Wo,k*k,C)
    return p.reshape(B * Ho * Wo, k * k * C), Ho, Wo


# TODO(synk): the im2col patch matrix is still materialized in HBM by XLA; an
# in-kernel k*k strided-matmul accumulation over the raw NHWC block would keep
# the patch blow-up in VMEM only.
def conv2d_relu_nhwc(x, w_mat, b, *, k, stride):
    """x:(B,H,W,C) bf16, w_mat:(k*k*C,O) bf16, b:(1,O) f32 -> (B,Ho,Wo,O) bf16."""
    B = x.shape[0]
    O = w_mat.shape[1]
    patches, Ho, Wo = _im2col_nhwc(x, k, stride)
    y = matmul_bias_relu(patches, w_mat, b)
    return y.reshape(B, Ho, Wo, O)


# ----------------------------- model parameters ----------------------------

def init_params(key, in_channels=4, num_actions=4):
    """PyTorch-layout raw parameters (OIHW conv weights, (in,out) linears)."""
    keys = jax.random.split(key, 14)

    def conv_w(k, o, c, ks):
        return jax.random.normal(k, (o, c, ks, ks), jnp.float32) / jnp.sqrt(c * ks * ks)

    def lin_w(k, i, o):
        return jax.random.normal(k, (i, o), jnp.float32) / jnp.sqrt(i)

    conv_out = 64 * 7 * 7  # 3136 for the module's 4x84x84 input
    return dict(
        conv1_w=conv_w(keys[0], 32, in_channels, 8),
        conv1_b=jax.random.normal(keys[1], (32,), jnp.float32) * 0.01,
        conv2_w=conv_w(keys[2], 64, 32, 4),
        conv2_b=jax.random.normal(keys[3], (64,), jnp.float32) * 0.01,
        conv3_w=conv_w(keys[4], 64, 64, 3),
        conv3_b=jax.random.normal(keys[5], (64,), jnp.float32) * 0.01,
        adv1_w=lin_w(keys[6], conv_out, 512),
        adv1_b=jax.random.normal(keys[7], (512,), jnp.float32) * 0.01,
        adv2_w=lin_w(keys[8], 512, num_actions),
        adv2_b=jax.random.normal(keys[9], (num_actions,), jnp.float32) * 0.01,
        val1_w=lin_w(keys[10], conv_out, 512),
        val1_b=jax.random.normal(keys[11], (512,), jnp.float32) * 0.01,
        val2_w=lin_w(keys[12], 512, 1),
        val2_b=jax.random.normal(keys[13], (1,), jnp.float32) * 0.01,
    )


def prepare_params(raw, num_actions=4, input_hw=84):
    """One-time layout/precision prep (outside the forward pass)."""
    def conv_mat(w):  # (O,C,kh,kw) -> (kh*kw*C, O), matching _im2col_nhwc order
        O, C, kh, kw = w.shape
        return jnp.transpose(w, (2, 3, 1, 0)).reshape(kh * kw * C, O)

    # Conv output spatial dims of the PyTorch architecture.
    h1 = (input_hw - 8) // 4 + 1
    h2 = (h1 - 4) // 2 + 1
    h3 = (h2 - 3) // 1 + 1
    C3 = 64

    # NHWC-flatten -> NCHW-flatten row permutation for the head fc1 weights:
    # row j = (h*W + w)*C + c of the permuted weight equals
    # row i = c*H*W + h*W + w of the PyTorch weight.
    perm = (jnp.arange(C3)[None, None, :] * (h3 * h3)
            + jnp.arange(h3)[:, None, None] * h3
            + jnp.arange(h3)[None, :, None]).reshape(-1)

    A = num_actions
    w_h1 = jnp.concatenate([raw['adv1_w'][perm], raw['val1_w'][perm]], axis=1)
    K = w_h1.shape[0]
    Kp = ((K + 127) // 128) * 128                      # 3136 -> 3200 for 128-lane K tiling
    w_h1 = jnp.pad(w_h1, ((0, Kp - K), (0, 0))).astype(jnp.bfloat16)
    b_h1 = jnp.concatenate([raw['adv1_b'], raw['val1_b']]).reshape(1, -1)

    # Block-diagonal second layer: [adv2 | 0; 0 | val2] -> one (1024, A+1) dot.
    w_h2 = jnp.zeros((1024, A + 1), jnp.float32)
    w_h2 = w_h2.at[:512, :A].set(raw['adv2_w']).at[512:, A:].set(raw['val2_w'])
    b_h2 = jnp.concatenate([raw['adv2_b'], raw['val2_b']]).reshape(1, A + 1)

    return dict(
        conv1_w=conv_mat(raw['conv1_w'] / 255.0).astype(jnp.bfloat16),  # fold x/255
        conv1_b=raw['conv1_b'].reshape(1, -1),
        conv2_w=conv_mat(raw['conv2_w']).astype(jnp.bfloat16),
        conv2_b=raw['conv2_b'].reshape(1, -1),
        conv3_w=conv_mat(raw['conv3_w']).astype(jnp.bfloat16),
        conv3_b=raw['conv3_b'].reshape(1, -1),
        head_w1=w_h1, head_b1=b_h1, head_w2=w_h2, head_b2=b_h2,
    )


# -------------------------------- forward ----------------------------------

def dueling_dqn_forward(prep, x):
    """x: (B, C, H, W) float32 frames in [0, 255) — PyTorch NCHW interface."""
    x = jnp.transpose(x, (0, 2, 3, 1)).astype(jnp.bfloat16)   # one-time NCHW->NHWC
    x = conv2d_relu_nhwc(x, prep['conv1_w'], prep['conv1_b'], k=8, stride=4)  # (B,20,20,32)
    x = conv2d_relu_nhwc(x, prep['conv2_w'], prep['conv2_b'], k=4, stride=2)  # (B,9,9,64)
    x = conv2d_relu_nhwc(x, prep['conv3_w'], prep['conv3_b'], k=3, stride=1)  # (B,7,7,64)
    B = x.shape[0]
    flat = x.reshape(B, -1)                                   # NHWC flatten (weights pre-permuted)
    Kp = prep['head_w1'].shape[0]
    flat = jnp.pad(flat, ((0, 0), (0, Kp - flat.shape[1])))   # zero-pad K to 128-multiple
    return dueling_head(flat, prep['head_w1'], prep['head_b1'],
                        prep['head_w2'], prep['head_b2'])


# ------------------------------ references ---------------------------------

def _ref_forward_prepared(prep, x):
    """Plain-XLA forward with the SAME prepared bf16 params (tight check)."""
    A = prep['head_w2'].shape[1] - 1
    x = jnp.transpose(x, (0, 2, 3, 1)).astype(jnp.bfloat16)

    def conv(x, w_mat, b, k, s):
        C = x.shape[-1]
        O = w_mat.shape[1]
        w_hwio = w_mat.reshape(k, k, C, O)
        y = jax.lax.conv_general_dilated(
            x, w_hwio, (s, s), 'VALID',
            dimension_numbers=('NHWC', 'HWIO', 'NHWC'),
            preferred_element_type=jnp.float32)
        return jnp.maximum(y + b.reshape(1, 1, 1, O), 0.0).astype(jnp.bfloat16)

    x = conv(x, prep['conv1_w'], prep['conv1_b'], 8, 4)
    x = conv(x, prep['conv2_w'], prep['conv2_b'], 4, 2)
    x = conv(x, prep['conv3_w'], prep['conv3_b'], 3, 1)
    flat = x.reshape(x.shape[0], -1)
    flat = jnp.pad(flat, ((0, 0), (0, prep['head_w1'].shape[0] - flat.shape[1])))
    h = jnp.maximum(jnp.dot(flat, prep['head_w1'],
                            preferred_element_type=jnp.float32) + prep['head_b1'], 0.0)
    z = jnp.dot(h, prep['head_w2'], preferred_element_type=jnp.float32) + prep['head_b2']
    adv, val = z[:, :A], z[:, A:]
    return val + adv - jnp.mean(adv)


def _ref_forward_f32(params, x):
    """Full-precision reference matching the PyTorch module exactly."""
    x = x.astype(jnp.float32) / 255.0

    def conv(x, w, b, s):
        y = jax.lax.conv_general_dilated(
            x, w, (s, s), 'VALID', dimension_numbers=('NCHW', 'OIHW', 'NCHW'))
        return jnp.maximum(y + b[None, :, None, None], 0.0)

    x = conv(x, params['conv1_w'], params['conv1_b'], 4)
    x = conv(x, params['conv2_w'], params['conv2_b'], 2)
    x = conv(x, params['conv3_w'], params['conv3_b'], 1)
    flat = x.reshape(x.shape[0], -1)
    h_a = jnp.maximum(flat @ params['adv1_w'] + params['adv1_b'], 0.0)
    adv = h_a @ params['adv2_w'] + params['adv2_b']
    h_v = jnp.maximum(flat @ params['val1_w'] + params['val1_b'], 0.0)
    val = h_v @ params['val2_w'] + params['val2_b']
    return val + adv - adv.mean()


# ---------------------------------- main ------------------------------------

if __name__ == "__main__":
    key = jax.random.PRNGKey(0)
    pkey, xkey = jax.random.split(key)
    num_actions = 4

    raw = init_params(pkey, in_channels=4, num_actions=num_actions)
    prep = prepare_params(raw, num_actions=num_actions, input_hw=84)

    # Atari-style input: batch=2, 4 stacked 84x84 frames in [0, 255)
    # (84x84 is what the module's Linear(3136, 512) head implies).
    x = jax.random.uniform(xkey, (2, 4, 84, 84), jnp.float32, 0.0, 255.0)

    fwd = jax.jit(dueling_dqn_forward)
    out = jax.block_until_ready(fwd(prep, x))
    assert out.shape == (2, num_actions), out.shape

    # Tight check vs. a plain-XLA forward using the identical bf16 params.
    ref_bf16 = _ref_forward_prepared(prep, x)
    assert jnp.allclose(out, ref_bf16, atol=5e-3, rtol=5e-3), (out, ref_bf16)

    # Loose check vs. the exact f32 PyTorch-semantics reference
    # (difference is only the bf16 weight/activation quantization).
    ref_f32 = _ref_forward_f32(raw, x)
    assert jnp.allclose(out, ref_f32, atol=5e-2, rtol=5e-2), (out, ref_f32)

    print("KERNEL_OK")
</pallas_src>

<mosaic_0001>
module attributes {stable_mosaic.version = 11 : i64} {
  func.func @_matmul_bias_relu_kernel(%arg0: i32, %arg1: memref<160x256xbf16, #tpu.memory_space<vmem>>, %arg2: memref<256x32xbf16, #tpu.memory_space<vmem>>, %arg3: memref<1x32xf32, #tpu.memory_space<vmem>>, %arg4: memref<160x32xbf16, #tpu.memory_space<vmem>>) attributes {dimension_semantics = [#tpu.dimension_semantics<parallel>], iteration_bounds = array<i64: 5>, scalar_prefetch = 0 : i64, scratch_operands = 0 : i64, tpu.core_type = #tpu.core_type<tc>, window_params = [{transform_indices = @transform_0, window_bounds = array<i64: 160, 256>}, {pipeline_mode = #tpu.pipeline_mode<synchronous>, transform_indices = @transform_1, window_bounds = array<i64: 256, 32>}, {pipeline_mode = #tpu.pipeline_mode<synchronous>, transform_indices = @transform_2, window_bounds = array<i64: 1, 32>}, {transform_indices = @transform_3, window_bounds = array<i64: 160, 32>}]} {
    %c0 = arith.constant 0 : index
    %c0_0 = arith.constant 0 : index
    %0 = vector.load %arg1[%c0, %c0_0] : memref<160x256xbf16, #tpu.memory_space<vmem>>, vector<160x256xbf16>
    %c0_1 = arith.constant 0 : index
    %c0_2 = arith.constant 0 : index
    %1 = vector.load %arg2[%c0_1, %c0_2] : memref<256x32xbf16, #tpu.memory_space<vmem>>, vector<256x32xbf16>
    %cst = arith.constant dense<0.000000e+00> : vector<160x32xf32>
    %2 = tpu.matmul %0, %1, %cst {dimension_numbers = #tpu.dot_dimension_numbers<[1], [0], [0], [1], [0, 0, 1, 1], [], []>} : vector<160x256xbf16>, vector<256x32xbf16>, vector<160x32xf32> -> vector<160x32xf32>
    %c0_3 = arith.constant 0 : index
    %c0_4 = arith.constant 0 : index
    %3 = vector.load %arg3[%c0_3, %c0_4] : memref<1x32xf32, #tpu.memory_space<vmem>>, vector<1x32xf32>
    %4 = vector.broadcast %3 : vector<1x32xf32> to vector<160x32xf32>
    %5 = arith.addf %2, %4 : vector<160x32xf32>
    %cst_5 = arith.constant 0.000000e+00 : f32
    %6 = vector.broadcast %cst_5 : f32 to vector<160x32xf32>
    %7 = arith.maximumf %5, %6 : vector<160x32xf32>
    %8 = arith.truncf %7 : vector<160x32xf32> to vector<160x32xbf16>
    %c0_6 = arith.constant 0 : index
    %c0_7 = arith.constant 0 : index
    %9 = vector.load %arg4[%c0_6, %c0_7] : memref<160x32xbf16, #tpu.memory_space<vmem>>, vector<160x32xbf16>
    tpu.vector_store %arg4[%c0_6, %c0_7], %8 {strides = array<i32>} : memref<160x32xbf16, #tpu.memory_space<vmem>>, vector<160x32xbf16>,
    return
  }
  func.func @transform_0(%arg0: i32) -> (i32, i32) {
    %c0_i32 = arith.constant 0 : i32
    %c0_i32_0 = arith.constant 0 : i32
    return %arg0, %c0_i32 : i32, i32
  }
  func.func @transform_1(%arg0: i32) -> (i32, i32) {
    %c0_i32 = arith.constant 0 : i32
    %c0_i32_0 = arith.constant 0 : i32
    %c0_i32_1 = arith.constant 0 : i32
    return %c0_i32, %c0_i32_0 : i32, i32
  }
  func.func @transform_2(%arg0: i32) -> (i32, i32) {
    %c0_i32 = arith.constant 0 : i32
    %c0_i32_0 = arith.constant 0 : i32
    %c0_i32_1 = arith.constant 0 : i32
    return %c0_i32, %c0_i32_0 : i32, i32
  }
  func.func @transform_3(%arg0: i32) -> (i32, i32) {
    %c0_i32 = arith.constant 0 : i32
    %c0_i32_0 = arith.constant 0 : i32
    return %arg0, %c0_i32 : i32, i32
  }
}

module attributes {stable_mosaic.version = 11 : i64} {
  func.func @_matmul_bias_relu_kernel(%arg0: i32, %arg1: memref<162x512xbf16, #tpu.memory_space<vmem>>, %arg2: memref<512x64xbf16, #tpu.memory_space<vmem>>, %arg3: memref<1x64xf32, #tpu.memory_space<vmem>>, %arg4: memref<162x64xbf16, #tpu.memory_space<vmem>>) attributes {dimension_semantics = [#tpu.dimension_semantics<parallel>], iteration_bounds = array<i64: 1>, scalar_prefetch = 0 : i64, scratch_operands = 0 : i64, tpu.core_type = #tpu.core_type<tc>, window_params = [{transform_indices = @transform_0, window_bounds = array<i64: 162, 512>}, {pipeline_mode = #tpu.pipeline_mode<synchronous>, transform_indices = @transform_1, window_bounds = array<i64: 512, 64>}, {pipeline_mode = #tpu.pipeline_mode<synchronous>, transform_indices = @transform_2, window_bounds = array<i64: 1, 64>}, {transform_indices = @transform_3, window_bounds = array<i64: 162, 64>}]} {
    %c0 = arith.constant 0 : index
    %c0_0 = arith.constant 0 : index
    %0 = vector.load %arg1[%c0, %c0_0] : memref<162x512xbf16, #tpu.memory_space<vmem>>, vector<162x512xbf16>
    %c0_1 = arith.constant 0 : index
    %c0_2 = arith.constant 0 : index
    %1 = vector.load %arg2[%c0_1, %c0_2] : memref<512x64xbf16, #tpu.memory_space<vmem>>, vector<512x64xbf16>
    %cst = arith.constant dense<0.000000e+00> : vector<162x64xf32>
    %2 = tpu.matmul %0, %1, %cst {dimension_numbers = #tpu.dot_dimension_numbers<[1], [0], [0], [1], [0, 0, 1, 1], [], []>} : vector<162x512xbf16>, vector<512x64xbf16>, vector<162x64xf32> -> vector<162x64xf32>
    %c0_3 = arith.constant 0 : index
    %c0_4 = arith.constant 0 : index
    %3 = vector.load %arg3[%c0_3, %c0_4] : memref<1x64xf32, #tpu.memory_space<vmem>>, vector<1x64xf32>
    %4 = vector.broadcast %3 : vector<1x64xf32> to vector<162x64xf32>
    %5 = arith.addf %2, %4 : vector<162x64xf32>
    %cst_5 = arith.constant 0.000000e+00 : f32
    %6 = vector.broadcast %cst_5 : f32 to vector<162x64xf32>
    %7 = arith.maximumf %5, %6 : vector<162x64xf32>
    %8 = arith.truncf %7 : vector<162x64xf32> to vector<162x64xbf16>
    %c0_6 = arith.constant 0 : index
    %c0_7 = arith.constant 0 : index
    %9 = vector.load %arg4[%c0_6, %c0_7] : memref<162x64xbf16, #tpu.memory_space<vmem>>, vector<162x64xbf16>
    tpu.vector_store %arg4[%c0_6, %c0_7], %8 {strides = array<i32>} : memref<162x64xbf16, #tpu.memory_space<vmem>>, vector<162x64xbf16>,
    return
  }
  func.func @transform_0(%arg0: i32) -> (i32, i32) {
    %c0_i32 = arith.constant 0 : i32
    %c0_i32_0 = arith.constant 0 : i32
    return %arg0, %c0_i32 : i32, i32
  }
  func.func @transform_1(%arg0: i32) -> (i32, i32) {
    %c0_i32 = arith.constant 0 : i32
    %c0_i32_0 = arith.constant 0 : i32
    %c0_i32_1 = arith.constant 0 : i32
    return %c0_i32, %c0_i32_0 : i32, i32
  }
  func.func @transform_2(%arg0: i32) -> (i32, i32) {
    %c0_i32 = arith.constant 0 : i32
    %c0_i32_0 = arith.constant 0 : i32
    %c0_i32_1 = arith.constant 0 : i32
    return %c0_i32, %c0_i32_0 : i32, i32
  }
  func.func @transform_3(%arg0: i32) -> (i32, i32) {
    %c0_i32 = arith.constant 0 : i32
    %c0_i32_0 = arith.constant 0 : i32
    return %arg0, %c0_i32 : i32, i32
  }
}

module attributes {stable_mosaic.version = 11 : i64} {
  func.func @_matmul_bias_relu_kernel(%arg0: i32, %arg1: memref<98x576xbf16, #tpu.memory_space<vmem>>, %arg2: memref<576x64xbf16, #tpu.memory_space<vmem>>, %arg3: memref<1x64xf32, #tpu.memory_space<vmem>>, %arg4: memref<98x64xbf16, #tpu.memory_space<vmem>>) attributes {dimension_semantics = [#tpu.dimension_semantics<parallel>], iteration_bounds = array<i64: 1>, scalar_prefetch = 0 : i64, scratch_operands = 0 : i64, tpu.core_type = #tpu.core_type<tc>, window_params = [{transform_indices = @transform_0, window_bounds = array<i64: 98, 576>}, {pipeline_mode = #tpu.pipeline_mode<synchronous>, transform_indices = @transform_1, window_bounds = array<i64: 576, 64>}, {pipeline_mode = #tpu.pipeline_mode<synchronous>, transform_indices = @transform_2, window_bounds = array<i64: 1, 64>}, {transform_indices = @transform_3, window_bounds = array<i64: 98, 64>}]} {
    %c0 = arith.constant 0 : index
    %c0_0 = arith.constant 0 : index
    %0 = vector.load %arg1[%c0, %c0_0] : memref<98x576xbf16, #tpu.memory_space<vmem>>, vector<98x576xbf16>
    %c0_1 = arith.constant 0 : index
    %c0_2 = arith.constant 0 : index
    %1 = vector.load %arg2[%c0_1, %c0_2] : memref<576x64xbf16, #tpu.memory_space<vmem>>, vector<576x64xbf16>
    %cst = arith.constant dense<0.000000e+00> : vector<98x64xf32>
    %2 = tpu.matmul %0, %1, %cst {dimension_numbers = #tpu.dot_dimension_numbers<[1], [0], [0], [1], [0, 0, 1, 1], [], []>} : vector<98x576xbf16>, vector<576x64xbf16>, vector<98x64xf32> -> vector<98x64xf32>
    %c0_3 = arith.constant 0 : index
    %c0_4 = arith.constant 0 : index
    %3 = vector.load %arg3[%c0_3, %c0_4] : memref<1x64xf32, #tpu.memory_space<vmem>>, vector<1x64xf32>
    %4 = vector.broadcast %3 : vector<1x64xf32> to vector<98x64xf32>
    %5 = arith.addf %2, %4 : vector<98x64xf32>
    %cst_5 = arith.constant 0.000000e+00 : f32
    %6 = vector.broadcast %cst_5 : f32 to vector<98x64xf32>
    %7 = arith.maximumf %5, %6 : vector<98x64xf32>
    %8 = arith.truncf %7 : vector<98x64xf32> to vector<98x64xbf16>
    %c0_6 = arith.constant 0 : index
    %c0_7 = arith.constant 0 : index
    %9 = vector.load %arg4[%c0_6, %c0_7] : memref<98x64xbf16, #tpu.memory_space<vmem>>, vector<98x64xbf16>
    tpu.vector_store %arg4[%c0_6, %c0_7], %8 {strides = array<i32>} : memref<98x64xbf16, #tpu.memory_space<vmem>>, vector<98x64xbf16>,
    return
  }
  func.func @transform_0(%arg0: i32) -> (i32, i32) {
    %c0_i32 = arith.constant 0 : i32
    %c0_i32_0 = arith.constant 0 : i32
    return %arg0, %c0_i32 : i32, i32
  }
  func.func @transform_1(%arg0: i32) -> (i32, i32) {
    %c0_i32 = arith.constant 0 : i32
    %c0_i32_0 = arith.constant 0 : i32
    %c0_i32_1 = arith.constant 0 : i32
    return %c0_i32, %c0_i32_0 : i32, i32
  }
  func.func @transform_2(%arg0: i32) -> (i32, i32) {
    %c0_i32 = arith.constant 0 : i32
    %c0_i32_0 = arith.constant 0 : i32
    %c0_i32_1 = arith.constant 0 : i32
    return %c0_i32, %c0_i32_0 : i32, i32
  }
  func.func @transform_3(%arg0: i32) -> (i32, i32) {
    %c0_i32 = arith.constant 0 : i32
    %c0_i32_0 = arith.constant 0 : i32
    return %arg0, %c0_i32 : i32, i32
  }
}

module attributes {stable_mosaic.version = 11 : i64} {
  func.func @_dueling_head_kernel(%arg0: i32, %arg1: memref<2x640xbf16, #tpu.memory_space<vmem>>, %arg2: memref<640x1024xbf16, #tpu.memory_space<vmem>>, %arg3: memref<1x1024xf32, #tpu.memory_space<vmem>>, %arg4: memref<1024x5xf32, #tpu.memory_space<vmem>>, %arg5: memref<1x5xf32, #tpu.memory_space<vmem>>, %arg6: memref<2x4xf32, #tpu.memory_space<vmem>>, %arg7: memref<2x1024xf32, #tpu.memory_space<vmem>>) attributes {dimension_semantics = [#tpu.dimension_semantics<arbitrary>], iteration_bounds = array<i64: 5>, scalar_prefetch = 0 : i64, scratch_operands = 1 : i64, tpu.core_type = #tpu.core_type<tc>, window_params = [{transform_indices = @transform_0, window_bounds = array<i64: 2, 640>}, {transform_indices = @transform_1, window_bounds = array<i64: 640, 1024>}, {pipeline_mode = #tpu.pipeline_mode<synchronous>, transform_indices = @transform_2, window_bounds = array<i64: 1, 1024>}, {pipeline_mode = #tpu.pipeline_mode<synchronous>, transform_indices = @transform_3, window_bounds = array<i64: 1024, 5>}, {pipeline_mode = #tpu.pipeline_mode<synchronous>, transform_indices = @transform_4, window_bounds = array<i64: 1, 5>}, {pipeline_mode = #tpu.pipeline_mode<synchronous>, transform_indices = @transform_5, window_bounds = array<i64: 2, 4>}]} {
    %c0_i32 = arith.constant 0 : i32
    %0 = arith.cmpi eq, %arg0, %c0_i32 : i32
    %1 = arith.extui %0 : i1 to i32
    %c0_i32_0 = arith.constant 0 : i32
    %2 = arith.cmpi ne, %1, %c0_i32_0 : i32
    scf.if %2 {
      %cst_9 = arith.constant 0.000000e+00 : f32
      %12 = vector.broadcast %cst_9 : f32 to vector<2x1024xf32>
      %c0_10 = arith.constant 0 : index
      %c0_11 = arith.constant 0 : index
      %13 = vector.load %arg7[%c0_10, %c0_11] : memref<2x1024xf32, #tpu.memory_space<vmem>>, vector<2x1024xf32>
      tpu.vector_store %arg7[%c0_10, %c0_11], %12 {strides = array<i32>} : memref<2x1024xf32, #tpu.memory_space<vmem>>, vector<2x1024xf32>,
    } else {
    }
    %c0 = arith.constant 0 : index
    %c0_1 = arith.constant 0 : index
    %3 = vector.load %arg7[%c0, %c0_1] : memref<2x1024xf32, #tpu.memory_space<vmem>>, vector<2x1024xf32>
    %c0_2 = arith.constant 0 : index
    %c0_3 = arith.constant 0 : index
    %4 = vector.load %arg1[%c0_2, %c0_3] : memref<2x640xbf16, #tpu.memory_space<vmem>>, vector<2x640xbf16>
    %c0_4 = arith.constant 0 : index
    %c0_5 = arith.constant 0 : index
    %5 = vector.load %arg2[%c0_4, %c0_5] : memref<640x1024xbf16, #tpu.memory_space<vmem>>, vector<640x1024xbf16>
    %cst = arith.constant dense<0.000000e+00> : vector<2x1024xf32>
    %6 = tpu.matmul %4, %5, %cst {dimension_numbers = #tpu.dot_dimension_numbers<[1], [0], [0], [1], [0, 0, 1, 1], [], []>} : vector<2x640xbf16>, vector<640x1024xbf16>, vector<2x1024xf32> -> vector<2x1024xf32>
    %7 = arith.addf %3, %6 : vector<2x1024xf32>
    %c0_6 = arith.constant 0 : index
    %c0_7 = arith.constant 0 : index
    %8 = vector.load %arg7[%c0_6, %c0_7] : memref<2x1024xf32, #tpu.memory_space<vmem>>, vector<2x1024xf32>
    tpu.vector_store %arg7[%c0_6, %c0_7], %7 {strides = array<i32>} : memref<2x1024xf32, #tpu.memory_space<vmem>>, vector<2x1024xf32>,
    %c4_i32 = arith.constant 4 : i32
    %9 = arith.cmpi eq, %arg0, %c4_i32 : i32
    %10 = arith.extui %9 : i1 to i32
    %c0_i32_8 = arith.constant 0 : i32
    %11 = arith.cmpi ne, %10, %c0_i32_8 : i32
    scf.if %11 {
      %c0_9 = arith.constant 0 : index
      %c0_10 = arith.constant 0 : index
      %12 = vector.load %arg7[%c0_9, %c0_10] : memref<2x1024xf32, #tpu.memory_space<vmem>>, vector<2x1024xf32>
      %c0_11 = arith.constant 0 : index
      %c0_12 = arith.constant 0 : index
      %13 = vector.load %arg3[%c0_11, %c0_12] : memref<1x1024xf32, #tpu.memory_space<vmem>>, vector<1x1024xf32>
      %14 = vector.broadcast %13 : vector<1x1024xf32> to vector<2x1024xf32>
      %15 = arith.addf %12, %14 : vector<2x1024xf32>
      %cst_13 = arith.constant 0.000000e+00 : f32
      %16 = vector.broadcast %cst_13 : f32 to vector<2x1024xf32>
      %17 = arith.maximumf %15, %16 : vector<2x1024xf32>
      %c0_14 = arith.constant 0 : index
      %c0_15 = arith.constant 0 : index
      %18 = vector.load %arg4[%c0_14, %c0_15] : memref<1024x5xf32, #tpu.memory_space<vmem>>, vector<1024x5xf32>
      %cst_16 = arith.constant dense<0.000000e+00> : vector<2x5xf32>
      %19 = tpu.matmul %17, %18, %cst_16 {dimension_numbers = #tpu.dot_dimension_numbers<[1], [0], [0], [1], [0, 0, 1, 1], [], []>} : vector<2x1024xf32>, vector<1024x5xf32>, vector<2x5xf32> -> vector<2x5xf32>
      %c0_17 = arith.constant 0 : index
      %c0_18 = arith.constant 0 : index
      %20 = vector.load %arg5[%c0_17, %c0_18] : memref<1x5xf32, #tpu.memory_space<vmem>>, vector<1x5xf32>
      %21 = vector.broadcast %20 : vector<1x5xf32> to vector<2x5xf32>
      %22 = arith.addf %19, %21 : vector<2x5xf32>
      %23 = vector.extract_strided_slice %22 {offsets = [0, 0], sizes = [2, 4], strides = [1, 1]} : vector<2x5xf32> to vector<2x4xf32>
      %24 = vector.extract_strided_slice %22 {offsets = [0, 4], sizes = [2, 1], strides = [1, 1]} : vector<2x5xf32> to vector<2x1xf32>
      %25 = vector.broadcast %24 : vector<2x1xf32> to vector<2x4xf32>
      %26 = arith.addf %25, %23 : vector<2x4xf32>
      %27 = vector.shape_cast %23 : vector<2x4xf32> to vector<1x2x4xf32>
      %cst_19 = arith.constant dense<0.000000e+00> : vector<1xf32>
      %28 = vector.multi_reduction <add>, %27, %cst_19 [1, 2] : vector<1x2x4xf32> to vector<1xf32>
      %29 = vector.shape_cast %28 : vector<1xf32> to vector<1x1x1xf32>
      %30 = vector.extract %29[0, 0, 0] : f32 from vector<1x1x1xf32>
      %cst_20 = arith.constant 8.000000e+00 : f32
      %31 = arith.divf %30, %cst_20 : f32
      %32 = vector.broadcast %31 : f32 to vector<2x4xf32>
      %33 = arith.subf %26, %32 : vector<2x4xf32>
      %c0_21 = arith.constant 0 : index
      %c0_22 = arith.constant 0 : index
      %34 = vector.load %arg6[%c0_21, %c0_22] : memref<2x4xf32, #tpu.memory_space<vmem>>, vector<2x4xf32>
      tpu.vector_store %arg6[%c0_21, %c0_22], %33 {strides = array<i32>} : memref<2x4xf32, #tpu.memory_space<vmem>>, vector<2x4xf32>,
    } else {
    }
    return
  }
  func.func @transform_0(%arg0: i32) -> (i32, i32) {
    %c0_i32 = arith.constant 0 : i32
    %c0_i32_0 = arith.constant 0 : i32
    return %c0_i32, %arg0 : i32, i32
  }
  func.func @transform_1(%arg0: i32) -> (i32, i32) {
    %c0_i32 = arith.constant 0 : i32
    %c0_i32_0 = arith.constant 0 : i32
    return %arg0, %c0_i32 : i32, i32
  }
  func.func @transform_2(%arg0: i32) -> (i32, i32) {
    %c0_i32 = arith.constant 0 : i32
    %c0_i32_0 = arith.constant 0 : i32
    %c0_i32_1 = arith.constant 0 : i32
    return %c0_i32, %c0_i32_0 : i32, i32
  }
  func.func @transform_3(%arg0: i32) -> (i32, i32) {
    %c0_i32 = arith.constant 0 : i32
    %c0_i32_0 = arith.constant 0 : i32
    %c0_i32_1 = arith.constant 0 : i32
    return %c0_i32, %c0_i32_0 : i32, i32
  }
  func.func @transform_4(%arg0: i32) -> (i32, i32) {
    %c0_i32 = arith.constant 0 : i32
    %c0_i32_0 = arith.constant 0 : i32
    %c0_i32_1 = arith.constant 0 : i32
    return %c0_i32, %c0_i32_0 : i32, i32
  }
  func.func @transform_5(%arg0: i32) -> (i32, i32) {
    %c0_i32 = arith.constant 0 : i32
    %c0_i32_0 = arith.constant 0 : i32
    %c0_i32_1 = arith.constant 0 : i32
    return %c0_i32, %c0_i32_0 : i32, i32
  }
}

</mosaic_0001>

<llo_original>
// kernel: dueling_dqn_forward.4
$region0: #{dueling_dqn_forward.4}
  #allocation0 [shape = 'u32[]', space=smem, size = 0x4, offset = 0x4, fixed_abs, tag = 'smem constant byte address 0x4 - core index']
  #allocation1 [shape = 'u32[144,128]{1,0:T(1,128)}', space=vmem, size = 0x12000, scoped, tag = 'internal scratch']
  %s0 = inlined_call_operand.vmem [shape: bf16[800,256], index: 0, kind: input, shape index: {}]
  %s1 = inlined_call_operand.vmem [shape: bf16[256,32], index: 1, kind: input, shape index: {}]
  %s2 = inlined_call_operand.vmem [shape: f32[1,32], index: 2, kind: input, shape index: {}]
  %s3 = inlined_call_operand.vmem [shape: bf16[800,32], index: 3, kind: output, shape index: {}]
  %s4 = sld [smem:[#allocation0]]
  $region45: #{dueling_dqn_forward.4} parent=0
    _
  %s6 = ssub.s32 1, %s4
  %s7 = scalar_select 0, %s6, %s4
  loop: start=0, step=1, limit=7
  $region2: #{dueling_dqn_forward.4} parent=0 // loop_pre_header
    _
  $region3: #{dueling_dqn_forward.4} parent=0 // loop_header
    %s9 = sphi 0, %s13
    %p10 = scmp.ge.s32.totalorder %s9, 7
    %s19 = sphi 0, %s21
    %s22 = sphi 0, %s19
    %s23 = sphi 0, %s22
    %s39 = sphi 0, %s23
    %s43 = sphi 0, %s43
    %s45 = sphi 0, %s43
    %s46 = sphi 0, %s45
    %s60 = sphi 0, %s46
    %s64 = sphi 0, %s64
    %s66 = sphi 0, %s64
    %s67 = sphi 0, %s66
    %s81 = sphi 0, %s67
    %s87 = sphi 0, %s89
    %s90 = sphi 0, %s87
    %s91 = sphi 0, %s90
    %s107 = sphi 0, %s91
  $region4: #{dueling_dqn_forward.4} parent=0 // loop_header_branch
    %12 = sbr.rel (%p10) target = $region8
  $region5: #{dueling_dqn_forward.4} parent=0 // loop_body
    %s14 = ssub.s32 %s9, 1
    %s15 = ssub.s32 %s9, 2
    %s16 = sadd.s32 %s9, 1
    %s17 = ssub.s32 %s9, %s16
    %p18 = scmp.eq.s32.totalorder %s17, 0
    %s20 = sadd.s32 %s19, 1
    %s21 = scalar_select %p18, %s19, %s20
    %p24 = pneg %p18
    %p25 = scmp.eq.s32.totalorder %s9, 4
    %p26 = por %p24, %p25
    %p27 = scmp.ne.s32.totalorder %s19, %s22
    %p28 = scmp.eq.s32.totalorder %s9, 0
    %p29 = por %p27, %p28
    %p30 = scmp.ne.s32.totalorder %s19, %s22
    %p31 = scmp.eq.s32.totalorder %s14, 4
    %p32 = por %p30, %p31
    %p33 = scmp.ne.s32.totalorder %s22, %s23
    %p34 = scmp.eq.s32.totalorder %s14, 0
    %p35 = por %p33, %p34
    %p36 = scmp.ne.s32.totalorder %s22, %s23
    %p37 = scmp.eq.s32.totalorder %s15, 4
    %p38 = por %p36, %p37
    %p40 = scmp.ne.s32.totalorder %s23, %s39
    %p41 = scmp.eq.s32.totalorder %s15, 0
    %p42 = por %p40, %p41
    %s44 = sadd.s32 %s43, 1
    %p47 = scmp.eq.s32.totalorder %s9, 4
    %p48 = scmp.ne.s32.totalorder %s43, %s45
    %p49 = scmp.eq.s32.totalorder %s9, 0
    %p50 = por %p48, %p49
    %p51 = scmp.ne.s32.totalorder %s43, %s45
    %p52 = scmp.eq.s32.totalorder %s14, 4
    %p53 = por %p51, %p52
    %p54 = scmp.ne.s32.totalorder %s45, %s46
    %p55 = scmp.eq.s32.totalorder %s14, 0
    %p56 = por %p54, %p55
    %p57 = scmp.ne.s32.totalorder %s45, %s46
    %p58 = scmp.eq.s32.totalorder %s15, 4
    %p59 = por %p57, %p58
    %p61 = scmp.ne.s32.totalorder %s46, %s60
    %p62 = scmp.eq.s32.totalorder %s15, 0
    %p63 = por %p61, %p62
    %s65 = sadd.s32 %s64, 1
    %p68 = scmp.eq.s32.totalorder %s9, 4
    %p69 = scmp.ne.s32.totalorder %s64, %s66
    %p70 = scmp.eq.s32.totalorder %s9, 0
    %p71 = por %p69, %p70
    %p72 = scmp.ne.s32.totalorder %s64, %s66
    %p73 = scmp.eq.s32.totalorder %s14, 4
    %p74 = por %p72, %p73
    %p75 = scmp.ne.s32.totalorder %s66, %s67
    %p76 = scmp.eq.s32.totalorder %s14, 0
    %p77 = por %p75, %p76
    %p78 = scmp.ne.s32.totalorder %s66, %s67
    %p79 = scmp.eq.s32.totalorder %s15, 4
    %p80 = por %p78, %p79
    %p82 = scmp.ne.s32.totalorder %s67, %s81
    %p83 = scmp.eq.s32.totalorder %s15, 0
    %p84 = por %p82, %p83
    %s85 = ssub.s32 %s9, %s16
    %p86 = scmp.eq.s32.totalorder %s85, 0
    %s88 = sadd.s32 %s87, 1
    %s89 = scalar_select %p86, %s87, %s88
    %p92 = pneg %p86
    %p93 = scmp.eq.s32.totalorder %s9, 4
    %p94 = por %p92, %p93
    %p95 = scmp.ne.s32.totalorder %s87, %s90
    %p96 = scmp.eq.s32.totalorder %s9, 0
    %p97 = por %p95, %p96
    %p98 = scmp.ne.s32.totalorder %s87, %s90
    %p99 = scmp.eq.s32.totalorder %s14, 4
    %p100 = por %p98, %p99
    %p101 = scmp.ne.s32.totalorder %s90, %s91
    %p102 = scmp.eq.s32.totalorder %s14, 0
    %p103 = por %p101, %p102
    %p104 = scmp.ne.s32.totalorder %s90, %s91
    %p105 = scmp.eq.s32.totalorder %s15, 4
    %p106 = por %p104, %p105
    %p108 = scmp.ne.s32.totalorder %s91, %s107
    %p109 = scmp.eq.s32.totalorder %s15, 0
    %p110 = por %p108, %p109
    %p111 = scmp.le.s32.totalorder 1, %s9
    %p112 = scmp.lt.s32.totalorder %s9, 6
    %p113 = pnand %p111, %p112
    %p114 = pneg %p113
    // Predicated region
    $region9: #{dueling_dqn_forward.4} parent=5 // pred_check
      _
    $region10: #{dueling_dqn_forward.4} parent=5 // pred_check_branch
      %116 = sbr.rel (%p113) target = $region12
    $region11: #{dueling_dqn_forward.4} parent=5 // pred_region
      %s117 = ssub.s32 %s9, 1
      // Predicated region
      $region13: #{dueling_dqn_forward.4} parent=11 // pred_check
        %p118 = pneg %p56
      $region14: #{dueling_dqn_forward.4} parent=11 // pred_check_branch
        %120 = sbr.rel (%p118) target = $region16
      $region15: #{dueling_dqn_forward.4} parent=11 // pred_region
        _
      $region16: #{dueling_dqn_forward.4} parent=11 // pred_fallthru
        _
      // Predicated region
      $region17: #{dueling_dqn_forward.4} parent=11 // pred_check
        %p121 = pneg %p77
      $region18: #{dueling_dqn_forward.4} parent=11 // pred_check_branch
        %123 = sbr.rel (%p121) target = $region20
      $region19: #{dueling_dqn_forward.4} parent=11 // pred_region
        _
      $region20: #{dueling_dqn_forward.4} parent=11 // pred_fallthru
        _
    $region12: #{dueling_dqn_forward.4} parent=5 // pred_fallthru
      _
    %p124 = scmp.lt.s32.totalorder %s9, 5
    // Predicated region
    $region21: #{dueling_dqn_forward.4} parent=5 // pred_check
      %p125 = pneg %p124
    $region22: #{dueling_dqn_forward.4} parent=5 // pred_check_branch
      %127 = sbr.rel (%p125) target = $region24
    $region23: #{dueling_dqn_forward.4} parent=5 // pred_region
      // Predicated region
      $region25: #{dueling_dqn_forward.4} parent=23 // pred_check
        %p128 = pneg %p29
      $region26: #{dueling_dqn_forward.4} parent=23 // pred_check_branch
        %130 = sbr.rel (%p128) target = $region28
      $region27: #{dueling_dqn_forward.4} parent=23 // pred_region
        %s131 = smul.u32 20, %s9
        %p132 = scmp.lt.s32.totalorder %s131, 99
        %s133 = scalar_select %p132, %s131, 99
        %s134 = smul.addr %s133, 2
        %s135 = smul.addr %s134, 4
        %s136 = scalar_lea.vmem %s0, %s135
        %s137 = smul.u32 20, %s9
      $region28: #{dueling_dqn_forward.4} parent=23 // pred_fallthru
        _
    $region24: #{dueling_dqn_forward.4} parent=5 // pred_fallthru
      _
    %p138 = scmp.le.s32.totalorder 1, %s9
    %p139 = scmp.lt.s32.totalorder %s9, 6
    %p140 = pnand %p138, %p139
    %p141 = pneg %p140
    // Predicated region
    $region29: #{dueling_dqn_forward.4} parent=5 // pred_check
      _
    $region30: #{dueling_dqn_forward.4} parent=5 // pred_check_branch
      %143 = sbr.rel (%p140) target = $region32
    $region31: #{dueling_dqn_forward.4} parent=5 // pred_region
      %s144 = ssub.s32 %s9, 1
      %s145 = smul.u32 20, %s14
      %p146 = scmp.lt.s32.totalorder %s145, 99
      %s147 = scalar_select %p146, %s145, 99
      %s148 = smul.addr %s147, 2
      %s149 = smul.addr %s148, 4
      %s150 = scalar_lea.vmem %s0, %s149
      %p151 = pneg %p35
      %p152 = pneg %p32
      %p153 = pneg %p56
      %p154 = pneg %p53
      %p155 = pneg %p77
      %p156 = pneg %p74
      %p157 = pneg %p103
      %p158 = pneg %p100
      %s159 = smul.u32 20, %s14
      %p160 = scmp.lt.s32.totalorder %s159, 99
      %s161 = scalar_select %p160, %s159, 99
      %s162 = smul.addr %s161, 4
      %s163 = scalar_lea.vmem %s3, %s162
      %s164 = smul.u32 20, %s14
      %p165 = scmp.lt.s32.totalorder %s164, 99
      %s166 = scalar_select %p165, %s164, 99
      %s167 = smul.addr %s166, 2
      %s168 = smul.addr %s167, 4
      %s169 = scalar_lea.vmem %s0, %s168
      %s170 = smul.u32 20, %s14
      %s171 = smul.u32 20, %s14
      %p172 = scmp.lt.s32.totalorder %s171, 99
      %s173 = scalar_select %p172, %s171, 99
      %s174 = smul.addr %s173, 4
      %s175 = scalar_lea.vmem %s3, %s174
      %s176 = smul.u32 20, %s14
      %v178 = vld [vmem:[%s169] sm:$0xff]
      %v179 = vld [vmem:[%s169 + $0x8] sm:$0xff]
      %v180 = vld [vmem:[%s169 + $0x10] sm:$0xff]
      %v181 = vld [vmem:[%s169 + $0x18] sm:$0xff]
      %v182 = vld [vmem:[%s169 + $0x20] sm:$0xff]
      %v183 = vld [vmem:[%s169 + $0x28] sm:$0xff]
      %v184 = vld [vmem:[%s169 + $0x30] sm:$0xff]
      %v185 = vld [vmem:[%s169 + $0x38] sm:$0xff]
      %v186 = vld [vmem:[%s169 + $0x40] sm:$0xff]
      %v187 = vld [vmem:[%s169 + $0x48] sm:$0xff]
      %v188 = vld [vmem:[%s169 + $0x50] sm:$0xff]
      %v189 = vld [vmem:[%s169 + $0x58] sm:$0xff]
      %v190 = vld [vmem:[%s169 + $0x60] sm:$0xff]
      %v191 = vld [vmem:[%s169 + $0x68] sm:$0xff]
      %v192 = vld [vmem:[%s169 + $0x70] sm:$0xff]
      %v193 = vld [vmem:[%s169 + $0x78] sm:$0xff]
      %v194 = vld [vmem:[%s169 + $0x80] sm:$0xff]
      %v195 = vld [vmem:[%s169 + $0x88] sm:$0xff]
      %v196 = vld [vmem:[%s169 + $0x90] sm:$0xff]
      %v197 = vld [vmem:[%s169 + $0x98] sm:$0xff]
      %v198 = vld [vmem:[%s1] sm:$0xf]
      %v199 = vld [vmem:[%s1 + $0x4] sm:$0xf]
      %v200 = vld [vmem:[%s1 + $0x8] sm:$0xf]
      %v201 = vld [vmem:[%s1 + $0xc] sm:$0xf]
      %v202 = vld [vmem:[%s1 + $0x10] sm:$0xf]
      %v203 = vld [vmem:[%s1 + $0x14] sm:$0xf]
      %v204 = vld [vmem:[%s1 + $0x18] sm:$0xf]
      %v205 = vld [vmem:[%s1 + $0x1c] sm:$0xf]
      %v206 = vld [vmem:[%s1 + $0x20] sm:$0xf]
      %v207 = vld [vmem:[%s1 + $0x24] sm:$0xf]
      %v208 = vld [vmem:[%s1 + $0x28] sm:$0xf]
      %v209 = vld [vmem:[%s1 + $0x2c] sm:$0xf]
      %v210 = vld [vmem:[%s1 + $0x30] sm:$0xf]
      %v211 = vld [vmem:[%s1 + $0x34] sm:$0xf]
      %v212 = vld [vmem:[%s1 + $0x38] sm:$0xf]
      %v213 = vld [vmem:[%s1 + $0x3c] sm:$0xf]
      %v214 = vld [vmem:[%s1 + $0x40] sm:$0xf]
      %v215 = vld [vmem:[%s1 + $0x44] sm:$0xf]
      %v216 = vld [vmem:[%s1 + $0x48] sm:$0xf]
      %v217 = vld [vmem:[%s1 + $0x4c] sm:$0xf]
      %v218 = vld [vmem:[%s1 + $0x50] sm:$0xf]
      %v219 = vld [vmem:[%s1 + $0x54] sm:$0xf]
      %v220 = vld [vmem:[%s1 + $0x58] sm:$0xf]
      %v221 = vld [vmem:[%s1 + $0x5c] sm:$0xf]
      %v222 = vld [vmem:[%s1 + $0x60] sm:$0xf]
      %v223 = vld [vmem:[%s1 + $0x64] sm:$0xf]
      %v224 = vld [vmem:[%s1 + $0x68] sm:$0xf]
      %v225 = vld [vmem:[%s1 + $0x6c] sm:$0xf]
      %v226 = vld [vmem:[%s1 + $0x70] sm:$0xf]
      %v227 = vld [vmem:[%s1 + $0x74] sm:$0xf]
      %v228 = vld [vmem:[%s1 + $0x78] sm:$0xf]
      %v229 = vld [vmem:[%s1 + $0x7c] sm:$0xf]
      %v230 = vld [vmem:[%s2] sm:$0x1]
      %v232 = vlaneseq
      %v233 = vshrl.u32 %v232, 7
      %v234 = vsub.s32 0, %v233
      %v235 = vrot.slane %v230, %v234
      %v257 = vunpack.c.l.b16 %v178
      %v258 = vunpack.c.h.b16 %v178
      %v259 = vunpack.c.l.b16 %v179
      %v260 = vunpack.c.h.b16 %v179
      %v261 = vunpack.c.l.b16 %v180
      %v262 = vunpack.c.h.b16 %v180
      %v263 = vunpack.c.l.b16 %v181
      %v264 = vunpack.c.h.b16 %v181
      %v265 = vunpack.c.l.b16 %v182
      %v266 = vunpack.c.h.b16 %v182
      %v267 = vunpack.c.l.b16 %v183
      %v268 = vunpack.c.h.b16 %v183
      %v269 = vunpack.c.l.b16 %v184
      %v270 = vunpack.c.h.b16 %v184
      %v271 = vunpack.c.l.b16 %v185
      %v272 = vunpack.c.h.b16 %v185
      %v273 = vunpack.c.l.b16 %v186
      %v274 = vunpack.c.h.b16 %v186
      %v275 = vunpack.c.l.b16 %v187
      %v276 = vunpack.c.h.b16 %v187
      %v277 = vunpack.c.l.b16 %v188
      %v278 = vunpack.c.h.b16 %v188
      %v279 = vunpack.c.l.b16 %v189
      %v280 = vunpack.c.h.b16 %v189
      %v281 = vunpack.c.l.b16 %v190
      %v282 = vunpack.c.h.b16 %v190
      %v283 = vunpack.c.l.b16 %v191
      %v284 = vunpack.c.h.b16 %v191
      %v285 = vunpack.c.l.b16 %v192
      %v286 = vunpack.c.h.b16 %v192
      %v287 = vunpack.c.l.b16 %v193
      %v288 = vunpack.c.h.b16 %v193
      %v289 = vunpack.c.l.b16 %v194
      %v290 = vunpack.c.h.b16 %v194
      %v291 = vunpack.c.l.b16 %v195
      %v292 = vunpack.c.h.b16 %v195
      %v293 = vunpack.c.l.b16 %v196
      %v294 = vunpack.c.h.b16 %v196
      %v295 = vunpack.c.l.b16 %v197
      %v296 = vunpack.c.h.b16 %v197
      %v297 = vpack.c.b16 %v259, %v257
      %v298 = vpack.c.b16 %v260, %v258
      %v299 = vpack.c.b16 %v263, %v261
      %v300 = vpack.c.b16 %v264, %v262
      %v301 = vpack.c.b16 %v267, %v265
      %v302 = vpack.c.b16 %v268, %v266
      %v303 = vpack.c.b16 %v271, %v269
      %v304 = vpack.c.b16 %v272, %v270
      %v305 = vpack.c.b16 %v275, %v273
      %v306 = vpack.c.b16 %v276, %v274
      %v307 = vpack.c.b16 %v279, %v277
      %v308 = vpack.c.b16 %v280, %v278
      %v309 = vpack.c.b16 %v283, %v281
      %v310 = vpack.c.b16 %v284, %v282
      %v311 = vpack.c.b16 %v287, %v285
      %v312 = vpack.c.b16 %v288, %v286
      %v313 = vpack.c.b16 %v291, %v289
      %v314 = vpack.c.b16 %v292, %v290
      %v315 = vpack.c.b16 %v295, %v293
      %v316 = vpack.c.b16 %v296, %v294
      %v369 = vunpack.c.l.b16 %v198
      %v370 = vunpack.c.l.b16 %v199
      %v371 = vunpack.c.l.b16 %v200
      %v372 = vunpack.c.l.b16 %v201
      %v373 = vunpack.c.l.b16 %v202
      %v374 = vunpack.c.l.b16 %v203
      %v375 = vunpack.c.l.b16 %v204
      %v376 = vunpack.c.l.b16 %v205
      %v377 = vunpack.c.l.b16 %v206
      %v378 = vunpack.c.l.b16 %v207
      %v379 = vunpack.c.l.b16 %v208
      %v380 = vunpack.c.l.b16 %v209
      %v381 = vunpack.c.l.b16 %v210
      %v382 = vunpack.c.l.b16 %v211
      %v383 = vunpack.c.l.b16 %v212
      %v384 = vunpack.c.l.b16 %v213
      %v385 = vunpack.c.l.b16 %v214
      %v386 = vunpack.c.l.b16 %v215
      %v387 = vunpack.c.l.b16 %v216
      %v388 = vunpack.c.l.b16 %v217
      %v389 = vunpack.c.l.b16 %v218
      %v390 = vunpack.c.l.b16 %v219
      %v391 = vunpack.c.l.b16 %v220
      %v392 = vunpack.c.l.b16 %v221
      %v393 = vunpack.c.l.b16 %v222
      %v394 = vunpack.c.l.b16 %v223
      %v395 = vunpack.c.l.b16 %v224
      %v396 = vunpack.c.l.b16 %v225
      %v397 = vunpack.c.l.b16 %v226
      %v398 = vunpack.c.l.b16 %v227
      %v399 = vunpack.c.l.b16 %v228
      %v400 = vunpack.c.l.b16 %v229
      %v401 = vpack.c.b16 %v370, %v369
      %v402 = vpack.c.b16 %v372, %v371
      %v403 = vpack.c.b16 %v374, %v373
      %v404 = vpack.c.b16 %v376, %v375
      %v405 = vpack.c.b16 %v378, %v377
      %v406 = vpack.c.b16 %v380, %v379
      %v407 = vpack.c.b16 %v382, %v381
      %v408 = vpack.c.b16 %v384, %v383
      %v409 = vpack.c.b16 %v386, %v385
      %v410 = vpack.c.b16 %v388, %v387
      %v411 = vpack.c.b16 %v390, %v389
      %v412 = vpack.c.b16 %v392, %v391
      %v413 = vpack.c.b16 %v394, %v393
      %v414 = vpack.c.b16 %v396, %v395
      %v415 = vpack.c.b16 %v398, %v397
      %v416 = vpack.c.b16 %v400, %v399
      %433 = vmatprep.subr.bf16.mxu0 0
      %434 = vmatpush1.bf16.msra.mxu0 %v401
      %435 = vmatprep.subr.bf16.mxu0 0
      %436 = vmatpush1.bf16.msra.mxu0 %v402
      %437 = vmatprep.subr.bf16.mxu0 0
      %438 = vmatpush1.bf16.msra.mxu0 %v403
      %439 = vmatprep.subr.bf16.mxu0 0
      %440 = vmatpush1.bf16.msra.mxu0 %v404
      %441 = vmatprep.subr.bf16.mxu0 0
      %442 = vmatpush1.bf16.msra.mxu0 %v405
      %443 = vmatprep.subr.bf16.mxu0 0
      %444 = vmatpush1.bf16.msra.mxu0 %v406
      %445 = vmatprep.subr.bf16.mxu0 0
      %446 = vmatpush1.bf16.msra.mxu0 %v407
      %447 = vmatprep.subr.bf16.mxu0 0
      %448 = vmatpush1.bf16.msra.mxu0 %v408
      %449 = vmatprep.subr.bf16.mxu0 0
      %450 = vmatpush1.bf16.msra.mxu0 %v409
      %451 = vmatprep.subr.bf16.mxu0 0
      %452 = vmatpush1.bf16.msra.mxu0 %v410
      %453 = vmatprep.subr.bf16.mxu0 0
      %454 = vmatpush1.bf16.msra.mxu0 %v411
      %455 = vmatprep.subr.bf16.mxu0 0
      %456 = vmatpush1.bf16.msra.mxu0 %v412
      %457 = vmatprep.subr.bf16.mxu0 0
      %458 = vmatpush1.bf16.msra.mxu0 %v413
      %459 = vmatprep.subr.bf16.mxu0 0
      %460 = vmatpush1.bf16.msra.mxu0 %v414
      %461 = vmatprep.subr.bf16.mxu0 0
      %462 = vmatpush1.bf16.msra.mxu0 %v415
      %463 = vmatprep.subr.bf16.mxu0 0
      %464 = vmatpush1.bf16.msra.mxu0 %v416
      %465 = vmatprep.mubr.bf16.mxu0 %v298
      %466 = vmatmul.mubr.bf16.gmra.mrb[0].mxu0 %v297
      %v467 = vpop.f32.mrb[0].mxu0
      %v468 = vadd.f32 %v235, %v467
      %v469 = vpop.f32.mrb[0].mxu0
      %v470 = vpop.f32.mrb[0].mxu0
      %v471 = vadd.f32 %v235, %v470
      %v472 = vpop.f32.mrb[0].mxu0
      %473 = vmatprep.mubr.bf16.mxu0 %v300
      %474 = vmatmul.mubr.bf16.gmra.mrb[0].mxu0 %v299
      %v475 = vpop.f32.mrb[0].mxu0
      %v476 = vadd.f32 %v235, %v475
      %v477 = vpop.f32.mrb[0].mxu0
      %v478 = vpop.f32.mrb[0].mxu0
      %v479 = vadd.f32 %v235, %v478
      %v480 = vpop.f32.mrb[0].mxu0
      %481 = vmatprep.mubr.bf16.mxu0 %v302
      %482 = vmatmul.mubr.bf16.gmra.mrb[0].mxu0 %v301
      %v483 = vpop.f32.mrb[0].mxu0
      %v484 = vadd.f32 %v235, %v483
      %v485 = vpop.f32.mrb[0].mxu0
      %v486 = vpop.f32.mrb[0].mxu0
      %v487 = vadd.f32 %v235, %v486
      %v488 = vpop.f32.mrb[0].mxu0
      %489 = vmatprep.mubr.bf16.mxu0 %v304
      %490 = vmatmul.mubr.bf16.gmra.mrb[0].mxu0 %v303
      %v491 = vpop.f32.mrb[0].mxu0
      %v492 = vadd.f32 %v235, %v491
      %v493 = vpop.f32.mrb[0].mxu0
      %v494 = vpop.f32.mrb[0].mxu0
      %v495 = vadd.f32 %v235, %v494
      %v496 = vpop.f32.mrb[0].mxu0
      %497 = vmatprep.mubr.bf16.mxu0 %v306
      %498 = vmatmul.mubr.bf16.gmra.mrb[0].mxu0 %v305
      %v499 = vpop.f32.mrb[0].mxu0
      %v500 = vadd.f32 %v235, %v499
      %v501 = vpop.f32.mrb[0].mxu0
      %v502 = vpop.f32.mrb[0].mxu0
      %v503 = vadd.f32 %v235, %v502
      %v504 = vpop.f32.mrb[0].mxu0
      %505 = vmatprep.mubr.bf16.mxu0 %v308
      %506 = vmatmul.mubr.bf16.gmra.mrb[0].mxu0 %v307
      %v507 = vpop.f32.mrb[0].mxu0
      %v508 = vadd.f32 %v235, %v507
      %v509 = vpop.f32.mrb[0].mxu0
      %v510 = vpop.f32.mrb[0].mxu0
      %v511 = vadd.f32 %v235, %v510
      %v512 = vpop.f32.mrb[0].mxu0
      %513 = vmatprep.mubr.bf16.mxu0 %v310
      %514 = vmatmul.mubr.bf16.gmra.mrb[0].mxu0 %v309
      %v515 = vpop.f32.mrb[0].mxu0
      %v516 = vadd.f32 %v235, %v515
      %v517 = vpop.f32.mrb[0].mxu0
      %v518 = vpop.f32.mrb[0].mxu0
      %v519 = vadd.f32 %v235, %v518
      %v520 = vpop.f32.mrb[0].mxu0
      %521 = vmatprep.mubr.bf16.mxu0 %v312
      %522 = vmatmul.mubr.bf16.gmra.mrb[0].mxu0 %v311
      %v523 = vpop.f32.mrb[0].mxu0
      %v524 = vadd.f32 %v235, %v523
      %v525 = vpop.f32.mrb[0].mxu0
      %v526 = vpop.f32.mrb[0].mxu0
      %v527 = vadd.f32 %v235, %v526
      %v528 = vpop.f32.mrb[0].mxu0
      %529 = vmatprep.mubr.bf16.mxu0 %v314
      %530 = vmatmul.mubr.bf16.gmra.mrb[0].mxu0 %v313
      %v531 = vpop.f32.mrb[0].mxu0
      %v532 = vadd.f32 %v235, %v531
      %v533 = vpop.f32.mrb[0].mxu0
      %v534 = vpop.f32.mrb[0].mxu0
      %v535 = vadd.f32 %v235, %v534
      %v536 = vpop.f32.mrb[0].mxu0
      %537 = vmatprep.mubr.bf16.mxu0 %v316
      %538 = vmatmul.mubr.bf16.gmra.mrb[0].mxu0 %v315
      %v539 = vpop.f32.mrb[0].mxu0
      %v540 = vadd.f32 %v235, %v539
      %v541 = vpop.f32.mrb[0].mxu0
      %v542 = vpop.f32.mrb[0].mxu0
      %v543 = vadd.f32 %v235, %v542
      %v544 = vpop.f32.mrb[0].mxu0
      %545 = vdwg.mxu0
      %v546 = vmax.f32 %v468, 0.0
      %v547 = vmax.f32 %v471, 0.0
      %v548 = vmax.f32 %v476, 0.0
      %v549 = vmax.f32 %v479, 0.0
      %v550 = vmax.f32 %v484, 0.0
      %v551 = vmax.f32 %v487, 0.0
      %v552 = vmax.f32 %v492, 0.0
      %v553 = vmax.f32 %v495, 0.0
      %v554 = vmax.f32 %v500, 0.0
      %v555 = vmax.f32 %v503, 0.0
      %v556 = vmax.f32 %v508, 0.0
      %v557 = vmax.f32 %v511, 0.0
      %v558 = vmax.f32 %v516, 0.0
      %v559 = vmax.f32 %v519, 0.0
      %v560 = vmax.f32 %v524, 0.0
      %v561 = vmax.f32 %v527, 0.0
      %v562 = vmax.f32 %v532, 0.0
      %v563 = vmax.f32 %v535, 0.0
      %v564 = vmax.f32 %v540, 0.0
      %v565 = vmax.f32 %v543, 0.0
      %v566 = vpack.c.bf16 %v547, %v546
      %v567 = vpack.c.bf16 %v549, %v548
      %v568 = vpack.c.bf16 %v551, %v550
      %v569 = vpack.c.bf16 %v553, %v552
      %v570 = vpack.c.bf16 %v555, %v554
      %v571 = vpack.c.bf16 %v557, %v556
      %v572 = vpack.c.bf16 %v559, %v558
      %v573 = vpack.c.bf16 %v561, %v560
      %v574 = vpack.c.bf16 %v563, %v562
      %v575 = vpack.c.bf16 %v565, %v564
      %v586 = vunpack.c.l.b16 %v566
      %v587 = vunpack.c.h.b16 %v566
      %v588 = vunpack.c.l.b16 %v567
      %v589 = vunpack.c.h.b16 %v567
      %v590 = vunpack.c.l.b16 %v568
      %v591 = vunpack.c.h.b16 %v568
      %v592 = vunpack.c.l.b16 %v569
      %v593 = vunpack.c.h.b16 %v569
      %v594 = vunpack.c.l.b16 %v570
      %v595 = vunpack.c.h.b16 %v570
      %v596 = vunpack.c.l.b16 %v571
      %v597 = vunpack.c.h.b16 %v571
      %v598 = vunpack.c.l.b16 %v572
      %v599 = vunpack.c.h.b16 %v572
      %v600 = vunpack.c.l.b16 %v573
      %v601 = vunpack.c.h.b16 %v573
      %v602 = vunpack.c.l.b16 %v574
      %v603 = vunpack.c.h.b16 %v574
      %v604 = vunpack.c.l.b16 %v575
      %v605 = vunpack.c.h.b16 %v575
      %v606 = vpack.c.b16 %v586, %v586
      %v607 = vpack.c.b16 %v587, %v587
      %v608 = vpack.c.b16 %v588, %v588
      %v609 = vpack.c.b16 %v589, %v589
      %v610 = vpack.c.b16 %v590, %v590
      %v611 = vpack.c.b16 %v591, %v591
      %v612 = vpack.c.b16 %v592, %v592
      %v613 = vpack.c.b16 %v593, %v593
      %v614 = vpack.c.b16 %v594, %v594
      %v615 = vpack.c.b16 %v595, %v595
      %v616 = vpack.c.b16 %v596, %v596
      %v617 = vpack.c.b16 %v597, %v597
      %v618 = vpack.c.b16 %v598, %v598
      %v619 = vpack.c.b16 %v599, %v599
      %v620 = vpack.c.b16 %v600, %v600
      %v621 = vpack.c.b16 %v601, %v601
      %v622 = vpack.c.b16 %v602, %v602
      %v623 = vpack.c.b16 %v603, %v603
      %v624 = vpack.c.b16 %v604, %v604
      %v625 = vpack.c.b16 %v605, %v605
      %vm646 = vcmask 257024
      %647 = vst.msk [vmem:[%s175] sm:$0xf] %vm646, %v606
      %648 = vst.msk [vmem:[%s175 + $0x4] sm:$0xf] %vm646, %v607
      %649 = vst.msk [vmem:[%s175 + $0x8] sm:$0xf] %vm646, %v608
      %650 = vst.msk [vmem:[%s175 + $0xc] sm:$0xf] %vm646, %v609
      %651 = vst.msk [vmem:[%s175 + $0x10] sm:$0xf] %vm646, %v610
      %652 = vst.msk [vmem:[%s175 + $0x14] sm:$0xf] %vm646, %v611
      %653 = vst.msk [vmem:[%s175 + $0x18] sm:$0xf] %vm646, %v612
      %654 = vst.msk [vmem:[%s175 + $0x1c] sm:$0xf] %vm646, %v613
      %655 = vst.msk [vmem:[%s175 + $0x20] sm:$0xf] %vm646, %v614
      %656 = vst.msk [vmem:[%s175 + $0x24] sm:$0xf] %vm646, %v615
      %657 = vst.msk [vmem:[%s175 + $0x28] sm:$0xf] %vm646, %v616
      %658 = vst.msk [vmem:[%s175 + $0x2c] sm:$0xf] %vm646, %v617
      %659 = vst.msk [vmem:[%s175 + $0x30] sm:$0xf] %vm646, %v618
      %660 = vst.msk [vmem:[%s175 + $0x34] sm:$0xf] %vm646, %v619
      %661 = vst.msk [vmem:[%s175 + $0x38] sm:$0xf] %vm646, %v620
      %662 = vst.msk [vmem:[%s175 + $0x3c] sm:$0xf] %vm646, %v621
      %663 = vst.msk [vmem:[%s175 + $0x40] sm:$0xf] %vm646, %v622
      %664 = vst.msk [vmem:[%s175 + $0x44] sm:$0xf] %vm646, %v623
      %665 = vst.msk [vmem:[%s175 + $0x48] sm:$0xf] %vm646, %v624
      %666 = vst.msk [vmem:[%s175 + $0x4c] sm:$0xf] %vm646, %v625
      %s667 = smul.u32 20, %s14
      %p668 = scmp.lt.s32.totalorder %s667, 99
      %s669 = scalar_select %p668, %s667, 99
      %s670 = smul.addr %s669, 4
      %s671 = scalar_lea.vmem %s3, %s670
      // Predicated region
      $region33: #{dueling_dqn_forward.4} parent=31 // pred_check
        %p672 = pneg %p100
      $region34: #{dueling_dqn_forward.4} parent=31 // pred_check_branch
        %674 = sbr.rel (%p672) target = $region36
      $region35: #{dueling_dqn_forward.4} parent=31 // pred_region
        %s675 = smul.u32 20, %s14
      $region36: #{dueling_dqn_forward.4} parent=31 // pred_fallthru
        _
    $region32: #{dueling_dqn_forward.4} parent=5 // pred_fallthru
      _
    %p676 = scmp.le.s32.totalorder 2, %s9
    // Predicated region
    $region37: #{dueling_dqn_forward.4} parent=5 // pred_check
      %p677 = pneg %p676
    $region38: #{dueling_dqn_forward.4} parent=5 // pred_check_branch
      %679 = sbr.rel (%p677) target = $region40
    $region39: #{dueling_dqn_forward.4} parent=5 // pred_region
      %s680 = ssub.s32 %s9, 2
      // Predicated region
      $region41: #{dueling_dqn_forward.4} parent=39 // pred_check
        %p681 = pneg %p106
      $region42: #{dueling_dqn_forward.4} parent=39 // pred_check_branch
        %683 = sbr.rel (%p681) target = $region44
      $region43: #{dueling_dqn_forward.4} parent=39 // pred_region
        %s684 = smul.u32 20, %s15
        %p685 = scmp.lt.s32.totalorder %s684, 99
        %s686 = scalar_select %p685, %s684, 99
        %s687 = smul.addr %s686, 4
        %s688 = scalar_lea.vmem %s3, %s687
      $region44: #{dueling_dqn_forward.4} parent=39 // pred_fallthru
        _
    $region40: #{dueling_dqn_forward.4} parent=5 // pred_fallthru
      _
  $region6: #{dueling_dqn_forward.4} parent=0 // loop_footer
    %s13 = sadd.s32 1, %s9
  $region7: #{dueling_dqn_forward.4} parent=0 // loop_footer_branch
    %8 = sbr.rel target = $region3
  $region8: #{dueling_dqn_forward.4} parent=0 // loop_exit
    _

// kernel: dueling_dqn_forward.5
$region0: #{dueling_dqn_forward.5}
  #allocation0 [shape = 'u32[]', space=smem, size = 0x4, offset = 0x4, fixed_abs, tag = 'smem constant byte address 0x4 - core index']
  #allocation1 [shape = 'u32[144,128]{1,0:T(1,128)}', space=vmem, size = 0x12000, scoped, tag = 'internal scratch']
  %s0 = inlined_call_operand.vmem [shape: bf16[162,512], index: 0, kind: input, shape index: {}]
  %s1 = inlined_call_operand.vmem [shape: bf16[512,64], index: 1, kind: input, shape index: {}]
  %s2 = inlined_call_operand.vmem [shape: f32[1,64], index: 2, kind: input, shape index: {}]
  %s3 = inlined_call_operand.vmem [shape: bf16[162,64], index: 3, kind: output, shape index: {}]
  %s4 = sld [smem:[#allocation0]]
  $region22: #{dueling_dqn_forward.5} parent=0
    _
  %s6 = ssub.s32 1, %s4
  %s7 = scalar_select 0, %s6, %s4
  // Predicated region
  $region2: #{dueling_dqn_forward.5} parent=0 // pred_check
    _
  $region3: #{dueling_dqn_forward.5} parent=0 // pred_check_branch
    %9 = sbr.rel (0) target = $region5
  $region4: #{dueling_dqn_forward.5} parent=0 // pred_region
    _
  $region5: #{dueling_dqn_forward.5} parent=0 // pred_fallthru
    _
  // Predicated region
  $region6: #{dueling_dqn_forward.5} parent=0 // pred_check
    _
  $region7: #{dueling_dqn_forward.5} parent=0 // pred_check_branch
    %11 = sbr.rel (0) target = $region9
  $region8: #{dueling_dqn_forward.5} parent=0 // pred_region
    _
  $region9: #{dueling_dqn_forward.5} parent=0 // pred_fallthru
    _
  // Predicated region
  $region10: #{dueling_dqn_forward.5} parent=0 // pred_check
    _
  $region11: #{dueling_dqn_forward.5} parent=0 // pred_check_branch
    %13 = sbr.rel (0) target = $region13
  $region12: #{dueling_dqn_forward.5} parent=0 // pred_region
    _
  $region13: #{dueling_dqn_forward.5} parent=0 // pred_fallthru
    _
  %v15 = vld [vmem:[%s0] sm:$0xff]
  %v16 = vld [vmem:[%s0 + $0x8] sm:$0xff]
  %v17 = vld [vmem:[%s0 + $0x10] sm:$0xff]
  %v18 = vld [vmem:[%s0 + $0x18] sm:$0xff]
  %v19 = vld [vmem:[%s0 + $0x20] sm:$0xff]
  %v20 = vld [vmem:[%s0 + $0x28] sm:$0xff]
  %v21 = vld [vmem:[%s0 + $0x30] sm:$0xff]
  %v22 = vld [vmem:[%s0 + $0x38] sm:$0xff]
  %v23 = vld [vmem:[%s0 + $0x40] sm:$0xff]
  %v24 = vld [vmem:[%s0 + $0x48] sm:$0xff]
  %v25 = vld [vmem:[%s0 + $0x50] sm:$0xff]
  %v26 = vld [vmem:[%s0 + $0x58] sm:$0xff]
  %v27 = vld [vmem:[%s0 + $0x60] sm:$0xff]
  %v28 = vld [vmem:[%s0 + $0x68] sm:$0xff]
  %v29 = vld [vmem:[%s0 + $0x70] sm:$0xff]
  %v30 = vld [vmem:[%s0 + $0x78] sm:$0xff]
  %v31 = vld [vmem:[%s0 + $0x80] sm:$0xff]
  %v32 = vld [vmem:[%s0 + $0x88] sm:$0xff]
  %v33 = vld [vmem:[%s0 + $0x90] sm:$0xff]
  %v34 = vld [vmem:[%s0 + $0x98] sm:$0xff]
  %v35 = vld [vmem:[%s0 + $0xa0] sm:$0xff]
  %v36 = vld [vmem:[%s0 + $0xa8] sm:$0xff]
  %v37 = vld [vmem:[%s0 + $0xb0] sm:$0xff]
  %v38 = vld [vmem:[%s0 + $0xb8] sm:$0xff]
  %v39 = vld [vmem:[%s0 + $0xc0] sm:$0xff]
  %v40 = vld [vmem:[%s0 + $0xc8] sm:$0xff]
  %v41 = vld [vmem:[%s0 + $0xd0] sm:$0xff]
  %v42 = vld [vmem:[%s0 + $0xd8] sm:$0xff]
  %v43 = vld [vmem:[%s0 + $0xe0] sm:$0xff]
  %v44 = vld [vmem:[%s0 + $0xe8] sm:$0xff]
  %v45 = vld [vmem:[%s0 + $0xf0] sm:$0xff]
  %v46 = vld [vmem:[%s0 + $0xf8] sm:$0xff]
  %v47 = vld [vmem:[%s0 + $0x100] sm:$0xff]
  %v48 = vld [vmem:[%s0 + $0x108] sm:$0xff]
  %v49 = vld [vmem:[%s0 + $0x110] sm:$0xff]
  %v50 = vld [vmem:[%s0 + $0x118] sm:$0xff]
  %v51 = vld [vmem:[%s0 + $0x120] sm:$0xff]
  %v52 = vld [vmem:[%s0 + $0x128] sm:$0xff]
  %v53 = vld [vmem:[%s0 + $0x130] sm:$0xff]
  %v54 = vld [vmem:[%s0 + $0x138] sm:$0xff]
  %v55 = vld [vmem:[%s0 + $0x140] sm:$0x11]
  %v56 = vld [vmem:[%s0 + $0x148] sm:$0x11]
  %v57 = vld [vmem:[%s1] sm:$0xf]
  %v58 = vld [vmem:[%s1 + $0x4] sm:$0xf]
  %v59 = vld [vmem:[%s1 + $0x8] sm:$0xf]
  %v60 = vld [vmem:[%s1 + $0xc] sm:$0xf]
  %v61 = vld [vmem:[%s1 + $0x10] sm:$0xf]
  %v62 = vld [vmem:[%s1 + $0x14] sm:$0xf]
  %v63 = vld [vmem:[%s1 + $0x18] sm:$0xf]
  %v64 = vld [vmem:[%s1 + $0x1c] sm:$0xf]
  %v65 = vld [vmem:[%s1 + $0x20] sm:$0xf]
  %v66 = vld [vmem:[%s1 + $0x24] sm:$0xf]
  %v67 = vld [vmem:[%s1 + $0x28] sm:$0xf]
  %v68 = vld [vmem:[%s1 + $0x2c] sm:$0xf]
  %v69 = vld [vmem:[%s1 + $0x30] sm:$0xf]
  %v70 = vld [vmem:[%s1 + $0x34] sm:$0xf]
  %v71 = vld [vmem:[%s1 + $0x38] sm:$0xf]
  %v72 = vld [vmem:[%s1 + $0x3c] sm:$0xf]
  %v73 = vld [vmem:[%s1 + $0x40] sm:$0xf]
  %v74 = vld [vmem:[%s1 + $0x44] sm:$0xf]
  %v75 = vld [vmem:[%s1 + $0x48] sm:$0xf]
  %v76 = vld [vmem:[%s1 + $0x4c] sm:$0xf]
  %v77 = vld [vmem:[%s1 + $0x50] sm:$0xf]
  %v78 = vld [vmem:[%s1 + $0x54] sm:$0xf]
  %v79 = vld [vmem:[%s1 + $0x58] sm:$0xf]
  %v80 = vld [vmem:[%s1 + $0x5c] sm:$0xf]
  %v81 = vld [vmem:[%s1 + $0x60] sm:$0xf]
  %v82 = vld [vmem:[%s1 + $0x64] sm:$0xf]
  %v83 = vld [vmem:[%s1 + $0x68] sm:$0xf]
  %v84 = vld [vmem:[%s1 + $0x6c] sm:$0xf]
  %v85 = vld [vmem:[%s1 + $0x70] sm:$0xf]
  %v86 = vld [vmem:[%s1 + $0x74] sm:$0xf]
  %v87 = vld [vmem:[%s1 + $0x78] sm:$0xf]
  %v88 = vld [vmem:[%s1 + $0x7c] sm:$0xf]
  %v89 = vld [vmem:[%s1 + $0x80] sm:$0xf]
  %v90 = vld [vmem:[%s1 + $0x84] sm:$0xf]
  %v91 = vld [vmem:[%s1 + $0x88] sm:$0xf]
  %v92 = vld [vmem:[%s1 + $0x8c] sm:$0xf]
  %v93 = vld [vmem:[%s1 + $0x90] sm:$0xf]
  %v94 = vld [vmem:[%s1 + $0x94] sm:$0xf]
  %v95 = vld [vmem:[%s1 + $0x98] sm:$0xf]
  %v96 = vld [vmem:[%s1 + $0x9c] sm:$0xf]
  %v97 = vld [vmem:[%s1 + $0xa0] sm:$0xf]
  %v98 = vld [vmem:[%s1 + $0xa4] sm:$0xf]
  %v99 = vld [vmem:[%s1 + $0xa8] sm:$0xf]
  %v100 = vld [vmem:[%s1 + $0xac] sm:$0xf]
  %v101 = vld [vmem:[%s1 + $0xb0] sm:$0xf]
  %v102 = vld [vmem:[%s1 + $0xb4] sm:$0xf]
  %v103 = vld [vmem:[%s1 + $0xb8] sm:$0xf]
  %v104 = vld [vmem:[%s1 + $0xbc] sm:$0xf]
  %v105 = vld [vmem:[%s1 + $0xc0] sm:$0xf]
  %v106 = vld [vmem:[%s1 + $0xc4] sm:$0xf]
  %v107 = vld [vmem:[%s1 + $0xc8] sm:$0xf]
  %v108 = vld [vmem:[%s1 + $0xcc] sm:$0xf]
  %v109 = vld [vmem:[%s1 + $0xd0] sm:$0xf]
  %v110 = vld [vmem:[%s1 + $0xd4] sm:$0xf]
  %v111 = vld [vmem:[%s1 + $0xd8] sm:$0xf]
  %v112 = vld [vmem:[%s1 + $0xdc] sm:$0xf]
  %v113 = vld [vmem:[%s1 + $0xe0] sm:$0xf]
  %v114 = vld [vmem:[%s1 + $0xe4] sm:$0xf]
  %v115 = vld [vmem:[%s1 + $0xe8] sm:$0xf]
  %v116 = vld [vmem:[%s1 + $0xec] sm:$0xf]
  %v117 = vld [vmem:[%s1 + $0xf0] sm:$0xf]
  %v118 = vld [vmem:[%s1 + $0xf4] sm:$0xf]
  %v119 = vld [vmem:[%s1 + $0xf8] sm:$0xf]
  %v120 = vld [vmem:[%s1 + $0xfc] sm:$0xf]
  %v121 = vld [vmem:[%s2] sm:$0x1]
  %v123 = vlaneseq
  %v124 = vshrl.u32 %v123, 7
  %v125 = vsub.s32 0, %v124
  %v126 = vrot.slane %v121, %v125
  %v170 = vunpack.c.l.b16 %v15
  %v171 = vunpack.c.h.b16 %v15
  %v172 = vunpack.c.l.b16 %v16
  %v173 = vunpack.c.h.b16 %v16
  %v174 = vunpack.c.l.b16 %v17
  %v175 = vunpack.c.h.b16 %v17
  %v176 = vunpack.c.l.b16 %v18
  %v177 = vunpack.c.h.b16 %v18
  %v178 = vunpack.c.l.b16 %v19
  %v179 = vunpack.c.h.b16 %v19
  %v180 = vunpack.c.l.b16 %v20
  %v181 = vunpack.c.h.b16 %v20
  %v182 = vunpack.c.l.b16 %v21
  %v183 = vunpack.c.h.b16 %v21
  %v184 = vunpack.c.l.b16 %v22
  %v185 = vunpack.c.h.b16 %v22
  %v186 = vunpack.c.l.b16 %v23
  %v187 = vunpack.c.h.b16 %v23
  %v188 = vunpack.c.l.b16 %v24
  %v189 = vunpack.c.h.b16 %v24
  %v190 = vunpack.c.l.b16 %v25
  %v191 = vunpack.c.h.b16 %v25
  %v192 = vunpack.c.l.b16 %v26
  %v193 = vunpack.c.h.b16 %v26
  %v194 = vunpack.c.l.b16 %v27
  %v195 = vunpack.c.h.b16 %v27
  %v196 = vunpack.c.l.b16 %v28
  %v197 = vunpack.c.h.b16 %v28
  %v198 = vunpack.c.l.b16 %v29
  %v199 = vunpack.c.h.b16 %v29
  %v200 = vunpack.c.l.b16 %v30
  %v201 = vunpack.c.h.b16 %v30
  %v202 = vunpack.c.l.b16 %v31
  %v203 = vunpack.c.h.b16 %v31
  %v204 = vunpack.c.l.b16 %v32
  %v205 = vunpack.c.h.b16 %v32
  %v206 = vunpack.c.l.b16 %v33
  %v207 = vunpack.c.h.b16 %v33
  %v208 = vunpack.c.l.b16 %v34
  %v209 = vunpack.c.h.b16 %v34
  %v210 = vunpack.c.l.b16 %v35
  %v211 = vunpack.c.h.b16 %v35
  %v212 = vunpack.c.l.b16 %v36
  %v213 = vunpack.c.h.b16 %v36
  %v214 = vunpack.c.l.b16 %v37
  %v215 = vunpack.c.h.b16 %v37
  %v216 = vunpack.c.l.b16 %v38
  %v217 = vunpack.c.h.b16 %v38
  %v218 = vunpack.c.l.b16 %v39
  %v219 = vunpack.c.h.b16 %v39
  %v220 = vunpack.c.l.b16 %v40
  %v221 = vunpack.c.h.b16 %v40
  %v222 = vunpack.c.l.b16 %v41
  %v223 = vunpack.c.h.b16 %v41
  %v224 = vunpack.c.l.b16 %v42
  %v225 = vunpack.c.h.b16 %v42
  %v226 = vunpack.c.l.b16 %v43
  %v227 = vunpack.c.h.b16 %v43
  %v228 = vunpack.c.l.b16 %v44
  %v229 = vunpack.c.h.b16 %v44
  %v230 = vunpack.c.l.b16 %v45
  %v231 = vunpack.c.h.b16 %v45
  %v232 = vunpack.c.l.b16 %v46
  %v233 = vunpack.c.h.b16 %v46
  %v234 = vunpack.c.l.b16 %v47
  %v235 = vunpack.c.h.b16 %v47
  %v236 = vunpack.c.l.b16 %v48
  %v237 = vunpack.c.h.b16 %v48
  %v238 = vunpack.c.l.b16 %v49
  %v239 = vunpack.c.h.b16 %v49
  %v240 = vunpack.c.l.b16 %v50
  %v241 = vunpack.c.h.b16 %v50
  %v242 = vunpack.c.l.b16 %v51
  %v243 = vunpack.c.h.b16 %v51
  %v244 = vunpack.c.l.b16 %v52
  %v245 = vunpack.c.h.b16 %v52
  %v246 = vunpack.c.l.b16 %v53
  %v247 = vunpack.c.h.b16 %v53
  %v248 = vunpack.c.l.b16 %v54
  %v249 = vunpack.c.h.b16 %v54
  %v250 = vunpack.c.l.b16 %v55
  %v251 = vunpack.c.h.b16 %v55
  %v252 = vunpack.c.l.b16 %v56
  %v253 = vunpack.c.h.b16 %v56
  %v254 = vpack.c.b16 %v174, %v170
  %v255 = vpack.c.b16 %v175, %v171
  %v256 = vpack.c.b16 %v176, %v172
  %v257 = vpack.c.b16 %v177, %v173
  %v258 = vpack.c.b16 %v182, %v178
  %v259 = vpack.c.b16 %v183, %v179
  %v260 = vpack.c.b16 %v184, %v180
  %v261 = vpack.c.b16 %v185, %v181
  %v262 = vpack.c.b16 %v190, %v186
  %v263 = vpack.c.b16 %v191, %v187
  %v264 = vpack.c.b16 %v192, %v188
  %v265 = vpack.c.b16 %v193, %v189
  %v266 = vpack.c.b16 %v198, %v194
  %v267 = vpack.c.b16 %v199, %v195
  %v268 = vpack.c.b16 %v200, %v196
  %v269 = vpack.c.b16 %v201, %v197
  %v270 = vpack.c.b16 %v206, %v202
  %v271 = vpack.c.b16 %v207, %v203
  %v272 = vpack.c.b16 %v208, %v204
  %v273 = vpack.c.b16 %v209, %v205
  %v274 = vpack.c.b16 %v214, %v210
  %v275 = vpack.c.b16 %v215, %v211
  %v276 = vpack.c.b16 %v216, %v212
  %v277 = vpack.c.b16 %v217, %v213
  %v278 = vpack.c.b16 %v222, %v218
  %v279 = vpack.c.b16 %v223, %v219
  %v280 = vpack.c.b16 %v224, %v220
  %v281 = vpack.c.b16 %v225, %v221
  %v282 = vpack.c.b16 %v230, %v226
  %v283 = vpack.c.b16 %v231, %v227
  %v284 = vpack.c.b16 %v232, %v228
  %v285 = vpack.c.b16 %v233, %v229
  %v286 = vpack.c.b16 %v238, %v234
  %v287 = vpack.c.b16 %v239, %v235
  %v288 = vpack.c.b16 %v240, %v236
  %v289 = vpack.c.b16 %v241, %v237
  %v290 = vpack.c.b16 %v246, %v242
  %v291 = vpack.c.b16 %v247, %v243
  %v292 = vpack.c.b16 %v248, %v244
  %v293 = vpack.c.b16 %v249, %v245
  %v294 = vpack.c.b16 %v250, %v250
  %v295 = vpack.c.b16 %v251, %v251
  %v296 = vpack.c.b16 %v252, %v252
  %v297 = vpack.c.b16 %v253, %v253
  %v406 = vunpack.c.l.b16 %v57
  %v407 = vunpack.c.l.b16 %v58
  %v408 = vunpack.c.l.b16 %v59
  %v409 = vunpack.c.l.b16 %v60
  %v410 = vunpack.c.l.b16 %v61
  %v411 = vunpack.c.l.b16 %v62
  %v412 = vunpack.c.l.b16 %v63
  %v413 = vunpack.c.l.b16 %v64
  %v414 = vunpack.c.l.b16 %v65
  %v415 = vunpack.c.l.b16 %v66
  %v416 = vunpack.c.l.b16 %v67
  %v417 = vunpack.c.l.b16 %v68
  %v418 = vunpack.c.l.b16 %v69
  %v419 = vunpack.c.l.b16 %v70
  %v420 = vunpack.c.l.b16 %v71
  %v421 = vunpack.c.l.b16 %v72
  %v422 = vunpack.c.l.b16 %v73
  %v423 = vunpack.c.l.b16 %v74
  %v424 = vunpack.c.l.b16 %v75
  %v425 = vunpack.c.l.b16 %v76
  %v426 = vunpack.c.l.b16 %v77
  %v427 = vunpack.c.l.b16 %v78
  %v428 = vunpack.c.l.b16 %v79
  %v429 = vunpack.c.l.b16 %v80
  %v430 = vunpack.c.l.b16 %v81
  %v431 = vunpack.c.l.b16 %v82
  %v432 = vunpack.c.l.b16 %v83
  %v433 = vunpack.c.l.b16 %v84
  %v434 = vunpack.c.l.b16 %v85
  %v435 = vunpack.c.l.b16 %v86
  %v436 = vunpack.c.l.b16 %v87
  %v437 = vunpack.c.l.b16 %v88
  %v438 = vunpack.c.l.b16 %v89
  %v439 = vunpack.c.l.b16 %v90
  %v440 = vunpack.c.l.b16 %v91
  %v441 = vunpack.c.l.b16 %v92
  %v442 = vunpack.c.l.b16 %v93
  %v443 = vunpack.c.l.b16 %v94
  %v444 = vunpack.c.l.b16 %v95
  %v445 = vunpack.c.l.b16 %v96
  %v446 = vunpack.c.l.b16 %v97
  %v447 = vunpack.c.l.b16 %v98
  %v448 = vunpack.c.l.b16 %v99
  %v449 = vunpack.c.l.b16 %v100
  %v450 = vunpack.c.l.b16 %v101
  %v451 = vunpack.c.l.b16 %v102
  %v452 = vunpack.c.l.b16 %v103
  %v453 = vunpack.c.l.b16 %v104
  %v454 = vunpack.c.l.b16 %v105
  %v455 = vunpack.c.l.b16 %v106
  %v456 = vunpack.c.l.b16 %v107
  %v457 = vunpack.c.l.b16 %v108
  %v458 = vunpack.c.l.b16 %v109
  %v459 = vunpack.c.l.b16 %v110
  %v460 = vunpack.c.l.b16 %v111
  %v461 = vunpack.c.l.b16 %v112
  %v462 = vunpack.c.l.b16 %v113
  %v463 = vunpack.c.l.b16 %v114
  %v464 = vunpack.c.l.b16 %v115
  %v465 = vunpack.c.l.b16 %v116
  %v466 = vunpack.c.l.b16 %v117
  %v467 = vunpack.c.l.b16 %v118
  %v468 = vunpack.c.l.b16 %v119
  %v469 = vunpack.c.l.b16 %v120
  %v470 = vpack.c.b16 %v407, %v406
  %v471 = vpack.c.b16 %v409, %v408
  %v472 = vpack.c.b16 %v411, %v410
  %v473 = vpack.c.b16 %v413, %v412
  %v474 = vpack.c.b16 %v415, %v414
  %v475 = vpack.c.b16 %v417, %v416
  %v476 = vpack.c.b16 %v419, %v418
  %v477 = vpack.c.b16 %v421, %v420
  %v478 = vpack.c.b16 %v423, %v422
  %v479 = vpack.c.b16 %v425, %v424
  %v480 = vpack.c.b16 %v427, %v426
  %v481 = vpack.c.b16 %v429, %v428
  %v482 = vpack.c.b16 %v431, %v430
  %v483 = vpack.c.b16 %v433, %v432
  %v484 = vpack.c.b16 %v435, %v434
  %v485 = vpack.c.b16 %v437, %v436
  %v486 = vpack.c.b16 %v439, %v438
  %v487 = vpack.c.b16 %v441, %v440
  %v488 = vpack.c.b16 %v443, %v442
  %v489 = vpack.c.b16 %v445, %v444
  %v490 = vpack.c.b16 %v447, %v446
  %v491 = vpack.c.b16 %v449, %v448
  %v492 = vpack.c.b16 %v451, %v450
  %v493 = vpack.c.b16 %v453, %v452
  %v494 = vpack.c.b16 %v455, %v454
  %v495 = vpack.c.b16 %v457, %v456
  %v496 = vpack.c.b16 %v459, %v458
  %v497 = vpack.c.b16 %v461, %v460
  %v498 = vpack.c.b16 %v463, %v462
  %v499 = vpack.c.b16 %v465, %v464
  %v500 = vpack.c.b16 %v467, %v466
  %v501 = vpack.c.b16 %v469, %v468
  %534 = vmatprep.subr.bf16.mxu0 0
  %535 = vmatpush1.bf16.msra.mxu0 %v470
  %536 = vmatprep.subr.bf16.mxu0 0
  %537 = vmatpush1.bf16.msra.mxu0 %v471
  %538 = vmatprep.subr.bf16.mxu0 0
  %539 = vmatpush1.bf16.msra.mxu0 %v472
  %540 = vmatprep.subr.bf16.mxu0 0
  %541 = vmatpush1.bf16.msra.mxu0 %v473
  %542 = vmatprep.subr.bf16.mxu0 0
  %543 = vmatpush1.bf16.msra.mxu0 %v474
  %544 = vmatprep.subr.bf16.mxu0 0
  %545 = vmatpush1.bf16.msra.mxu0 %v475
  %546 = vmatprep.subr.bf16.mxu0 0
  %547 = vmatpush1.bf16.msra.mxu0 %v476
  %548 = vmatprep.subr.bf16.mxu0 0
  %549 = vmatpush1.bf16.msra.mxu0 %v477
  %550 = vmatprep.subr.bf16.mxu0 0
  %551 = vmatpush1.bf16.msra.mxu0 %v478
  %552 = vmatprep.subr.bf16.mxu0 0
  %553 = vmatpush1.bf16.msra.mxu0 %v479
  %554 = vmatprep.subr.bf16.mxu0 0
  %555 = vmatpush1.bf16.msra.mxu0 %v480
  %556 = vmatprep.subr.bf16.mxu0 0
  %557 = vmatpush1.bf16.msra.mxu0 %v481
  %558 = vmatprep.subr.bf16.mxu0 0
  %559 = vmatpush1.bf16.msra.mxu0 %v482
  %560 = vmatprep.subr.bf16.mxu0 0
  %561 = vmatpush1.bf16.msra.mxu0 %v483
  %562 = vmatprep.subr.bf16.mxu0 0
  %563 = vmatpush1.bf16.msra.mxu0 %v484
  %564 = vmatprep.subr.bf16.mxu0 0
  %565 = vmatpush1.bf16.msra.mxu0 %v485
  %566 = vmatprep.mubr.bf16.mxu0 %v255
  %567 = vmatmul.mubr.bf16.gmra.mrb[0].mxu0 %v254
  %v568 = vpop.f32.mrb[0].mxu0
  %v569 = vadd.f32 %v126, %v568
  %v570 = vpop.f32.mrb[0].mxu0
  %v571 = vpop.f32.mrb[0].mxu0
  %v572 = vadd.f32 %v126, %v571
  %v573 = vpop.f32.mrb[0].mxu0
  %574 = vmatprep.mubr.bf16.mxu0 %v259
  %575 = vmatmul.mubr.bf16.gmra.mrb[0].mxu0 %v258
  %v576 = vpop.f32.mrb[0].mxu0
  %v577 = vadd.f32 %v126, %v576
  %v578 = vpop.f32.mrb[0].mxu0
  %v579 = vpop.f32.mrb[0].mxu0
  %v580 = vadd.f32 %v126, %v579
  %v581 = vpop.f32.mrb[0].mxu0
  %582 = vmatprep.mubr.bf16.mxu0 %v263
  %583 = vmatmul.mubr.bf16.gmra.mrb[0].mxu0 %v262
  %v584 = vpop.f32.mrb[0].mxu0
  %v585 = vadd.f32 %v126, %v584
  %v586 = vpop.f32.mrb[0].mxu0
  %v587 = vpop.f32.mrb[0].mxu0
  %v588 = vadd.f32 %v126, %v587
  %v589 = vpop.f32.mrb[0].mxu0
  %590 = vmatprep.mubr.bf16.mxu0 %v267
  %591 = vmatmul.mubr.bf16.gmra.mrb[0].mxu0 %v266
  %v592 = vpop.f32.mrb[0].mxu0
  %v593 = vadd.f32 %v126, %v592
  %v594 = vpop.f32.mrb[0].mxu0
  %v595 = vpop.f32.mrb[0].mxu0
  %v596 = vadd.f32 %v126, %v595
  %v597 = vpop.f32.mrb[0].mxu0
  %598 = vmatprep.mubr.bf16.mxu0 %v271
  %599 = vmatmul.mubr.bf16.gmra.mrb[0].mxu0 %v270
  %v600 = vpop.f32.mrb[0].mxu0
  %v601 = vadd.f32 %v126, %v600
  %v602 = vpop.f32.mrb[0].mxu0
  %v603 = vpop.f32.mrb[0].mxu0
  %v604 = vadd.f32 %v126, %v603
  %v605 = vpop.f32.mrb[0].mxu0
  %606 = vmatprep.mubr.bf16.mxu0 %v275
  %607 = vmatmul.mubr.bf16.gmra.mrb[0].mxu0 %v274
  %v608 = vpop.f32.mrb[0].mxu0
  %v609 = vadd.f32 %v126, %v608
  %v610 = vpop.f32.mrb[0].mxu0
  %v611 = vpop.f32.mrb[0].mxu0
  %v612 = vadd.f32 %v126, %v611
  %v613 = vpop.f32.mrb[0].mxu0
  %614 = vmatprep.mubr.bf16.mxu0 %v279
  %615 = vmatmul.mubr.bf16.gmra.mrb[0].mxu0 %v278
  %v616 = vpop.f32.mrb[0].mxu0
  %v617 = vadd.f32 %v126, %v616
  %v618 = vpop.f32.mrb[0].mxu0
  %v619 = vpop.f32.mrb[0].mxu0
  %v620 = vadd.f32 %v126, %v619
  %v621 = vpop.f32.mrb[0].mxu0
  %622 = vmatprep.mubr.bf16.mxu0 %v283
  %623 = vmatmul.mubr.bf16.gmra.mrb[0].mxu0 %v282
  %v624 = vpop.f32.mrb[0].mxu0
  %v625 = vadd.f32 %v126, %v624
  %v626 = vpop.f32.mrb[0].mxu0
  %v627 = vpop.f32.mrb[0].mxu0
  %v628 = vadd.f32 %v126, %v627
  %v629 = vpop.f32.mrb[0].mxu0
  %630 = vmatprep.mubr.bf16.mxu0 %v287
  %631 = vmatmul.mubr.bf16.gmra.mrb[0].mxu0 %v286
  %v632 = vpop.f32.mrb[0].mxu0
  %v633 = vadd.f32 %v126, %v632
  %v634 = vpop.f32.mrb[0].mxu0
  %v635 = vpop.f32.mrb[0].mxu0
  %v636 = vadd.f32 %v126, %v635
  %v637 = vpop.f32.mrb[0].mxu0
  %638 = vmatprep.mubr.bf16.mxu0 %v291
  %639 = vmatmul.mubr.bf16.gmra.mrb[0].mxu0 %v290
  %v640 = vpop.f32.mrb[0].mxu0
  %v641 = vadd.f32 %v126, %v640
  %v642 = vpop.f32.mrb[0].mxu0
  %v643 = vpop.f32.mrb[0].mxu0
  %v644 = vadd.f32 %v126, %v643
  %v645 = vpop.f32.mrb[0].mxu0
  %646 = vmatprep.mubr.bf16.mxu0 %v295
  %647 = vmatmul.mubr.bf16.gmra.mrb[0].mxu0 %v294
  %v648 = vpop.f32.mrb[0].mxu0
  %v649 = vadd.f32 %v126, %v648
  %v650 = vpop.f32.mrb[0].mxu0
  %v651 = vpop.f32.mrb[0].mxu0
  %v652 = vpop.f32.mrb[0].mxu0
  %653 = vdwg.mxu0
  %654 = vmatprep.subr.bf16.mxu0 0
  %655 = vmatpush1.bf16.msra.mxu0 %v486
  %656 = vmatprep.subr.bf16.mxu0 0
  %657 = vmatpush1.bf16.msra.mxu0 %v487
  %658 = vmatprep.subr.bf16.mxu0 0
  %659 = vmatpush1.bf16.msra.mxu0 %v488
  %660 = vmatprep.subr.bf16.mxu0 0
  %661 = vmatpush1.bf16.msra.mxu0 %v489
  %662 = vmatprep.subr.bf16.mxu0 0
  %663 = vmatpush1.bf16.msra.mxu0 %v490
  %664 = vmatprep.subr.bf16.mxu0 0
  %665 = vmatpush1.bf16.msra.mxu0 %v491
  %666 = vmatprep.subr.bf16.mxu0 0
  %667 = vmatpush1.bf16.msra.mxu0 %v492
  %668 = vmatprep.subr.bf16.mxu0 0
  %669 = vmatpush1.bf16.msra.mxu0 %v493
  %670 = vmatprep.subr.bf16.mxu0 0
  %671 = vmatpush1.bf16.msra.mxu0 %v494
  %672 = vmatprep.subr.bf16.mxu0 0
  %673 = vmatpush1.bf16.msra.mxu0 %v495
  %674 = vmatprep.subr.bf16.mxu0 0
  %675 = vmatpush1.bf16.msra.mxu0 %v496
  %676 = vmatprep.subr.bf16.mxu0 0
  %677 = vmatpush1.bf16.msra.mxu0 %v497
  %678 = vmatprep.subr.bf16.mxu0 0
  %679 = vmatpush1.bf16.msra.mxu0 %v498
  %680 = vmatprep.subr.bf16.mxu0 0
  %681 = vmatpush1.bf16.msra.mxu0 %v499
  %682 = vmatprep.subr.bf16.mxu0 0
  %683 = vmatpush1.bf16.msra.mxu0 %v500
  %684 = vmatprep.subr.bf16.mxu0 0
  %685 = vmatpush1.bf16.msra.mxu0 %v501
  %686 = vmatprep.mubr.bf16.mxu0 %v257
  %687 = vmatmul.mubr.bf16.gmra.mrb[0].mxu0 %v256
  %v688 = vpop.f32.mrb[0].mxu0
  %v689 = vadd.f32 %v569, %v688
  %v690 = vpop.f32.mrb[0].mxu0
  %v691 = vpop.f32.mrb[0].mxu0
  %v692 = vadd.f32 %v572, %v691
  %v693 = vpop.f32.mrb[0].mxu0
  %694 = vmatprep.mubr.bf16.mxu0 %v261
  %695 = vmatmul.mubr.bf16.gmra.mrb[0].mxu0 %v260
  %v696 = vpop.f32.mrb[0].mxu0
  %v697 = vadd.f32 %v577, %v696
  %v698 = vpop.f32.mrb[0].mxu0
  %v699 = vpop.f32.mrb[0].mxu0
  %v700 = vadd.f32 %v580, %v699
  %v701 = vpop.f32.mrb[0].mxu0
  %702 = vmatprep.mubr.bf16.mxu0 %v265
  %703 = vmatmul.mubr.bf16.gmra.mrb[0].mxu0 %v264
  %v704 = vpop.f32.mrb[0].mxu0
  %v705 = vadd.f32 %v585, %v704
  %v706 = vpop.f32.mrb[0].mxu0
  %v707 = vpop.f32.mrb[0].mxu0
  %v708 = vadd.f32 %v588, %v707
  %v709 = vpop.f32.mrb[0].mxu0
  %710 = vmatprep.mubr.bf16.mxu0 %v269
  %711 = vmatmul.mubr.bf16.gmra.mrb[0].mxu0 %v268
  %v712 = vpop.f32.mrb[0].mxu0
  %v713 = vadd.f32 %v593, %v712
  %v714 = vpop.f32.mrb[0].mxu0
  %v715 = vpop.f32.mrb[0].mxu0
  %v716 = vadd.f32 %v596, %v715
  %v717 = vpop.f32.mrb[0].mxu0
  %718 = vmatprep.mubr.bf16.mxu0 %v273
  %719 = vmatmul.mubr.bf16.gmra.mrb[0].mxu0 %v272
  %v720 = vpop.f32.mrb[0].mxu0
  %v721 = vadd.f32 %v601, %v720
  %v722 = vpop.f32.mrb[0].mxu0
  %v723 = vpop.f32.mrb[0].mxu0
  %v724 = vadd.f32 %v604, %v723
  %v725 = vpop.f32.mrb[0].mxu0
  %726 = vmatprep.mubr.bf16.mxu0 %v277
  %727 = vmatmul.mubr.bf16.gmra.mrb[0].mxu0 %v276
  %v728 = vpop.f32.mrb[0].mxu0
  %v729 = vadd.f32 %v609, %v728
  %v730 = vpop.f32.mrb[0].mxu0
  %v731 = vpop.f32.mrb[0].mxu0
  %v732 = vadd.f32 %v612, %v731
  %v733 = vpop.f32.mrb[0].mxu0
  %734 = vmatprep.mubr.bf16.mxu0 %v281
  %735 = vmatmul.mubr.bf16.gmra.mrb[0].mxu0 %v280
  %v736 = vpop.f32.mrb[0].mxu0
  %v737 = vadd.f32 %v617, %v736
  %v738 = vpop.f32.mrb[0].mxu0
  %v739 = vpop.f32.mrb[0].mxu0
  %v740 = vadd.f32 %v620, %v739
  %v741 = vpop.f32.mrb[0].mxu0
  %742 = vmatprep.mubr.bf16.mxu0 %v285
  %743 = vmatmul.mubr.bf16.gmra.mrb[0].mxu0 %v284
  %v744 = vpop.f32.mrb[0].mxu0
  %v745 = vadd.f32 %v625, %v744
  %v746 = vpop.f32.mrb[0].mxu0
  %v747 = vpop.f32.mrb[0].mxu0
  %v748 = vadd.f32 %v628, %v747
  %v749 = vpop.f32.mrb[0].mxu0
  %750 = vmatprep.mubr.bf16.mxu0 %v289
  %751 = vmatmul.mubr.bf16.gmra.mrb[0].mxu0 %v288
  %v752 = vpop.f32.mrb[0].mxu0
  %v753 = vadd.f32 %v633, %v752
  %v754 = vpop.f32.mrb[0].mxu0
  %v755 = vpop.f32.mrb[0].mxu0
  %v756 = vadd.f32 %v636, %v755
  %v757 = vpop.f32.mrb[0].mxu0
  %758 = vmatprep.mubr.bf16.mxu0 %v293
  %759 = vmatmul.mubr.bf16.gmra.mrb[0].mxu0 %v292
  %v760 = vpop.f32.mrb[0].mxu0
  %v761 = vadd.f32 %v641, %v760
  %v762 = vpop.f32.mrb[0].mxu0
  %v763 = vpop.f32.mrb[0].mxu0
  %v764 = vadd.f32 %v644, %v763
  %v765 = vpop.f32.mrb[0].mxu0
  %766 = vmatprep.mubr.bf16.mxu0 %v297
  %767 = vmatmul.mubr.bf16.gmra.mrb[0].mxu0 %v296
  %v768 = vpop.f32.mrb[0].mxu0
  %v769 = vadd.f32 %v649, %v768
  %v770 = vpop.f32.mrb[0].mxu0
  %v771 = vpop.f32.mrb[0].mxu0
  %v772 = vpop.f32.mrb[0].mxu0
  %773 = vdwg.mxu0
  %v774 = vmax.f32 %v689, 0.0
  %v775 = vmax.f32 %v692, 0.0
  %v776 = vmax.f32 %v697, 0.0
  %v777 = vmax.f32 %v700, 0.0
  %v778 = vmax.f32 %v705, 0.0
  %v779 = vmax.f32 %v708, 0.0
  %v780 = vmax.f32 %v713, 0.0
  %v781 = vmax.f32 %v716, 0.0
  %v782 = vmax.f32 %v721, 0.0
  %v783 = vmax.f32 %v724, 0.0
  %v784 = vmax.f32 %v729, 0.0
  %v785 = vmax.f32 %v732, 0.0
  %v786 = vmax.f32 %v737, 0.0
  %v787 = vmax.f32 %v740, 0.0
  %v788 = vmax.f32 %v745, 0.0
  %v789 = vmax.f32 %v748, 0.0
  %v790 = vmax.f32 %v753, 0.0
  %v791 = vmax.f32 %v756, 0.0
  %v792 = vmax.f32 %v761, 0.0
  %v793 = vmax.f32 %v764, 0.0
  %v794 = vmax.f32 %v769, 0.0
  %v795 = vpack.c.bf16 %v775, %v774
  %v796 = vpack.c.bf16 %v777, %v776
  %v797 = vpack.c.bf16 %v779, %v778
  %v798 = vpack.c.bf16 %v781, %v780
  %v799 = vpack.c.bf16 %v783, %v782
  %v800 = vpack.c.bf16 %v785, %v784
  %v801 = vpack.c.bf16 %v787, %v786
  %v802 = vpack.c.bf16 %v789, %v788
  %v803 = vpack.c.bf16 %v791, %v790
  %v804 = vpack.c.bf16 %v793, %v792
  %v805 = vpack.c.bf16 %v794, %v794
  %v817 = vunpack.c.l.b16 %v795
  %v818 = vunpack.c.h.b16 %v795
  %v819 = vunpack.c.l.b16 %v796
  %v820 = vunpack.c.h.b16 %v796
  %v821 = vunpack.c.l.b16 %v797
  %v822 = vunpack.c.h.b16 %v797
  %v823 = vunpack.c.l.b16 %v798
  %v824 = vunpack.c.h.b16 %v798
  %v825 = vunpack.c.l.b16 %v799
  %v826 = vunpack.c.h.b16 %v799
  %v827 = vunpack.c.l.b16 %v800
  %v828 = vunpack.c.h.b16 %v800
  %v829 = vunpack.c.l.b16 %v801
  %v830 = vunpack.c.h.b16 %v801
  %v831 = vunpack.c.l.b16 %v802
  %v832 = vunpack.c.h.b16 %v802
  %v833 = vunpack.c.l.b16 %v803
  %v834 = vunpack.c.h.b16 %v803
  %v835 = vunpack.c.l.b16 %v804
  %v836 = vunpack.c.h.b16 %v804
  %v837 = vunpack.c.l.b16 %v805
  %v838 = vpack.c.b16 %v817, %v817
  %v839 = vpack.c.b16 %v818, %v818
  %v840 = vpack.c.b16 %v819, %v819
  %v841 = vpack.c.b16 %v820, %v820
  %v842 = vpack.c.b16 %v821, %v821
  %v843 = vpack.c.b16 %v822, %v822
  %v844 = vpack.c.b16 %v823, %v823
  %v845 = vpack.c.b16 %v824, %v824
  %v846 = vpack.c.b16 %v825, %v825
  %v847 = vpack.c.b16 %v826, %v826
  %v848 = vpack.c.b16 %v827, %v827
  %v849 = vpack.c.b16 %v828, %v828
  %v850 = vpack.c.b16 %v829, %v829
  %v851 = vpack.c.b16 %v830, %v830
  %v852 = vpack.c.b16 %v831, %v831
  %v853 = vpack.c.b16 %v832, %v832
  %v854 = vpack.c.b16 %v833, %v833
  %v855 = vpack.c.b16 %v834, %v834
  %v856 = vpack.c.b16 %v835, %v835
  %v857 = vpack.c.b16 %v836, %v836
  %v858 = vpack.c.b16 %v837, %v837
  %vm880 = vcmask 519168
  %881 = vst.msk [vmem:[%s3] sm:$0xf] %vm880, %v838
  %882 = vst.msk [vmem:[%s3 + $0x4] sm:$0xf] %vm880, %v839
  %883 = vst.msk [vmem:[%s3 + $0x8] sm:$0xf] %vm880, %v840
  %884 = vst.msk [vmem:[%s3 + $0xc] sm:$0xf] %vm880, %v841
  %885 = vst.msk [vmem:[%s3 + $0x10] sm:$0xf] %vm880, %v842
  %886 = vst.msk [vmem:[%s3 + $0x14] sm:$0xf] %vm880, %v843
  %887 = vst.msk [vmem:[%s3 + $0x18] sm:$0xf] %vm880, %v844
  %888 = vst.msk [vmem:[%s3 + $0x1c] sm:$0xf] %vm880, %v845
  %889 = vst.msk [vmem:[%s3 + $0x20] sm:$0xf] %vm880, %v846
  %890 = vst.msk [vmem:[%s3 + $0x24] sm:$0xf] %vm880, %v847
  %891 = vst.msk [vmem:[%s3 + $0x28] sm:$0xf] %vm880, %v848
  %892 = vst.msk [vmem:[%s3 + $0x2c] sm:$0xf] %vm880, %v849
  %893 = vst.msk [vmem:[%s3 + $0x30] sm:$0xf] %vm880, %v850
  %894 = vst.msk [vmem:[%s3 + $0x34] sm:$0xf] %vm880, %v851
  %895 = vst.msk [vmem:[%s3 + $0x38] sm:$0xf] %vm880, %v852
  %896 = vst.msk [vmem:[%s3 + $0x3c] sm:$0xf] %vm880, %v853
  %897 = vst.msk [vmem:[%s3 + $0x40] sm:$0xf] %vm880, %v854
  %898 = vst.msk [vmem:[%s3 + $0x44] sm:$0xf] %vm880, %v855
  %899 = vst.msk [vmem:[%s3 + $0x48] sm:$0xf] %vm880, %v856
  %900 = vst.msk [vmem:[%s3 + $0x4c] sm:$0xf] %vm880, %v857
  %vm901 = vcmask 516096
  %902 = vst.msk [vmem:[%s3 + $0x50] sm:$0x1] %vm901, %v858
  // Predicated region
  $region14: #{dueling_dqn_forward.5} parent=0 // pred_check
    _
  $region15: #{dueling_dqn_forward.5} parent=0 // pred_check_branch
    %904 = sbr.rel (0) target = $region17
  $region16: #{dueling_dqn_forward.5} parent=0 // pred_region
    _
  $region17: #{dueling_dqn_forward.5} parent=0 // pred_fallthru
    _
  // Predicated region
  $region18: #{dueling_dqn_forward.5} parent=0 // pred_check
    _
  $region19: #{dueling_dqn_forward.5} parent=0 // pred_check_branch
    %906 = sbr.rel (0) target = $region21
  $region20: #{dueling_dqn_forward.5} parent=0 // pred_region
    _
  $region21: #{dueling_dqn_forward.5} parent=0 // pred_fallthru
    _

// kernel: dueling_dqn_forward.6
$region0: #{dueling_dqn_forward.6}
  #allocation0 [shape = 'u32[]', space=smem, size = 0x4, offset = 0x4, fixed_abs, tag = 'smem constant byte address 0x4 - core index']
  #allocation1 [shape = 'u32[144,128]{1,0:T(1,128)}', space=vmem, size = 0x12000, scoped, tag = 'internal scratch']
  %s0 = inlined_call_operand.vmem [shape: bf16[98,576], index: 0, kind: input, shape index: {}]
  %s1 = inlined_call_operand.vmem [shape: bf16[576,64], index: 1, kind: input, shape index: {}]
  %s2 = inlined_call_operand.vmem [shape: f32[1,64], index: 2, kind: input, shape index: {}]
  %s3 = inlined_call_operand.vmem [shape: bf16[98,64], index: 3, kind: output, shape index: {}]
  %s4 = sld [smem:[#allocation0]]
  $region22: #{dueling_dqn_forward.6} parent=0
    _
  %s6 = ssub.s32 1, %s4
  %s7 = scalar_select 0, %s6, %s4
  // Predicated region
  $region2: #{dueling_dqn_forward.6} parent=0 // pred_check
    _
  $region3: #{dueling_dqn_forward.6} parent=0 // pred_check_branch
    %9 = sbr.rel (0) target = $region5
  $region4: #{dueling_dqn_forward.6} parent=0 // pred_region
    _
  $region5: #{dueling_dqn_forward.6} parent=0 // pred_fallthru
    _
  // Predicated region
  $region6: #{dueling_dqn_forward.6} parent=0 // pred_check
    _
  $region7: #{dueling_dqn_forward.6} parent=0 // pred_check_branch
    %11 = sbr.rel (0) target = $region9
  $region8: #{dueling_dqn_forward.6} parent=0 // pred_region
    _
  $region9: #{dueling_dqn_forward.6} parent=0 // pred_fallthru
    _
  // Predicated region
  $region10: #{dueling_dqn_forward.6} parent=0 // pred_check
    _
  $region11: #{dueling_dqn_forward.6} parent=0 // pred_check_branch
    %13 = sbr.rel (0) target = $region13
  $region12: #{dueling_dqn_forward.6} parent=0 // pred_region
    _
  $region13: #{dueling_dqn_forward.6} parent=0 // pred_fallthru
    _
  %v15 = vld [vmem:[%s0] sm:$0xff]
  %v16 = vld [vmem:[%s0 + $0x8] sm:$0xff]
  %v17 = vld [vmem:[%s0 + $0x10] sm:$0xf]
  %v18 = vld [vmem:[%s0 + $0x14] sm:$0xff]
  %v19 = vld [vmem:[%s0 + $0x1c] sm:$0xff]
  %v20 = vld [vmem:[%s0 + $0x24] sm:$0xf]
  %v21 = vld [vmem:[%s0 + $0x28] sm:$0xff]
  %v22 = vld [vmem:[%s0 + $0x30] sm:$0xff]
  %v23 = vld [vmem:[%s0 + $0x38] sm:$0xf]
  %v24 = vld [vmem:[%s0 + $0x3c] sm:$0xff]
  %v25 = vld [vmem:[%s0 + $0x44] sm:$0xff]
  %v26 = vld [vmem:[%s0 + $0x4c] sm:$0xf]
  %v27 = vld [vmem:[%s0 + $0x50] sm:$0xff]
  %v28 = vld [vmem:[%s0 + $0x58] sm:$0xff]
  %v29 = vld [vmem:[%s0 + $0x60] sm:$0xf]
  %v30 = vld [vmem:[%s0 + $0x64] sm:$0xff]
  %v31 = vld [vmem:[%s0 + $0x6c] sm:$0xff]
  %v32 = vld [vmem:[%s0 + $0x74] sm:$0xf]
  %v33 = vld [vmem:[%s0 + $0x78] sm:$0xff]
  %v34 = vld [vmem:[%s0 + $0x80] sm:$0xff]
  %v35 = vld [vmem:[%s0 + $0x88] sm:$0xf]
  %v36 = vld [vmem:[%s0 + $0x8c] sm:$0xff]
  %v37 = vld [vmem:[%s0 + $0x94] sm:$0xff]
  %v38 = vld [vmem:[%s0 + $0x9c] sm:$0xf]
  %v39 = vld [vmem:[%s0 + $0xa0] sm:$0xff]
  %v40 = vld [vmem:[%s0 + $0xa8] sm:$0xff]
  %v41 = vld [vmem:[%s0 + $0xb0] sm:$0xf]
  %v42 = vld [vmem:[%s0 + $0xb4] sm:$0xff]
  %v43 = vld [vmem:[%s0 + $0xbc] sm:$0xff]
  %v44 = vld [vmem:[%s0 + $0xc4] sm:$0xf]
  %v45 = vld [vmem:[%s0 + $0xc8] sm:$0xff]
  %v46 = vld [vmem:[%s0 + $0xd0] sm:$0xff]
  %v47 = vld [vmem:[%s0 + $0xd8] sm:$0xf]
  %v48 = vld [vmem:[%s0 + $0xdc] sm:$0xff]
  %v49 = vld [vmem:[%s0 + $0xe4] sm:$0xff]
  %v50 = vld [vmem:[%s0 + $0xec] sm:$0xf]
  %v51 = vld [vmem:[%s0 + $0xf0] sm:$0x11]
  %v52 = vld [vmem:[%s0 + $0xf8] sm:$0x11]
  %v53 = vld [vmem:[%s0 + $0x100] sm:$0x1]
  %v54 = vld [vmem:[%s1] sm:$0xf]
  %v55 = vld [vmem:[%s1 + $0x4] sm:$0xf]
  %v56 = vld [vmem:[%s1 + $0x8] sm:$0xf]
  %v57 = vld [vmem:[%s1 + $0xc] sm:$0xf]
  %v58 = vld [vmem:[%s1 + $0x10] sm:$0xf]
  %v59 = vld [vmem:[%s1 + $0x14] sm:$0xf]
  %v60 = vld [vmem:[%s1 + $0x18] sm:$0xf]
  %v61 = vld [vmem:[%s1 + $0x1c] sm:$0xf]
  %v62 = vld [vmem:[%s1 + $0x20] sm:$0xf]
  %v63 = vld [vmem:[%s1 + $0x24] sm:$0xf]
  %v64 = vld [vmem:[%s1 + $0x28] sm:$0xf]
  %v65 = vld [vmem:[%s1 + $0x2c] sm:$0xf]
  %v66 = vld [vmem:[%s1 + $0x30] sm:$0xf]
  %v67 = vld [vmem:[%s1 + $0x34] sm:$0xf]
  %v68 = vld [vmem:[%s1 + $0x38] sm:$0xf]
  %v69 = vld [vmem:[%s1 + $0x3c] sm:$0xf]
  %v70 = vld [vmem:[%s1 + $0x40] sm:$0xf]
  %v71 = vld [vmem:[%s1 + $0x44] sm:$0xf]
  %v72 = vld [vmem:[%s1 + $0x48] sm:$0xf]
  %v73 = vld [vmem:[%s1 + $0x4c] sm:$0xf]
  %v74 = vld [vmem:[%s1 + $0x50] sm:$0xf]
  %v75 = vld [vmem:[%s1 + $0x54] sm:$0xf]
  %v76 = vld [vmem:[%s1 + $0x58] sm:$0xf]
  %v77 = vld [vmem:[%s1 + $0x5c] sm:$0xf]
  %v78 = vld [vmem:[%s1 + $0x60] sm:$0xf]
  %v79 = vld [vmem:[%s1 + $0x64] sm:$0xf]
  %v80 = vld [vmem:[%s1 + $0x68] sm:$0xf]
  %v81 = vld [vmem:[%s1 + $0x6c] sm:$0xf]
  %v82 = vld [vmem:[%s1 + $0x70] sm:$0xf]
  %v83 = vld [vmem:[%s1 + $0x74] sm:$0xf]
  %v84 = vld [vmem:[%s1 + $0x78] sm:$0xf]
  %v85 = vld [vmem:[%s1 + $0x7c] sm:$0xf]
  %v86 = vld [vmem:[%s1 + $0x80] sm:$0xf]
  %v87 = vld [vmem:[%s1 + $0x84] sm:$0xf]
  %v88 = vld [vmem:[%s1 + $0x88] sm:$0xf]
  %v89 = vld [vmem:[%s1 + $0x8c] sm:$0xf]
  %v90 = vld [vmem:[%s1 + $0x90] sm:$0xf]
  %v91 = vld [vmem:[%s1 + $0x94] sm:$0xf]
  %v92 = vld [vmem:[%s1 + $0x98] sm:$0xf]
  %v93 = vld [vmem:[%s1 + $0x9c] sm:$0xf]
  %v94 = vld [vmem:[%s1 + $0xa0] sm:$0xf]
  %v95 = vld [vmem:[%s1 + $0xa4] sm:$0xf]
  %v96 = vld [vmem:[%s1 + $0xa8] sm:$0xf]
  %v97 = vld [vmem:[%s1 + $0xac] sm:$0xf]
  %v98 = vld [vmem:[%s1 + $0xb0] sm:$0xf]
  %v99 = vld [vmem:[%s1 + $0xb4] sm:$0xf]
  %v100 = vld [vmem:[%s1 + $0xb8] sm:$0xf]
  %v101 = vld [vmem:[%s1 + $0xbc] sm:$0xf]
  %v102 = vld [vmem:[%s1 + $0xc0] sm:$0xf]
  %v103 = vld [vmem:[%s1 + $0xc4] sm:$0xf]
  %v104 = vld [vmem:[%s1 + $0xc8] sm:$0xf]
  %v105 = vld [vmem:[%s1 + $0xcc] sm:$0xf]
  %v106 = vld [vmem:[%s1 + $0xd0] sm:$0xf]
  %v107 = vld [vmem:[%s1 + $0xd4] sm:$0xf]
  %v108 = vld [vmem:[%s1 + $0xd8] sm:$0xf]
  %v109 = vld [vmem:[%s1 + $0xdc] sm:$0xf]
  %v110 = vld [vmem:[%s1 + $0xe0] sm:$0xf]
  %v111 = vld [vmem:[%s1 + $0xe4] sm:$0xf]
  %v112 = vld [vmem:[%s1 + $0xe8] sm:$0xf]
  %v113 = vld [vmem:[%s1 + $0xec] sm:$0xf]
  %v114 = vld [vmem:[%s1 + $0xf0] sm:$0xf]
  %v115 = vld [vmem:[%s1 + $0xf4] sm:$0xf]
  %v116 = vld [vmem:[%s1 + $0xf8] sm:$0xf]
  %v117 = vld [vmem:[%s1 + $0xfc] sm:$0xf]
  %v118 = vld [vmem:[%s1 + $0x100] sm:$0xf]
  %v119 = vld [vmem:[%s1 + $0x104] sm:$0xf]
  %v120 = vld [vmem:[%s1 + $0x108] sm:$0xf]
  %v121 = vld [vmem:[%s1 + $0x10c] sm:$0xf]
  %v122 = vld [vmem:[%s1 + $0x110] sm:$0xf]
  %v123 = vld [vmem:[%s1 + $0x114] sm:$0xf]
  %v124 = vld [vmem:[%s1 + $0x118] sm:$0xf]
  %v125 = vld [vmem:[%s1 + $0x11c] sm:$0xf]
  %v126 = vld [vmem:[%s2] sm:$0x1]
  %v128 = vlaneseq
  %v129 = vshrl.u32 %v128, 7
  %v130 = vsub.s32 0, %v129
  %v131 = vrot.slane %v126, %v130
  %v172 = vunpack.c.l.b16 %v15
  %v173 = vunpack.c.h.b16 %v15
  %v174 = vunpack.c.l.b16 %v16
  %v175 = vunpack.c.h.b16 %v16
  %v176 = vunpack.c.l.b16 %v17
  %v177 = vunpack.c.l.b16 %v18
  %v178 = vunpack.c.h.b16 %v18
  %v179 = vunpack.c.l.b16 %v19
  %v180 = vunpack.c.h.b16 %v19
  %v181 = vunpack.c.l.b16 %v20
  %v182 = vunpack.c.l.b16 %v21
  %v183 = vunpack.c.h.b16 %v21
  %v184 = vunpack.c.l.b16 %v22
  %v185 = vunpack.c.h.b16 %v22
  %v186 = vunpack.c.l.b16 %v23
  %v187 = vunpack.c.l.b16 %v24
  %v188 = vunpack.c.h.b16 %v24
  %v189 = vunpack.c.l.b16 %v25
  %v190 = vunpack.c.h.b16 %v25
  %v191 = vunpack.c.l.b16 %v26
  %v192 = vunpack.c.l.b16 %v27
  %v193 = vunpack.c.h.b16 %v27
  %v194 = vunpack.c.l.b16 %v28
  %v195 = vunpack.c.h.b16 %v28
  %v196 = vunpack.c.l.b16 %v29
  %v197 = vunpack.c.l.b16 %v30
  %v198 = vunpack.c.h.b16 %v30
  %v199 = vunpack.c.l.b16 %v31
  %v200 = vunpack.c.h.b16 %v31
  %v201 = vunpack.c.l.b16 %v32
  %v202 = vunpack.c.l.b16 %v33
  %v203 = vunpack.c.h.b16 %v33
  %v204 = vunpack.c.l.b16 %v34
  %v205 = vunpack.c.h.b16 %v34
  %v206 = vunpack.c.l.b16 %v35
  %v207 = vunpack.c.l.b16 %v36
  %v208 = vunpack.c.h.b16 %v36
  %v209 = vunpack.c.l.b16 %v37
  %v210 = vunpack.c.h.b16 %v37
  %v211 = vunpack.c.l.b16 %v38
  %v212 = vunpack.c.l.b16 %v39
  %v213 = vunpack.c.h.b16 %v39
  %v214 = vunpack.c.l.b16 %v40
  %v215 = vunpack.c.h.b16 %v40
  %v216 = vunpack.c.l.b16 %v41
  %v217 = vunpack.c.l.b16 %v42
  %v218 = vunpack.c.h.b16 %v42
  %v219 = vunpack.c.l.b16 %v43
  %v220 = vunpack.c.h.b16 %v43
  %v221 = vunpack.c.l.b16 %v44
  %v222 = vunpack.c.l.b16 %v45
  %v223 = vunpack.c.h.b16 %v45
  %v224 = vunpack.c.l.b16 %v46
  %v225 = vunpack.c.h.b16 %v46
  %v226 = vunpack.c.l.b16 %v47
  %v227 = vunpack.c.l.b16 %v48
  %v228 = vunpack.c.h.b16 %v48
  %v229 = vunpack.c.l.b16 %v49
  %v230 = vunpack.c.h.b16 %v49
  %v231 = vunpack.c.l.b16 %v50
  %v232 = vunpack.c.l.b16 %v51
  %v233 = vunpack.c.h.b16 %v51
  %v234 = vunpack.c.l.b16 %v52
  %v235 = vunpack.c.h.b16 %v52
  %v236 = vunpack.c.l.b16 %v53
  %v237 = vpack.c.b16 %v177, %v172
  %v238 = vpack.c.b16 %v178, %v173
  %v239 = vpack.c.b16 %v179, %v174
  %v240 = vpack.c.b16 %v180, %v175
  %v241 = vpack.c.b16 %v181, %v176
  %v242 = vpack.c.b16 %v187, %v182
  %v243 = vpack.c.b16 %v188, %v183
  %v244 = vpack.c.b16 %v189, %v184
  %v245 = vpack.c.b16 %v190, %v185
  %v246 = vpack.c.b16 %v191, %v186
  %v247 = vpack.c.b16 %v197, %v192
  %v248 = vpack.c.b16 %v198, %v193
  %v249 = vpack.c.b16 %v199, %v194
  %v250 = vpack.c.b16 %v200, %v195
  %v251 = vpack.c.b16 %v201, %v196
  %v252 = vpack.c.b16 %v207, %v202
  %v253 = vpack.c.b16 %v208, %v203
  %v254 = vpack.c.b16 %v209, %v204
  %v255 = vpack.c.b16 %v210, %v205
  %v256 = vpack.c.b16 %v211, %v206
  %v257 = vpack.c.b16 %v217, %v212
  %v258 = vpack.c.b16 %v218, %v213
  %v259 = vpack.c.b16 %v219, %v214
  %v260 = vpack.c.b16 %v220, %v215
  %v261 = vpack.c.b16 %v221, %v216
  %v262 = vpack.c.b16 %v227, %v222
  %v263 = vpack.c.b16 %v228, %v223
  %v264 = vpack.c.b16 %v229, %v224
  %v265 = vpack.c.b16 %v230, %v225
  %v266 = vpack.c.b16 %v231, %v226
  %v267 = vpack.c.b16 %v232, %v232
  %v268 = vpack.c.b16 %v233, %v233
  %v269 = vpack.c.b16 %v234, %v234
  %v270 = vpack.c.b16 %v235, %v235
  %v271 = vpack.c.b16 %v236, %v236
  %v372 = vunpack.c.l.b16 %v54
  %v373 = vunpack.c.l.b16 %v55
  %v374 = vunpack.c.l.b16 %v56
  %v375 = vunpack.c.l.b16 %v57
  %v376 = vunpack.c.l.b16 %v58
  %v377 = vunpack.c.l.b16 %v59
  %v378 = vunpack.c.l.b16 %v60
  %v379 = vunpack.c.l.b16 %v61
  %v380 = vunpack.c.l.b16 %v62
  %v381 = vunpack.c.l.b16 %v63
  %v382 = vunpack.c.l.b16 %v64
  %v383 = vunpack.c.l.b16 %v65
  %v384 = vunpack.c.l.b16 %v66
  %v385 = vunpack.c.l.b16 %v67
  %v386 = vunpack.c.l.b16 %v68
  %v387 = vunpack.c.l.b16 %v69
  %v388 = vunpack.c.l.b16 %v70
  %v389 = vunpack.c.l.b16 %v71
  %v390 = vunpack.c.l.b16 %v72
  %v391 = vunpack.c.l.b16 %v73
  %v392 = vunpack.c.l.b16 %v74
  %v393 = vunpack.c.l.b16 %v75
  %v394 = vunpack.c.l.b16 %v76
  %v395 = vunpack.c.l.b16 %v77
  %v396 = vunpack.c.l.b16 %v78
  %v397 = vunpack.c.l.b16 %v79
  %v398 = vunpack.c.l.b16 %v80
  %v399 = vunpack.c.l.b16 %v81
  %v400 = vunpack.c.l.b16 %v82
  %v401 = vunpack.c.l.b16 %v83
  %v402 = vunpack.c.l.b16 %v84
  %v403 = vunpack.c.l.b16 %v85
  %v404 = vunpack.c.l.b16 %v86
  %v405 = vunpack.c.l.b16 %v87
  %v406 = vunpack.c.l.b16 %v88
  %v407 = vunpack.c.l.b16 %v89
  %v408 = vunpack.c.l.b16 %v90
  %v409 = vunpack.c.l.b16 %v91
  %v410 = vunpack.c.l.b16 %v92
  %v411 = vunpack.c.l.b16 %v93
  %v412 = vunpack.c.l.b16 %v94
  %v413 = vunpack.c.l.b16 %v95
  %v414 = vunpack.c.l.b16 %v96
  %v415 = vunpack.c.l.b16 %v97
  %v416 = vunpack.c.l.b16 %v98
  %v417 = vunpack.c.l.b16 %v99
  %v418 = vunpack.c.l.b16 %v100
  %v419 = vunpack.c.l.b16 %v101
  %v420 = vunpack.c.l.b16 %v102
  %v421 = vunpack.c.l.b16 %v103
  %v422 = vunpack.c.l.b16 %v104
  %v423 = vunpack.c.l.b16 %v105
  %v424 = vunpack.c.l.b16 %v106
  %v425 = vunpack.c.l.b16 %v107
  %v426 = vunpack.c.l.b16 %v108
  %v427 = vunpack.c.l.b16 %v109
  %v428 = vunpack.c.l.b16 %v110
  %v429 = vunpack.c.l.b16 %v111
  %v430 = vunpack.c.l.b16 %v112
  %v431 = vunpack.c.l.b16 %v113
  %v432 = vunpack.c.l.b16 %v114
  %v433 = vunpack.c.l.b16 %v115
  %v434 = vunpack.c.l.b16 %v116
  %v435 = vunpack.c.l.b16 %v117
  %v436 = vunpack.c.l.b16 %v118
  %v437 = vunpack.c.l.b16 %v119
  %v438 = vunpack.c.l.b16 %v120
  %v439 = vunpack.c.l.b16 %v121
  %v440 = vunpack.c.l.b16 %v122
  %v441 = vunpack.c.l.b16 %v123
  %v442 = vunpack.c.l.b16 %v124
  %v443 = vunpack.c.l.b16 %v125
  %v444 = vpack.c.b16 %v373, %v372
  %v445 = vpack.c.b16 %v375, %v374
  %v446 = vpack.c.b16 %v377, %v376
  %v447 = vpack.c.b16 %v379, %v378
  %v448 = vpack.c.b16 %v381, %v380
  %v449 = vpack.c.b16 %v383, %v382
  %v450 = vpack.c.b16 %v385, %v384
  %v451 = vpack.c.b16 %v387, %v386
  %v452 = vpack.c.b16 %v389, %v388
  %v453 = vpack.c.b16 %v391, %v390
  %v454 = vpack.c.b16 %v393, %v392
  %v455 = vpack.c.b16 %v395, %v394
  %v456 = vpack.c.b16 %v397, %v396
  %v457 = vpack.c.b16 %v399, %v398
  %v458 = vpack.c.b16 %v401, %v400
  %v459 = vpack.c.b16 %v403, %v402
  %v460 = vpack.c.b16 %v405, %v404
  %v461 = vpack.c.b16 %v407, %v406
  %v462 = vpack.c.b16 %v409, %v408
  %v463 = vpack.c.b16 %v411, %v410
  %v464 = vpack.c.b16 %v413, %v412
  %v465 = vpack.c.b16 %v415, %v414
  %v466 = vpack.c.b16 %v417, %v416
  %v467 = vpack.c.b16 %v419, %v418
  %v468 = vpack.c.b16 %v421, %v420
  %v469 = vpack.c.b16 %v423, %v422
  %v470 = vpack.c.b16 %v425, %v424
  %v471 = vpack.c.b16 %v427, %v426
  %v472 = vpack.c.b16 %v429, %v428
  %v473 = vpack.c.b16 %v431, %v430
  %v474 = vpack.c.b16 %v433, %v432
  %v475 = vpack.c.b16 %v435, %v434
  %v476 = vpack.c.b16 %v437, %v436
  %v477 = vpack.c.b16 %v439, %v438
  %v478 = vpack.c.b16 %v441, %v440
  %v479 = vpack.c.b16 %v443, %v442
  %vm516 = vcmask 523264
  %v518 = vsel %vm516, %v241, 0
  %v521 = vsel %vm516, %v246, 0
  %v524 = vsel %vm516, %v251, 0
  %v527 = vsel %vm516, %v256, 0
  %v530 = vsel %vm516, %v261, 0
  %v533 = vsel %vm516, %v266, 0
  %v536 = vsel %vm516, %v271, 0
  %538 = vmatprep.subr.bf16.mxu0 0
  %539 = vmatpush1.bf16.msra.mxu0 %v444
  %540 = vmatprep.subr.bf16.mxu0 0
  %541 = vmatpush1.bf16.msra.mxu0 %v445
  %542 = vmatprep.subr.bf16.mxu0 0
  %543 = vmatpush1.bf16.msra.mxu0 %v446
  %544 = vmatprep.subr.bf16.mxu0 0
  %545 = vmatpush1.bf16.msra.mxu0 %v447
  %546 = vmatprep.subr.bf16.mxu0 0
  %547 = vmatpush1.bf16.msra.mxu0 %v448
  %548 = vmatprep.subr.bf16.mxu0 0
  %549 = vmatpush1.bf16.msra.mxu0 %v449
  %550 = vmatprep.subr.bf16.mxu0 0
  %551 = vmatpush1.bf16.msra.mxu0 %v450
  %552 = vmatprep.subr.bf16.mxu0 0
  %553 = vmatpush1.bf16.msra.mxu0 %v451
  %554 = vmatprep.subr.bf16.mxu0 0
  %555 = vmatpush1.bf16.msra.mxu0 %v452
  %556 = vmatprep.subr.bf16.mxu0 0
  %557 = vmatpush1.bf16.msra.mxu0 %v453
  %558 = vmatprep.subr.bf16.mxu0 0
  %559 = vmatpush1.bf16.msra.mxu0 %v454
  %560 = vmatprep.subr.bf16.mxu0 0
  %561 = vmatpush1.bf16.msra.mxu0 %v455
  %562 = vmatprep.subr.bf16.mxu0 0
  %563 = vmatpush1.bf16.msra.mxu0 %v456
  %564 = vmatprep.subr.bf16.mxu0 0
  %565 = vmatpush1.bf16.msra.mxu0 %v457
  %566 = vmatprep.subr.bf16.mxu0 0
  %567 = vmatpush1.bf16.msra.mxu0 %v458
  %568 = vmatprep.subr.bf16.mxu0 0
  %569 = vmatpush1.bf16.msra.mxu0 %v459
  %570 = vmatprep.mubr.bf16.mxu0 %v238
  %571 = vmatmul.mubr.bf16.gmra.mrb[0].mxu0 %v237
  %v572 = vpop.f32.mrb[0].mxu0
  %v573 = vadd.f32 %v131, %v572
  %v574 = vpop.f32.mrb[0].mxu0
  %v575 = vpop.f32.mrb[0].mxu0
  %v576 = vadd.f32 %v131, %v575
  %v577 = vpop.f32.mrb[0].mxu0
  %578 = vmatprep.mubr.bf16.mxu0 %v243
  %579 = vmatmul.mubr.bf16.gmra.mrb[0].mxu0 %v242
  %v580 = vpop.f32.mrb[0].mxu0
  %v581 = vadd.f32 %v131, %v580
  %v582 = vpop.f32.mrb[0].mxu0
  %v583 = vpop.f32.mrb[0].mxu0
  %v584 = vadd.f32 %v131, %v583
  %v585 = vpop.f32.mrb[0].mxu0
  %586 = vmatprep.mubr.bf16.mxu0 %v248
  %587 = vmatmul.mubr.bf16.gmra.mrb[0].mxu0 %v247
  %v588 = vpop.f32.mrb[0].mxu0
  %v589 = vadd.f32 %v131, %v588
  %v590 = vpop.f32.mrb[0].mxu0
  %v591 = vpop.f32.mrb[0].mxu0
  %v592 = vadd.f32 %v131, %v591
  %v593 = vpop.f32.mrb[0].mxu0
  %594 = vmatprep.mubr.bf16.mxu0 %v253
  %595 = vmatmul.mubr.bf16.gmra.mrb[0].mxu0 %v252
  %v596 = vpop.f32.mrb[0].mxu0
  %v597 = vadd.f32 %v131, %v596
  %v598 = vpop.f32.mrb[0].mxu0
  %v599 = vpop.f32.mrb[0].mxu0
  %v600 = vadd.f32 %v131, %v599
  %v601 = vpop.f32.mrb[0].mxu0
  %602 = vmatprep.mubr.bf16.mxu0 %v258
  %603 = vmatmul.mubr.bf16.gmra.mrb[0].mxu0 %v257
  %v604 = vpop.f32.mrb[0].mxu0
  %v605 = vadd.f32 %v131, %v604
  %v606 = vpop.f32.mrb[0].mxu0
  %v607 = vpop.f32.mrb[0].mxu0
  %v608 = vadd.f32 %v131, %v607
  %v609 = vpop.f32.mrb[0].mxu0
  %610 = vmatprep.mubr.bf16.mxu0 %v263
  %611 = vmatmul.mubr.bf16.gmra.mrb[0].mxu0 %v262
  %v612 = vpop.f32.mrb[0].mxu0
  %v613 = vadd.f32 %v131, %v612
  %v614 = vpop.f32.mrb[0].mxu0
  %v615 = vpop.f32.mrb[0].mxu0
  %v616 = vadd.f32 %v131, %v615
  %v617 = vpop.f32.mrb[0].mxu0
  %618 = vmatprep.mubr.bf16.mxu0 %v268
  %619 = vmatmul.mubr.bf16.gmra.mrb[0].mxu0 %v267
  %v620 = vpop.f32.mrb[0].mxu0
  %v621 = vadd.f32 %v131, %v620
  %v622 = vpop.f32.mrb[0].mxu0
  %v623 = vpop.f32.mrb[0].mxu0
  %v624 = vpop.f32.mrb[0].mxu0
  %625 = vdwg.mxu0
  %626 = vmatprep.subr.bf16.mxu0 0
  %627 = vmatpush1.bf16.msra.mxu0 %v460
  %628 = vmatprep.subr.bf16.mxu0 0
  %629 = vmatpush1.bf16.msra.mxu0 %v461
  %630 = vmatprep.subr.bf16.mxu0 0
  %631 = vmatpush1.bf16.msra.mxu0 %v462
  %632 = vmatprep.subr.bf16.mxu0 0
  %633 = vmatpush1.bf16.msra.mxu0 %v463
  %634 = vmatprep.subr.bf16.mxu0 0
  %635 = vmatpush1.bf16.msra.mxu0 %v464
  %636 = vmatprep.subr.bf16.mxu0 0
  %637 = vmatpush1.bf16.msra.mxu0 %v465
  %638 = vmatprep.subr.bf16.mxu0 0
  %639 = vmatpush1.bf16.msra.mxu0 %v466
  %640 = vmatprep.subr.bf16.mxu0 0
  %641 = vmatpush1.bf16.msra.mxu0 %v467
  %642 = vmatprep.subr.bf16.mxu0 0
  %643 = vmatpush1.bf16.msra.mxu0 %v468
  %644 = vmatprep.subr.bf16.mxu0 0
  %645 = vmatpush1.bf16.msra.mxu0 %v469
  %646 = vmatprep.subr.bf16.mxu0 0
  %647 = vmatpush1.bf16.msra.mxu0 %v470
  %648 = vmatprep.subr.bf16.mxu0 0
  %649 = vmatpush1.bf16.msra.mxu0 %v471
  %650 = vmatprep.subr.bf16.mxu0 0
  %651 = vmatpush1.bf16.msra.mxu0 %v472
  %652 = vmatprep.subr.bf16.mxu0 0
  %653 = vmatpush1.bf16.msra.mxu0 %v473
  %654 = vmatprep.subr.bf16.mxu0 0
  %655 = vmatpush1.bf16.msra.mxu0 %v474
  %656 = vmatprep.subr.bf16.mxu0 0
  %657 = vmatpush1.bf16.msra.mxu0 %v475
  %658 = vmatprep.mubr.bf16.mxu0 %v240
  %659 = vmatmul.mubr.bf16.gmra.mrb[0].mxu0 %v239
  %v660 = vpop.f32.mrb[0].mxu0
  %v661 = vadd.f32 %v573, %v660
  %v662 = vpop.f32.mrb[0].mxu0
  %v663 = vpop.f32.mrb[0].mxu0
  %v664 = vadd.f32 %v576, %v663
  %v665 = vpop.f32.mrb[0].mxu0
  %666 = vmatprep.mubr.bf16.mxu0 %v245
  %667 = vmatmul.mubr.bf16.gmra.mrb[0].mxu0 %v244
  %v668 = vpop.f32.mrb[0].mxu0
  %v669 = vadd.f32 %v581, %v668
  %v670 = vpop.f32.mrb[0].mxu0
  %v671 = vpop.f32.mrb[0].mxu0
  %v672 = vadd.f32 %v584, %v671
  %v673 = vpop.f32.mrb[0].mxu0
  %674 = vmatprep.mubr.bf16.mxu0 %v250
  %675 = vmatmul.mubr.bf16.gmra.mrb[0].mxu0 %v249
  %v676 = vpop.f32.mrb[0].mxu0
  %v677 = vadd.f32 %v589, %v676
  %v678 = vpop.f32.mrb[0].mxu0
  %v679 = vpop.f32.mrb[0].mxu0
  %v680 = vadd.f32 %v592, %v679
  %v681 = vpop.f32.mrb[0].mxu0
  %682 = vmatprep.mubr.bf16.mxu0 %v255
  %683 = vmatmul.mubr.bf16.gmra.mrb[0].mxu0 %v254
  %v684 = vpop.f32.mrb[0].mxu0
  %v685 = vadd.f32 %v597, %v684
  %v686 = vpop.f32.mrb[0].mxu0
  %v687 = vpop.f32.mrb[0].mxu0
  %v688 = vadd.f32 %v600, %v687
  %v689 = vpop.f32.mrb[0].mxu0
  %690 = vmatprep.mubr.bf16.mxu0 %v260
  %691 = vmatmul.mubr.bf16.gmra.mrb[0].mxu0 %v259
  %v692 = vpop.f32.mrb[0].mxu0
  %v693 = vadd.f32 %v605, %v692
  %v694 = vpop.f32.mrb[0].mxu0
  %v695 = vpop.f32.mrb[0].mxu0
  %v696 = vadd.f32 %v608, %v695
  %v697 = vpop.f32.mrb[0].mxu0
  %698 = vmatprep.mubr.bf16.mxu0 %v265
  %699 = vmatmul.mubr.bf16.gmra.mrb[0].mxu0 %v264
  %v700 = vpop.f32.mrb[0].mxu0
  %v701 = vadd.f32 %v613, %v700
  %v702 = vpop.f32.mrb[0].mxu0
  %v703 = vpop.f32.mrb[0].mxu0
  %v704 = vadd.f32 %v616, %v703
  %v705 = vpop.f32.mrb[0].mxu0
  %706 = vmatprep.mubr.bf16.mxu0 %v270
  %707 = vmatmul.mubr.bf16.gmra.mrb[0].mxu0 %v269
  %v708 = vpop.f32.mrb[0].mxu0
  %v709 = vadd.f32 %v621, %v708
  %v710 = vpop.f32.mrb[0].mxu0
  %v711 = vpop.f32.mrb[0].mxu0
  %v712 = vpop.f32.mrb[0].mxu0
  %713 = vdwg.mxu0
  %714 = vmatprep.subr.bf16.mxu0 0
  %715 = vmatpush1.bf16.msra.mxu0 %v476
  %716 = vmatprep.subr.bf16.mxu0 0
  %717 = vmatpush1.bf16.msra.mxu0 %v477
  %718 = vmatprep.subr.bf16.mxu0 0
  %719 = vmatpush1.bf16.msra.mxu0 %v478
  %720 = vmatprep.subr.bf16.mxu0 0
  %721 = vmatpush1.bf16.msra.mxu0 %v479
  %722 = vmatprep.subr.bf16.mxu0 0
  %723 = vmatpush1.bf16.msra.mxu0 0
  %724 = vmatprep.subr.bf16.mxu0 0
  %725 = vmatpush1.bf16.msra.mxu0 0
  %726 = vmatprep.subr.bf16.mxu0 0
  %727 = vmatpush1.bf16.msra.mxu0 0
  %728 = vmatprep.subr.bf16.mxu0 0
  %729 = vmatpush1.bf16.msra.mxu0 0
  %730 = vmatprep.subr.bf16.mxu0 0
  %731 = vmatpush1.bf16.msra.mxu0 0
  %732 = vmatprep.subr.bf16.mxu0 0
  %733 = vmatpush1.bf16.msra.mxu0 0
  %734 = vmatprep.subr.bf16.mxu0 0
  %735 = vmatpush1.bf16.msra.mxu0 0
  %736 = vmatprep.subr.bf16.mxu0 0
  %737 = vmatpush1.bf16.msra.mxu0 0
  %738 = vmatprep.subr.bf16.mxu0 0
  %739 = vmatpush1.bf16.msra.mxu0 0
  %740 = vmatprep.subr.bf16.mxu0 0
  %741 = vmatpush1.bf16.msra.mxu0 0
  %742 = vmatprep.subr.bf16.mxu0 0
  %743 = vmatpush1.bf16.msra.mxu0 0
  %744 = vmatprep.subr.bf16.mxu0 0
  %745 = vmatpush1.bf16.msra.mxu0 0
  %746 = vmatprep.mubr.bf16.mxu0 0
  %747 = vmatmul.mubr.bf16.gmra.mrb[0].mxu0 %v518
  %v748 = vpop.f32.mrb[0].mxu0
  %v749 = vadd.f32 %v661, %v748
  %v750 = vpop.f32.mrb[0].mxu0
  %v751 = vpop.f32.mrb[0].mxu0
  %v752 = vadd.f32 %v664, %v751
  %v753 = vpop.f32.mrb[0].mxu0
  %754 = vmatprep.mubr.bf16.mxu0 0
  %755 = vmatmul.mubr.bf16.gmra.mrb[0].mxu0 %v521
  %v756 = vpop.f32.mrb[0].mxu0
  %v757 = vadd.f32 %v669, %v756
  %v758 = vpop.f32.mrb[0].mxu0
  %v759 = vpop.f32.mrb[0].mxu0
  %v760 = vadd.f32 %v672, %v759
  %v761 = vpop.f32.mrb[0].mxu0
  %762 = vmatprep.mubr.bf16.mxu0 0
  %763 = vmatmul.mubr.bf16.gmra.mrb[0].mxu0 %v524
  %v764 = vpop.f32.mrb[0].mxu0
  %v765 = vadd.f32 %v677, %v764
  %v766 = vpop.f32.mrb[0].mxu0
  %v767 = vpop.f32.mrb[0].mxu0
  %v768 = vadd.f32 %v680, %v767
  %v769 = vpop.f32.mrb[0].mxu0
  %770 = vmatprep.mubr.bf16.mxu0 0
  %771 = vmatmul.mubr.bf16.gmra.mrb[0].mxu0 %v527
  %v772 = vpop.f32.mrb[0].mxu0
  %v773 = vadd.f32 %v685, %v772
  %v774 = vpop.f32.mrb[0].mxu0
  %v775 = vpop.f32.mrb[0].mxu0
  %v776 = vadd.f32 %v688, %v775
  %v777 = vpop.f32.mrb[0].mxu0
  %778 = vmatprep.mubr.bf16.mxu0 0
  %779 = vmatmul.mubr.bf16.gmra.mrb[0].mxu0 %v530
  %v780 = vpop.f32.mrb[0].mxu0
  %v781 = vadd.f32 %v693, %v780
  %v782 = vpop.f32.mrb[0].mxu0
  %v783 = vpop.f32.mrb[0].mxu0
  %v784 = vadd.f32 %v696, %v783
  %v785 = vpop.f32.mrb[0].mxu0
  %786 = vmatprep.mubr.bf16.mxu0 0
  %787 = vmatmul.mubr.bf16.gmra.mrb[0].mxu0 %v533
  %v788 = vpop.f32.mrb[0].mxu0
  %v789 = vadd.f32 %v701, %v788
  %v790 = vpop.f32.mrb[0].mxu0
  %v791 = vpop.f32.mrb[0].mxu0
  %v792 = vadd.f32 %v704, %v791
  %v793 = vpop.f32.mrb[0].mxu0
  %794 = vmatprep.mubr.bf16.mxu0 0
  %795 = vmatmul.mubr.bf16.gmra.mrb[0].mxu0 %v536
  %v796 = vpop.f32.mrb[0].mxu0
  %v797 = vadd.f32 %v709, %v796
  %v798 = vpop.f32.mrb[0].mxu0
  %v799 = vpop.f32.mrb[0].mxu0
  %v800 = vpop.f32.mrb[0].mxu0
  %801 = vdwg.mxu0
  %v802 = vmax.f32 %v749, 0.0
  %v803 = vmax.f32 %v752, 0.0
  %v804 = vmax.f32 %v757, 0.0
  %v805 = vmax.f32 %v760, 0.0
  %v806 = vmax.f32 %v765, 0.0
  %v807 = vmax.f32 %v768, 0.0
  %v808 = vmax.f32 %v773, 0.0
  %v809 = vmax.f32 %v776, 0.0
  %v810 = vmax.f32 %v781, 0.0
  %v811 = vmax.f32 %v784, 0.0
  %v812 = vmax.f32 %v789, 0.0
  %v813 = vmax.f32 %v792, 0.0
  %v814 = vmax.f32 %v797, 0.0
  %v815 = vpack.c.bf16 %v803, %v802
  %v816 = vpack.c.bf16 %v805, %v804
  %v817 = vpack.c.bf16 %v807, %v806
  %v818 = vpack.c.bf16 %v809, %v808
  %v819 = vpack.c.bf16 %v811, %v810
  %v820 = vpack.c.bf16 %v813, %v812
  %v821 = vpack.c.bf16 %v814, %v814
  %v829 = vunpack.c.l.b16 %v815
  %v830 = vunpack.c.h.b16 %v815
  %v831 = vunpack.c.l.b16 %v816
  %v832 = vunpack.c.h.b16 %v816
  %v833 = vunpack.c.l.b16 %v817
  %v834 = vunpack.c.h.b16 %v817
  %v835 = vunpack.c.l.b16 %v818
  %v836 = vunpack.c.h.b16 %v818
  %v837 = vunpack.c.l.b16 %v819
  %v838 = vunpack.c.h.b16 %v819
  %v839 = vunpack.c.l.b16 %v820
  %v840 = vunpack.c.h.b16 %v820
  %v841 = vunpack.c.l.b16 %v821
  %v842 = vpack.c.b16 %v829, %v829
  %v843 = vpack.c.b16 %v830, %v830
  %v844 = vpack.c.b16 %v831, %v831
  %v845 = vpack.c.b16 %v832, %v832
  %v846 = vpack.c.b16 %v833, %v833
  %v847 = vpack.c.b16 %v834, %v834
  %v848 = vpack.c.b16 %v835, %v835
  %v849 = vpack.c.b16 %v836, %v836
  %v850 = vpack.c.b16 %v837, %v837
  %v851 = vpack.c.b16 %v838, %v838
  %v852 = vpack.c.b16 %v839, %v839
  %v853 = vpack.c.b16 %v840, %v840
  %v854 = vpack.c.b16 %v841, %v841
  %vm868 = vcmask 519168
  %869 = vst.msk [vmem:[%s3] sm:$0xf] %vm868, %v842
  %870 = vst.msk [vmem:[%s3 + $0x4] sm:$0xf] %vm868, %v843
  %871 = vst.msk [vmem:[%s3 + $0x8] sm:$0xf] %vm868, %v844
  %872 = vst.msk [vmem:[%s3 + $0xc] sm:$0xf] %vm868, %v845
  %873 = vst.msk [vmem:[%s3 + $0x10] sm:$0xf] %vm868, %v846
  %874 = vst.msk [vmem:[%s3 + $0x14] sm:$0xf] %vm868, %v847
  %875 = vst.msk [vmem:[%s3 + $0x18] sm:$0xf] %vm868, %v848
  %876 = vst.msk [vmem:[%s3 + $0x1c] sm:$0xf] %vm868, %v849
  %877 = vst.msk [vmem:[%s3 + $0x20] sm:$0xf] %vm868, %v850
  %878 = vst.msk [vmem:[%s3 + $0x24] sm:$0xf] %vm868, %v851
  %879 = vst.msk [vmem:[%s3 + $0x28] sm:$0xf] %vm868, %v852
  %880 = vst.msk [vmem:[%s3 + $0x2c] sm:$0xf] %vm868, %v853
  %vm881 = vcmask 516096
  %882 = vst.msk [vmem:[%s3 + $0x30] sm:$0x1] %vm881, %v854
  // Predicated region
  $region14: #{dueling_dqn_forward.6} parent=0 // pred_check
    _
  $region15: #{dueling_dqn_forward.6} parent=0 // pred_check_branch
    %884 = sbr.rel (0) target = $region17
  $region16: #{dueling_dqn_forward.6} parent=0 // pred_region
    _
  $region17: #{dueling_dqn_forward.6} parent=0 // pred_fallthru
    _
  // Predicated region
  $region18: #{dueling_dqn_forward.6} parent=0 // pred_check
    _
  $region19: #{dueling_dqn_forward.6} parent=0 // pred_check_branch
    %886 = sbr.rel (0) target = $region21
  $region20: #{dueling_dqn_forward.6} parent=0 // pred_region
    _
  $region21: #{dueling_dqn_forward.6} parent=0 // pred_fallthru
    _

// kernel: dueling_dqn_forward.7
$region0: #{dueling_dqn_forward.7}
  #allocation0 [shape = 'u32[]', space=smem, size = 0x4, offset = 0x4, fixed_abs, tag = 'smem constant byte address 0x4 - core index']
  #allocation1 [shape = 'u32[144,128]{1,0:T(1,128)}', space=vmem, size = 0x12000, scoped, tag = 'internal scratch']
  #allocation2 [shape = 'f32[2,1024]{1,0:T(2,128)}', space=vmem, size = 0x2000, scoped, tag = 'scratch operand']
  %s0 = inlined_call_operand.vmem [shape: bf16[2,3200], index: 0, kind: input, shape index: {}]
  %s1 = inlined_call_operand.vmem [shape: bf16[3200,1024], index: 1, kind: input, shape index: {}]
  %s2 = inlined_call_operand.vmem [shape: f32[1,1024], index: 2, kind: input, shape index: {}]
  %s3 = inlined_call_operand.vmem [shape: f32[1024,5], index: 3, kind: input, shape index: {}]
  %s4 = inlined_call_operand.vmem [shape: f32[1,5], index: 4, kind: input, shape index: {}]
  %s5 = inlined_call_operand.hbm [shape: f32[2,4], index: 5, kind: output, shape index: {}]
  %s6 = sld [smem:[#allocation0]]
  $region61: #{dueling_dqn_forward.7} parent=0
    _
  %s8 = ssub.s32 1, %s6
  %s9 = scalar_select 0, %s8, %s6
  $region1: #{dueling_dqn_forward.7} parent=0
    #allocation3 [shape = 'u8[1024]{0}', space=vmem, size = 0x400, scoped, tag = 'output window, operand 0, single buffered']
    #allocation4 [shape = 's32[2]{0}', space=sflag, size = 0x8, scoped, tag = 'scoped memory for dueling_dqn_forward.7']
    %10 = vsyncpa [#allocation4], 0
    loop: start=0, step=1, limit=7
    $region2: #{dueling_dqn_forward.7} parent=1 // loop_pre_header
      _
    $region3: #{dueling_dqn_forward.7} parent=1 // loop_header
      %s12 = sphi 0, %s16
      %p13 = scmp.ge.s32.totalorder %s12, 7
      %s22 = sphi 0, %s24
      %s25 = sphi 0, %s22
      %s26 = sphi 0, %s25
      %s42 = sphi 0, %s26
      %s48 = sphi 0, %s50
      %s51 = sphi 0, %s48
      %s52 = sphi 0, %s51
      %s68 = sphi 0, %s52
      %s72 = sphi 0, %s72
      %s74 = sphi 0, %s72
      %s75 = sphi 0, %s74
      %s89 = sphi 0, %s75
      %s93 = sphi 0, %s93
      %s95 = sphi 0, %s93
      %s96 = sphi 0, %s95
      %s110 = sphi 0, %s96
      %s114 = sphi 0, %s114
      %s116 = sphi 0, %s114
      %s117 = sphi 0, %s116
      %s131 = sphi 0, %s117
      %s135 = sphi 0, %s135
      %s137 = sphi 0, %s135
      %s138 = sphi 0, %s137
      %s152 = sphi 0, %s138
    $region4: #{dueling_dqn_forward.7} parent=1 // loop_header_branch
      %15 = sbr.rel (%p13) target = $region8
    $region5: #{dueling_dqn_forward.7} parent=1 // loop_body
      %s17 = ssub.s32 %s12, 1
      %s18 = ssub.s32 %s12, 2
      %s19 = sadd.s32 %s12, 1
      %s20 = ssub.s32 %s12, %s19
      %p21 = scmp.eq.s32.totalorder %s20, 0
      %s23 = sadd.s32 %s22, 1
      %s24 = scalar_select %p21, %s22, %s23
      %p27 = pneg %p21
      %p28 = scmp.eq.s32.totalorder %s12, 4
      %p29 = por %p27, %p28
      %p30 = scmp.ne.s32.totalorder %s22, %s25
      %p31 = scmp.eq.s32.totalorder %s12, 0
      %p32 = por %p30, %p31
      %p33 = scmp.ne.s32.totalorder %s22, %s25
      %p34 = scmp.eq.s32.totalorder %s17, 4
      %p35 = por %p33, %p34
      %p36 = scmp.ne.s32.totalorder %s25, %s26
      %p37 = scmp.eq.s32.totalorder %s17, 0
      %p38 = por %p36, %p37
      %p39 = scmp.ne.s32.totalorder %s25, %s26
      %p40 = scmp.eq.s32.totalorder %s18, 4
      %p41 = por %p39, %p40
      %p43 = scmp.ne.s32.totalorder %s26, %s42
      %p44 = scmp.eq.s32.totalorder %s18, 0
      %p45 = por %p43, %p44
      %s46 = ssub.s32 %s12, %s19
      %p47 = scmp.eq.s32.totalorder %s46, 0
      %s49 = sadd.s32 %s48, 1
      %s50 = scalar_select %p47, %s48, %s49
      %p53 = pneg %p47
      %p54 = scmp.eq.s32.totalorder %s12, 4
      %p55 = por %p53, %p54
      %p56 = scmp.ne.s32.totalorder %s48, %s51
      %p57 = scmp.eq.s32.totalorder %s12, 0
      %p58 = por %p56, %p57
      %p59 = scmp.ne.s32.totalorder %s48, %s51
      %p60 = scmp.eq.s32.totalorder %s17, 4
      %p61 = por %p59, %p60
      %p62 = scmp.ne.s32.totalorder %s51, %s52
      %p63 = scmp.eq.s32.totalorder %s17, 0
      %p64 = por %p62, %p63
      %p65 = scmp.ne.s32.totalorder %s51, %s52
      %p66 = scmp.eq.s32.totalorder %s18, 4
      %p67 = por %p65, %p66
      %p69 = scmp.ne.s32.totalorder %s52, %s68
      %p70 = scmp.eq.s32.totalorder %s18, 0
      %p71 = por %p69, %p70
      %s73 = sadd.s32 %s72, 1
      %p76 = scmp.eq.s32.totalorder %s12, 4
      %p77 = scmp.ne.s32.totalorder %s72, %s74
      %p78 = scmp.eq.s32.totalorder %s12, 0
      %p79 = por %p77, %p78
      %p80 = scmp.ne.s32.totalorder %s72, %s74
      %p81 = scmp.eq.s32.totalorder %s17, 4
      %p82 = por %p80, %p81
      %p83 = scmp.ne.s32.totalorder %s74, %s75
      %p84 = scmp.eq.s32.totalorder %s17, 0
      %p85 = por %p83, %p84
      %p86 = scmp.ne.s32.totalorder %s74, %s75
      %p87 = scmp.eq.s32.totalorder %s18, 4
      %p88 = por %p86, %p87
      %p90 = scmp.ne.s32.totalorder %s75, %s89
      %p91 = scmp.eq.s32.totalorder %s18, 0
      %p92 = por %p90, %p91
      %s94 = sadd.s32 %s93, 1
      %p97 = scmp.eq.s32.totalorder %s12, 4
      %p98 = scmp.ne.s32.totalorder %s93, %s95
      %p99 = scmp.eq.s32.totalorder %s12, 0
      %p100 = por %p98, %p99
      %p101 = scmp.ne.s32.totalorder %s93, %s95
      %p102 = scmp.eq.s32.totalorder %s17, 4
      %p103 = por %p101, %p102
      %p104 = scmp.ne.s32.totalorder %s95, %s96
      %p105 = scmp.eq.s32.totalorder %s17, 0
      %p106 = por %p104, %p105
      %p107 = scmp.ne.s32.totalorder %s95, %s96
      %p108 = scmp.eq.s32.totalorder %s18, 4
      %p109 = por %p107, %p108
      %p111 = scmp.ne.s32.totalorder %s96, %s110
      %p112 = scmp.eq.s32.totalorder %s18, 0
      %p113 = por %p111, %p112
      %s115 = sadd.s32 %s114, 1
      %p118 = scmp.eq.s32.totalorder %s12, 4
      %p119 = scmp.ne.s32.totalorder %s114, %s116
      %p120 = scmp.eq.s32.totalorder %s12, 0
      %p121 = por %p119, %p120
      %p122 = scmp.ne.s32.totalorder %s114, %s116
      %p123 = scmp.eq.s32.totalorder %s17, 4
      %p124 = por %p122, %p123
      %p125 = scmp.ne.s32.totalorder %s116, %s117
      %p126 = scmp.eq.s32.totalorder %s17, 0
      %p127 = por %p125, %p126
      %p128 = scmp.ne.s32.totalorder %s116, %s117
      %p129 = scmp.eq.s32.totalorder %s18, 4
      %p130 = por %p128, %p129
      %p132 = scmp.ne.s32.totalorder %s117, %s131
      %p133 = scmp.eq.s32.totalorder %s18, 0
      %p134 = por %p132, %p133
      %s136 = sadd.s32 %s135, 1
      %p139 = scmp.eq.s32.totalorder %s12, 4
      %p140 = scmp.ne.s32.totalorder %s135, %s137
      %p141 = scmp.eq.s32.totalorder %s12, 0
      %p142 = por %p140, %p141
      %p143 = scmp.ne.s32.totalorder %s135, %s137
      %p144 = scmp.eq.s32.totalorder %s17, 4
      %p145 = por %p143, %p144
      %p146 = scmp.ne.s32.totalorder %s137, %s138
      %p147 = scmp.eq.s32.totalorder %s17, 0
      %p148 = por %p146, %p147
      %p149 = scmp.ne.s32.totalorder %s137, %s138
      %p150 = scmp.eq.s32.totalorder %s18, 4
      %p151 = por %p149, %p150
      %p153 = scmp.ne.s32.totalorder %s138, %s152
      %p154 = scmp.eq.s32.totalorder %s18, 0
      %p155 = por %p153, %p154
      %p156 = scmp.le.s32.totalorder 1, %s12
      %p157 = scmp.lt.s32.totalorder %s12, 6
      %p158 = pnand %p156, %p157
      %p159 = pneg %p158
      // Predicated region
      $region9: #{dueling_dqn_forward.7} parent=5 // pred_check
        _
      $region10: #{dueling_dqn_forward.7} parent=5 // pred_check_branch
        %161 = sbr.rel (%p158) target = $region12
      $region11: #{dueling_dqn_forward.7} parent=5 // pred_region
        %s162 = ssub.s32 %s12, 1
        // Predicated region
        $region13: #{dueling_dqn_forward.7} parent=11 // pred_check
          %p163 = pneg %p85
        $region14: #{dueling_dqn_forward.7} parent=11 // pred_check_branch
          %165 = sbr.rel (%p163) target = $region16
        $region15: #{dueling_dqn_forward.7} parent=11 // pred_region
          _
        $region16: #{dueling_dqn_forward.7} parent=11 // pred_fallthru
          _
        // Predicated region
        $region17: #{dueling_dqn_forward.7} parent=11 // pred_check
          %p166 = pneg %p106
        $region18: #{dueling_dqn_forward.7} parent=11 // pred_check_branch
          %168 = sbr.rel (%p166) target = $region20
        $region19: #{dueling_dqn_forward.7} parent=11 // pred_region
          _
        $region20: #{dueling_dqn_forward.7} parent=11 // pred_fallthru
          _
        // Predicated region
        $region21: #{dueling_dqn_forward.7} parent=11 // pred_check
          %p169 = pneg %p127
        $region22: #{dueling_dqn_forward.7} parent=11 // pred_check_branch
          %171 = sbr.rel (%p169) target = $region24
        $region23: #{dueling_dqn_forward.7} parent=11 // pred_region
          _
        $region24: #{dueling_dqn_forward.7} parent=11 // pred_fallthru
          _
      $region12: #{dueling_dqn_forward.7} parent=5 // pred_fallthru
        _
      %p172 = scmp.lt.s32.totalorder %s12, 5
      // Predicated region
      $region25: #{dueling_dqn_forward.7} parent=5 // pred_check
        %p173 = pneg %p172
      $region26: #{dueling_dqn_forward.7} parent=5 // pred_check_branch
        %175 = sbr.rel (%p173) target = $region28
      $region27: #{dueling_dqn_forward.7} parent=5 // pred_region
        // Predicated region
        $region29: #{dueling_dqn_forward.7} parent=27 // pred_check
          %p176 = pneg %p32
        $region30: #{dueling_dqn_forward.7} parent=27 // pred_check_branch
          %178 = sbr.rel (%p176) target = $region32
        $region31: #{dueling_dqn_forward.7} parent=27 // pred_region
          %s179 = smul.u32 5, %s12
          %p180 = scmp.lt.s32.totalorder %s179, 24
          %s181 = scalar_select %p180, %s179, 24
          %s182 = scalar_lea.vmem %s0, %s181
          %s183 = smul.u32 5, %s12
        $region32: #{dueling_dqn_forward.7} parent=27 // pred_fallthru
          _
        // Predicated region
        $region33: #{dueling_dqn_forward.7} parent=27 // pred_check
          %p184 = pneg %p58
        $region34: #{dueling_dqn_forward.7} parent=27 // pred_check_branch
          %186 = sbr.rel (%p184) target = $region36
        $region35: #{dueling_dqn_forward.7} parent=27 // pred_region
          %s187 = smul.u32 80, %s12
          %p188 = scmp.lt.s32.totalorder %s187, 399
          %s189 = scalar_select %p188, %s187, 399
          %s190 = smul.addr %s189, 8
          %s191 = smul.addr %s190, 4
          %s192 = scalar_lea.vmem %s1, %s191
          %s193 = smul.u32 80, %s12
        $region36: #{dueling_dqn_forward.7} parent=27 // pred_fallthru
          _
      $region28: #{dueling_dqn_forward.7} parent=5 // pred_fallthru
        _
      %p194 = scmp.le.s32.totalorder 1, %s12
      %p195 = scmp.lt.s32.totalorder %s12, 6
      %p196 = pnand %p194, %p195
      %p197 = pneg %p196
      // Predicated region
      $region37: #{dueling_dqn_forward.7} parent=5 // pred_check
        _
      $region38: #{dueling_dqn_forward.7} parent=5 // pred_check_branch
        %199 = sbr.rel (%p196) target = $region40
      $region39: #{dueling_dqn_forward.7} parent=5 // pred_region
        %s200 = ssub.s32 %s12, 1
        %s201 = smul.u32 5, %s17
        %p202 = scmp.lt.s32.totalorder %s201, 24
        %s203 = scalar_select %p202, %s201, 24
        %s204 = scalar_lea.vmem %s0, %s203
        %p205 = pneg %p38
        %p206 = pneg %p35
        %s207 = smul.u32 80, %s17
        %p208 = scmp.lt.s32.totalorder %s207, 399
        %s209 = scalar_select %p208, %s207, 399
        %s210 = smul.addr %s209, 8
        %s211 = smul.addr %s210, 4
        %s212 = scalar_lea.vmem %s1, %s211
        %p213 = pneg %p64
        %p214 = pneg %p61
        %p215 = pneg %p85
        %p216 = pneg %p82
        %p217 = pneg %p106
        %p218 = pneg %p103
        %p219 = pneg %p127
        %p220 = pneg %p124
        %p221 = pneg %p148
        %p222 = pneg %p145
        %s223 = smul.u32 5, %s17
        %p224 = scmp.lt.s32.totalorder %s223, 24
        %s225 = scalar_select %p224, %s223, 24
        %s226 = scalar_lea.vmem %s0, %s225
        %s227 = smul.u32 5, %s17
        %s228 = smul.u32 80, %s17
        %p229 = scmp.lt.s32.totalorder %s228, 399
        %s230 = scalar_select %p229, %s228, 399
        %s231 = smul.addr %s230, 8
        %s232 = smul.addr %s231, 4
        %s233 = scalar_lea.vmem %s1, %s232
        %s234 = smul.u32 80, %s17
        %p236 = scmp.eq.s32.totalorder %s17, 0
        // Predicated region
        $region41: #{dueling_dqn_forward.7} parent=39 // pred_check
          %p237 = pneg %p236
        $region42: #{dueling_dqn_forward.7} parent=39 // pred_check_branch
          %239 = sbr.rel (%p237) target = $region44
        $region43: #{dueling_dqn_forward.7} parent=39 // pred_region
          %240 = vst [vmem:[#allocation2] sm:$0xff] 0.0
          %241 = vst [vmem:[#allocation2 + $0x8] sm:$0xff] 0.0
        $region44: #{dueling_dqn_forward.7} parent=39 // pred_fallthru
          _
        %v242 = vld [vmem:[#allocation2] sm:$0xff]
        %v243 = vld [vmem:[#allocation2 + $0x8] sm:$0xff]
        %v244 = vld [vmem:[%s226] sm:$0x1f]
        %v245 = vld [vmem:[%s233] sm:$0xff]
        %v246 = vld [vmem:[%s233 + $0x8] sm:$0xff]
        %v247 = vld [vmem:[%s233 + $0x10] sm:$0xff]
        %v248 = vld [vmem:[%s233 + $0x18] sm:$0xff]
        %v249 = vld [vmem:[%s233 + $0x20] sm:$0xff]
        %v250 = vld [vmem:[%s233 + $0x28] sm:$0xff]
        %v251 = vld [vmem:[%s233 + $0x30] sm:$0xff]
        %v252 = vld [vmem:[%s233 + $0x38] sm:$0xff]
        %v253 = vld [vmem:[%s233 + $0x40] sm:$0xff]
        %v254 = vld [vmem:[%s233 + $0x48] sm:$0xff]
        %v255 = vld [vmem:[%s233 + $0x50] sm:$0xff]
        %v256 = vld [vmem:[%s233 + $0x58] sm:$0xff]
        %v257 = vld [vmem:[%s233 + $0x60] sm:$0xff]
        %v258 = vld [vmem:[%s233 + $0x68] sm:$0xff]
        %v259 = vld [vmem:[%s233 + $0x70] sm:$0xff]
        %v260 = vld [vmem:[%s233 + $0x78] sm:$0xff]
        %v261 = vld [vmem:[%s233 + $0x80] sm:$0xff]
        %v262 = vld [vmem:[%s233 + $0x88] sm:$0xff]
        %v263 = vld [vmem:[%s233 + $0x90] sm:$0xff]
        %v264 = vld [vmem:[%s233 + $0x98] sm:$0xff]
        %v265 = vld [vmem:[%s233 + $0xa0] sm:$0xff]
        %v266 = vld [vmem:[%s233 + $0xa8] sm:$0xff]
        %v267 = vld [vmem:[%s233 + $0xb0] sm:$0xff]
        %v268 = vld [vmem:[%s233 + $0xb8] sm:$0xff]
        %v269 = vld [vmem:[%s233 + $0xc0] sm:$0xff]
        %v270 = vld [vmem:[%s233 + $0xc8] sm:$0xff]
        %v271 = vld [vmem:[%s233 + $0xd0] sm:$0xff]
        %v272 = vld [vmem:[%s233 + $0xd8] sm:$0xff]
        %v273 = vld [vmem:[%s233 + $0xe0] sm:$0xff]
        %v274 = vld [vmem:[%s233 + $0xe8] sm:$0xff]
        %v275 = vld [vmem:[%s233 + $0xf0] sm:$0xff]
        %v276 = vld [vmem:[%s233 + $0xf8] sm:$0xff]
        %v277 = vld [vmem:[%s233 + $0x100] sm:$0xff]
        %v278 = vld [vmem:[%s233 + $0x108] sm:$0xff]
        %v279 = vld [vmem:[%s233 + $0x110] sm:$0xff]
        %v280 = vld [vmem:[%s233 + $0x118] sm:$0xff]
        %v281 = vld [vmem:[%s233 + $0x120] sm:$0xff]
        %v282 = vld [vmem:[%s233 + $0x128] sm:$0xff]
        %v283 = vld [vmem:[%s233 + $0x130] sm:$0xff]
        %v284 = vld [vmem:[%s233 + $0x138] sm:$0xff]
        %v285 = vld [vmem:[%s233 + $0x140] sm:$0xff]
        %v286 = vld [vmem:[%s233 + $0x148] sm:$0xff]
        %v287 = vld [vmem:[%s233 + $0x150] sm:$0xff]
        %v288 = vld [vmem:[%s233 + $0x158] sm:$0xff]
        %v289 = vld [vmem:[%s233 + $0x160] sm:$0xff]
        %v290 = vld [vmem:[%s233 + $0x168] sm:$0xff]
        %v291 = vld [vmem:[%s233 + $0x170] sm:$0xff]
        %v292 = vld [vmem:[%s233 + $0x178] sm:$0xff]
        %v293 = vld [vmem:[%s233 + $0x180] sm:$0xff]
        %v294 = vld [vmem:[%s233 + $0x188] sm:$0xff]
        %v295 = vld [vmem:[%s233 + $0x190] sm:$0xff]
        %v296 = vld [vmem:[%s233 + $0x198] sm:$0xff]
        %v297 = vld [vmem:[%s233 + $0x1a0] sm:$0xff]
        %v298 = vld [vmem:[%s233 + $0x1a8] sm:$0xff]
        %v299 = vld [vmem:[%s233 + $0x1b0] sm:$0xff]
        %v300 = vld [vmem:[%s233 + $0x1b8] sm:$0xff]
        %v301 = vld [vmem:[%s233 + $0x1c0] sm:$0xff]
        %v302 = vld [vmem:[%s233 + $0x1c8] sm:$0xff]
        %v303 = vld [vmem:[%s233 + $0x1d0] sm:$0xff]
        %v304 = vld [vmem:[%s233 + $0x1d8] sm:$0xff]
        %v305 = vld [vmem:[%s233 + $0x1e0] sm:$0xff]
        %v306 = vld [vmem:[%s233 + $0x1e8] sm:$0xff]
        %v307 = vld [vmem:[%s233 + $0x1f0] sm:$0xff]
        %v308 = vld [vmem:[%s233 + $0x1f8] sm:$0xff]
        %v309 = vld [vmem:[%s233 + $0x200] sm:$0xff]
        %v310 = vld [vmem:[%s233 + $0x208] sm:$0xff]
        %v311 = vld [vmem:[%s233 + $0x210] sm:$0xff]
        %v312 = vld [vmem:[%s233 + $0x218] sm:$0xff]
        %v313 = vld [vmem:[%s233 + $0x220] sm:$0xff]
        %v314 = vld [vmem:[%s233 + $0x228] sm:$0xff]
        %v315 = vld [vmem:[%s233 + $0x230] sm:$0xff]
        %v316 = vld [vmem:[%s233 + $0x238] sm:$0xff]
        %v317 = vld [vmem:[%s233 + $0x240] sm:$0xff]
        %v318 = vld [vmem:[%s233 + $0x248] sm:$0xff]
        %v319 = vld [vmem:[%s233 + $0x250] sm:$0xff]
        %v320 = vld [vmem:[%s233 + $0x258] sm:$0xff]
        %v321 = vld [vmem:[%s233 + $0x260] sm:$0xff]
        %v322 = vld [vmem:[%s233 + $0x268] sm:$0xff]
        %v323 = vld [vmem:[%s233 + $0x270] sm:$0xff]
        %v324 = vld [vmem:[%s233 + $0x278] sm:$0xff]
        %v325 = vld [vmem:[%s233 + $0x280] sm:$0xff]
        %v326 = vld [vmem:[%s233 + $0x288] sm:$0xff]
        %v327 = vld [vmem:[%s233 + $0x290] sm:$0xff]
        %v328 = vld [vmem:[%s233 + $0x298] sm:$0xff]
        %v329 = vld [vmem:[%s233 + $0x2a0] sm:$0xff]
        %v330 = vld [vmem:[%s233 + $0x2a8] sm:$0xff]
        %v331 = vld [vmem:[%s233 + $0x2b0] sm:$0xff]
        %v332 = vld [vmem:[%s233 + $0x2b8] sm:$0xff]
        %v333 = vld [vmem:[%s233 + $0x2c0] sm:$0xff]
        %v334 = vld [vmem:[%s233 + $0x2c8] sm:$0xff]
        %v335 = vld [vmem:[%s233 + $0x2d0] sm:$0xff]
        %v336 = vld [vmem:[%s233 + $0x2d8] sm:$0xff]
        %v337 = vld [vmem:[%s233 + $0x2e0] sm:$0xff]
        %v338 = vld [vmem:[%s233 + $0x2e8] sm:$0xff]
        %v339 = vld [vmem:[%s233 + $0x2f0] sm:$0xff]
        %v340 = vld [vmem:[%s233 + $0x2f8] sm:$0xff]
        %v341 = vld [vmem:[%s233 + $0x300] sm:$0xff]
        %v342 = vld [vmem:[%s233 + $0x308] sm:$0xff]
        %v343 = vld [vmem:[%s233 + $0x310] sm:$0xff]
        %v344 = vld [vmem:[%s233 + $0x318] sm:$0xff]
        %v345 = vld [vmem:[%s233 + $0x320] sm:$0xff]
        %v346 = vld [vmem:[%s233 + $0x328] sm:$0xff]
        %v347 = vld [vmem:[%s233 + $0x330] sm:$0xff]
        %v348 = vld [vmem:[%s233 + $0x338] sm:$0xff]
        %v349 = vld [vmem:[%s233 + $0x340] sm:$0xff]
        %v350 = vld [vmem:[%s233 + $0x348] sm:$0xff]
        %v351 = vld [vmem:[%s233 + $0x350] sm:$0xff]
        %v352 = vld [vmem:[%s233 + $0x358] sm:$0xff]
        %v353 = vld [vmem:[%s233 + $0x360] sm:$0xff]
        %v354 = vld [vmem:[%s233 + $0x368] sm:$0xff]
        %v355 = vld [vmem:[%s233 + $0x370] sm:$0xff]
        %v356 = vld [vmem:[%s233 + $0x378] sm:$0xff]
        %v357 = vld [vmem:[%s233 + $0x380] sm:$0xff]
        %v358 = vld [vmem:[%s233 + $0x388] sm:$0xff]
        %v359 = vld [vmem:[%s233 + $0x390] sm:$0xff]
        %v360 = vld [vmem:[%s233 + $0x398] sm:$0xff]
        %v361 = vld [vmem:[%s233 + $0x3a0] sm:$0xff]
        %v362 = vld [vmem:[%s233 + $0x3a8] sm:$0xff]
        %v363 = vld [vmem:[%s233 + $0x3b0] sm:$0xff]
        %v364 = vld [vmem:[%s233 + $0x3b8] sm:$0xff]
        %v365 = vld [vmem:[%s233 + $0x3c0] sm:$0xff]
        %v366 = vld [vmem:[%s233 + $0x3c8] sm:$0xff]
        %v367 = vld [vmem:[%s233 + $0x3d0] sm:$0xff]
        %v368 = vld [vmem:[%s233 + $0x3d8] sm:$0xff]
        %v369 = vld [vmem:[%s233 + $0x3e0] sm:$0xff]
        %v370 = vld [vmem:[%s233 + $0x3e8] sm:$0xff]
        %v371 = vld [vmem:[%s233 + $0x3f0] sm:$0xff]
        %v372 = vld [vmem:[%s233 + $0x3f8] sm:$0xff]
        %v373 = vld [vmem:[%s233 + $0x400] sm:$0xff]
        %v374 = vld [vmem:[%s233 + $0x408] sm:$0xff]
        %v375 = vld [vmem:[%s233 + $0x410] sm:$0xff]
        %v376 = vld [vmem:[%s233 + $0x418] sm:$0xff]
        %v377 = vld [vmem:[%s233 + $0x420] sm:$0xff]
        %v378 = vld [vmem:[%s233 + $0x428] sm:$0xff]
        %v379 = vld [vmem:[%s233 + $0x430] sm:$0xff]
        %v380 = vld [vmem:[%s233 + $0x438] sm:$0xff]
        %v381 = vld [vmem:[%s233 + $0x440] sm:$0xff]
        %v382 = vld [vmem:[%s233 + $0x448] sm:$0xff]
        %v383 = vld [vmem:[%s233 + $0x450] sm:$0xff]
        %v384 = vld [vmem:[%s233 + $0x458] sm:$0xff]
        %v385 = vld [vmem:[%s233 + $0x460] sm:$0xff]
        %v386 = vld [vmem:[%s233 + $0x468] sm:$0xff]
        %v387 = vld [vmem:[%s233 + $0x470] sm:$0xff]
        %v388 = vld [vmem:[%s233 + $0x478] sm:$0xff]
        %v389 = vld [vmem:[%s233 + $0x480] sm:$0xff]
        %v390 = vld [vmem:[%s233 + $0x488] sm:$0xff]
        %v391 = vld [vmem:[%s233 + $0x490] sm:$0xff]
        %v392 = vld [vmem:[%s233 + $0x498] sm:$0xff]
        %v393 = vld [vmem:[%s233 + $0x4a0] sm:$0xff]
        %v394 = vld [vmem:[%s233 + $0x4a8] sm:$0xff]
        %v395 = vld [vmem:[%s233 + $0x4b0] sm:$0xff]
        %v396 = vld [vmem:[%s233 + $0x4b8] sm:$0xff]
        %v397 = vld [vmem:[%s233 + $0x4c0] sm:$0xff]
        %v398 = vld [vmem:[%s233 + $0x4c8] sm:$0xff]
        %v399 = vld [vmem:[%s233 + $0x4d0] sm:$0xff]
        %v400 = vld [vmem:[%s233 + $0x4d8] sm:$0xff]
        %v401 = vld [vmem:[%s233 + $0x4e0] sm:$0xff]
        %v402 = vld [vmem:[%s233 + $0x4e8] sm:$0xff]
        %v403 = vld [vmem:[%s233 + $0x4f0] sm:$0xff]
        %v404 = vld [vmem:[%s233 + $0x4f8] sm:$0xff]
        %v405 = vld [vmem:[%s233 + $0x500] sm:$0xff]
        %v406 = vld [vmem:[%s233 + $0x508] sm:$0xff]
        %v407 = vld [vmem:[%s233 + $0x510] sm:$0xff]
        %v408 = vld [vmem:[%s233 + $0x518] sm:$0xff]
        %v409 = vld [vmem:[%s233 + $0x520] sm:$0xff]
        %v410 = vld [vmem:[%s233 + $0x528] sm:$0xff]
        %v411 = vld [vmem:[%s233 + $0x530] sm:$0xff]
        %v412 = vld [vmem:[%s233 + $0x538] sm:$0xff]
        %v413 = vld [vmem:[%s233 + $0x540] sm:$0xff]
        %v414 = vld [vmem:[%s233 + $0x548] sm:$0xff]
        %v415 = vld [vmem:[%s233 + $0x550] sm:$0xff]
        %v416 = vld [vmem:[%s233 + $0x558] sm:$0xff]
        %v417 = vld [vmem:[%s233 + $0x560] sm:$0xff]
        %v418 = vld [vmem:[%s233 + $0x568] sm:$0xff]
        %v419 = vld [vmem:[%s233 + $0x570] sm:$0xff]
        %v420 = vld [vmem:[%s233 + $0x578] sm:$0xff]
        %v421 = vld [vmem:[%s233 + $0x580] sm:$0xff]
        %v422 = vld [vmem:[%s233 + $0x588] sm:$0xff]
        %v423 = vld [vmem:[%s233 + $0x590] sm:$0xff]
        %v424 = vld [vmem:[%s233 + $0x598] sm:$0xff]
        %v425 = vld [vmem:[%s233 + $0x5a0] sm:$0xff]
        %v426 = vld [vmem:[%s233 + $0x5a8] sm:$0xff]
        %v427 = vld [vmem:[%s233 + $0x5b0] sm:$0xff]
        %v428 = vld [vmem:[%s233 + $0x5b8] sm:$0xff]
        %v429 = vld [vmem:[%s233 + $0x5c0] sm:$0xff]
        %v430 = vld [vmem:[%s233 + $0x5c8] sm:$0xff]
        %v431 = vld [vmem:[%s233 + $0x5d0] sm:$0xff]
        %v432 = vld [vmem:[%s233 + $0x5d8] sm:$0xff]
        %v433 = vld [vmem:[%s233 + $0x5e0] sm:$0xff]
        %v434 = vld [vmem:[%s233 + $0x5e8] sm:$0xff]
        %v435 = vld [vmem:[%s233 + $0x5f0] sm:$0xff]
        %v436 = vld [vmem:[%s233 + $0x5f8] sm:$0xff]
        %v437 = vld [vmem:[%s233 + $0x600] sm:$0xff]
        %v438 = vld [vmem:[%s233 + $0x608] sm:$0xff]
        %v439 = vld [vmem:[%s233 + $0x610] sm:$0xff]
        %v440 = vld [vmem:[%s233 + $0x618] sm:$0xff]
        %v441 = vld [vmem:[%s233 + $0x620] sm:$0xff]
        %v442 = vld [vmem:[%s233 + $0x628] sm:$0xff]
        %v443 = vld [vmem:[%s233 + $0x630] sm:$0xff]
        %v444 = vld [vmem:[%s233 + $0x638] sm:$0xff]
        %v445 = vld [vmem:[%s233 + $0x640] sm:$0xff]
        %v446 = vld [vmem:[%s233 + $0x648] sm:$0xff]
        %v447 = vld [vmem:[%s233 + $0x650] sm:$0xff]
        %v448 = vld [vmem:[%s233 + $0x658] sm:$0xff]
        %v449 = vld [vmem:[%s233 + $0x660] sm:$0xff]
        %v450 = vld [vmem:[%s233 + $0x668] sm:$0xff]
        %v451 = vld [vmem:[%s233 + $0x670] sm:$0xff]
        %v452 = vld [vmem:[%s233 + $0x678] sm:$0xff]
        %v453 = vld [vmem:[%s233 + $0x680] sm:$0xff]
        %v454 = vld [vmem:[%s233 + $0x688] sm:$0xff]
        %v455 = vld [vmem:[%s233 + $0x690] sm:$0xff]
        %v456 = vld [vmem:[%s233 + $0x698] sm:$0xff]
        %v457 = vld [vmem:[%s233 + $0x6a0] sm:$0xff]
        %v458 = vld [vmem:[%s233 + $0x6a8] sm:$0xff]
        %v459 = vld [vmem:[%s233 + $0x6b0] sm:$0xff]
        %v460 = vld [vmem:[%s233 + $0x6b8] sm:$0xff]
        %v461 = vld [vmem:[%s233 + $0x6c0] sm:$0xff]
        %v462 = vld [vmem:[%s233 + $0x6c8] sm:$0xff]
        %v463 = vld [vmem:[%s233 + $0x6d0] sm:$0xff]
        %v464 = vld [vmem:[%s233 + $0x6d8] sm:$0xff]
        %v465 = vld [vmem:[%s233 + $0x6e0] sm:$0xff]
        %v466 = vld [vmem:[%s233 + $0x6e8] sm:$0xff]
        %v467 = vld [vmem:[%s233 + $0x6f0] sm:$0xff]
        %v468 = vld [vmem:[%s233 + $0x6f8] sm:$0xff]
        %v469 = vld [vmem:[%s233 + $0x700] sm:$0xff]
        %v470 = vld [vmem:[%s233 + $0x708] sm:$0xff]
        %v471 = vld [vmem:[%s233 + $0x710] sm:$0xff]
        %v472 = vld [vmem:[%s233 + $0x718] sm:$0xff]
        %v473 = vld [vmem:[%s233 + $0x720] sm:$0xff]
        %v474 = vld [vmem:[%s233 + $0x728] sm:$0xff]
        %v475 = vld [vmem:[%s233 + $0x730] sm:$0xff]
        %v476 = vld [vmem:[%s233 + $0x738] sm:$0xff]
        %v477 = vld [vmem:[%s233 + $0x740] sm:$0xff]
        %v478 = vld [vmem:[%s233 + $0x748] sm:$0xff]
        %v479 = vld [vmem:[%s233 + $0x750] sm:$0xff]
        %v480 = vld [vmem:[%s233 + $0x758] sm:$0xff]
        %v481 = vld [vmem:[%s233 + $0x760] sm:$0xff]
        %v482 = vld [vmem:[%s233 + $0x768] sm:$0xff]
        %v483 = vld [vmem:[%s233 + $0x770] sm:$0xff]
        %v484 = vld [vmem:[%s233 + $0x778] sm:$0xff]
        %v485 = vld [vmem:[%s233 + $0x780] sm:$0xff]
        %v486 = vld [vmem:[%s233 + $0x788] sm:$0xff]
        %v487 = vld [vmem:[%s233 + $0x790] sm:$0xff]
        %v488 = vld [vmem:[%s233 + $0x798] sm:$0xff]
        %v489 = vld [vmem:[%s233 + $0x7a0] sm:$0xff]
        %v490 = vld [vmem:[%s233 + $0x7a8] sm:$0xff]
        %v491 = vld [vmem:[%s233 + $0x7b0] sm:$0xff]
        %v492 = vld [vmem:[%s233 + $0x7b8] sm:$0xff]
        %v493 = vld [vmem:[%s233 + $0x7c0] sm:$0xff]
        %v494 = vld [vmem:[%s233 + $0x7c8] sm:$0xff]
        %v495 = vld [vmem:[%s233 + $0x7d0] sm:$0xff]
        %v496 = vld [vmem:[%s233 + $0x7d8] sm:$0xff]
        %v497 = vld [vmem:[%s233 + $0x7e0] sm:$0xff]
        %v498 = vld [vmem:[%s233 + $0x7e8] sm:$0xff]
        %v499 = vld [vmem:[%s233 + $0x7f0] sm:$0xff]
        %v500 = vld [vmem:[%s233 + $0x7f8] sm:$0xff]
        %v501 = vld [vmem:[%s233 + $0x800] sm:$0xff]
        %v502 = vld [vmem:[%s233 + $0x808] sm:$0xff]
        %v503 = vld [vmem:[%s233 + $0x810] sm:$0xff]
        %v504 = vld [vmem:[%s233 + $0x818] sm:$0xff]
        %v505 = vld [vmem:[%s233 + $0x820] sm:$0xff]
        %v506 = vld [vmem:[%s233 + $0x828] sm:$0xff]
        %v507 = vld [vmem:[%s233 + $0x830] sm:$0xff]
        %v508 = vld [vmem:[%s233 + $0x838] sm:$0xff]
        %v509 = vld [vmem:[%s233 + $0x840] sm:$0xff]
        %v510 = vld [vmem:[%s233 + $0x848] sm:$0xff]
        %v511 = vld [vmem:[%s233 + $0x850] sm:$0xff]
        %v512 = vld [vmem:[%s233 + $0x858] sm:$0xff]
        %v513 = vld [vmem:[%s233 + $0x860] sm:$0xff]
        %v514 = vld [vmem:[%s233 + $0x868] sm:$0xff]
        %v515 = vld [vmem:[%s233 + $0x870] sm:$0xff]
        %v516 = vld [vmem:[%s233 + $0x878] sm:$0xff]
        %v517 = vld [vmem:[%s233 + $0x880] sm:$0xff]
        %v518 = vld [vmem:[%s233 + $0x888] sm:$0xff]
        %v519 = vld [vmem:[%s233 + $0x890] sm:$0xff]
        %v520 = vld [vmem:[%s233 + $0x898] sm:$0xff]
        %v521 = vld [vmem:[%s233 + $0x8a0] sm:$0xff]
        %v522 = vld [vmem:[%s233 + $0x8a8] sm:$0xff]
        %v523 = vld [vmem:[%s233 + $0x8b0] sm:$0xff]
        %v524 = vld [vmem:[%s233 + $0x8b8] sm:$0xff]
        %v525 = vld [vmem:[%s233 + $0x8c0] sm:$0xff]
        %v526 = vld [vmem:[%s233 + $0x8c8] sm:$0xff]
        %v527 = vld [vmem:[%s233 + $0x8d0] sm:$0xff]
        %v528 = vld [vmem:[%s233 + $0x8d8] sm:$0xff]
        %v529 = vld [vmem:[%s233 + $0x8e0] sm:$0xff]
        %v530 = vld [vmem:[%s233 + $0x8e8] sm:$0xff]
        %v531 = vld [vmem:[%s233 + $0x8f0] sm:$0xff]
        %v532 = vld [vmem:[%s233 + $0x8f8] sm:$0xff]
        %v533 = vld [vmem:[%s233 + $0x900] sm:$0xff]
        %v534 = vld [vmem:[%s233 + $0x908] sm:$0xff]
        %v535 = vld [vmem:[%s233 + $0x910] sm:$0xff]
        %v536 = vld [vmem:[%s233 + $0x918] sm:$0xff]
        %v537 = vld [vmem:[%s233 + $0x920] sm:$0xff]
        %v538 = vld [vmem:[%s233 + $0x928] sm:$0xff]
        %v539 = vld [vmem:[%s233 + $0x930] sm:$0xff]
        %v540 = vld [vmem:[%s233 + $0x938] sm:$0xff]
        %v541 = vld [vmem:[%s233 + $0x940] sm:$0xff]
        %v542 = vld [vmem:[%s233 + $0x948] sm:$0xff]
        %v543 = vld [vmem:[%s233 + $0x950] sm:$0xff]
        %v544 = vld [vmem:[%s233 + $0x958] sm:$0xff]
        %v545 = vld [vmem:[%s233 + $0x960] sm:$0xff]
        %v546 = vld [vmem:[%s233 + $0x968] sm:$0xff]
        %v547 = vld [vmem:[%s233 + $0x970] sm:$0xff]
        %v548 = vld [vmem:[%s233 + $0x978] sm:$0xff]
        %v549 = vld [vmem:[%s233 + $0x980] sm:$0xff]
        %v550 = vld [vmem:[%s233 + $0x988] sm:$0xff]
        %v551 = vld [vmem:[%s233 + $0x990] sm:$0xff]
        %v552 = vld [vmem:[%s233 + $0x998] sm:$0xff]
        %v553 = vld [vmem:[%s233 + $0x9a0] sm:$0xff]
        %v554 = vld [vmem:[%s233 + $0x9a8] sm:$0xff]
        %v555 = vld [vmem:[%s233 + $0x9b0] sm:$0xff]
        %v556 = vld [vmem:[%s233 + $0x9b8] sm:$0xff]
        %v557 = vld [vmem:[%s233 + $0x9c0] sm:$0xff]
        %v558 = vld [vmem:[%s233 + $0x9c8] sm:$0xff]
        %v559 = vld [vmem:[%s233 + $0x9d0] sm:$0xff]
        %v560 = vld [vmem:[%s233 + $0x9d8] sm:$0xff]
        %v561 = vld [vmem:[%s233 + $0x9e0] sm:$0xff]
        %v562 = vld [vmem:[%s233 + $0x9e8] sm:$0xff]
        %v563 = vld [vmem:[%s233 + $0x9f0] sm:$0xff]
        %v564 = vld [vmem:[%s233 + $0x9f8] sm:$0xff]
        %v566 = vcombine.high %v244, %v244
        %v568 = vunpack.c.l.s4 1966171168
        %v569 = vunpack.c.0.s8 %v568
        %v570 = vlaneseq
        %v571 = vshrl.u32 %v570, 7
        %v572 = vsub.s32 %v569, %v571
        %v573 = vrot.slane %v244, %v572
        %v575 = vunpack.c.l.s4 1966171168
        %v576 = vunpack.c.0.s8 %v575
        %v577 = vlaneseq
        %v578 = vshrl.u32 %v577, 7
        %v579 = vsub.s32 %v576, %v578
        %v580 = vrot.slane %v566, %v579
        %v581 = vcombine.high %v573, %v573
        %v583 = vunpack.c.l.s4 1966171168
        %v584 = vunpack.c.0.s8 %v583
        %v585 = vlaneseq
        %v586 = vshrl.u32 %v585, 7
        %v587 = vsub.s32 %v584, %v586
        %v588 = vrot.slane %v573, %v587
        %v590 = vunpack.c.l.s4 1966171168
        %v591 = vunpack.c.0.s8 %v590
        %v592 = vlaneseq
        %v593 = vshrl.u32 %v592, 7
        %v594 = vsub.s32 %v591, %v593
        %v595 = vrot.slane %v580, %v594
        %v597 = vunpack.c.l.s4 1966171168
        %v598 = vunpack.c.0.s8 %v597
        %v599 = vlaneseq
        %v600 = vshrl.u32 %v599, 7
        %v601 = vsub.s32 %v598, %v600
        %v602 = vrot.slane %v581, %v601
        %v603 = vcombine.high %v588, %v588
        %v604 = vcombine.high %v602, %v602
        %v930 = vunpack.c.l.b16 %v245
        %v931 = vunpack.c.h.b16 %v245
        %v932 = vunpack.c.l.b16 %v246
        %v933 = vunpack.c.h.b16 %v246
        %v934 = vunpack.c.l.b16 %v247
        %v935 = vunpack.c.h.b16 %v247
        %v936 = vunpack.c.l.b16 %v248
        %v937 = vunpack.c.h.b16 %v248
        %v938 = vunpack.c.l.b16 %v249
        %v939 = vunpack.c.h.b16 %v249
        %v940 = vunpack.c.l.b16 %v250
        %v941 = vunpack.c.h.b16 %v250
        %v942 = vunpack.c.l.b16 %v251
        %v943 = vunpack.c.h.b16 %v251
        %v944 = vunpack.c.l.b16 %v252
        %v945 = vunpack.c.h.b16 %v252
        %v946 = vunpack.c.l.b16 %v253
        %v947 = vunpack.c.h.b16 %v253
        %v948 = vunpack.c.l.b16 %v254
        %v949 = vunpack.c.h.b16 %v254
        %v950 = vunpack.c.l.b16 %v255
        %v951 = vunpack.c.h.b16 %v255
        %v952 = vunpack.c.l.b16 %v256
        %v953 = vunpack.c.h.b16 %v256
        %v954 = vunpack.c.l.b16 %v257
        %v955 = vunpack.c.h.b16 %v257
        %v956 = vunpack.c.l.b16 %v258
        %v957 = vunpack.c.h.b16 %v258
        %v958 = vunpack.c.l.b16 %v259
        %v959 = vunpack.c.h.b16 %v259
        %v960 = vunpack.c.l.b16 %v260
        %v961 = vunpack.c.h.b16 %v260
        %v962 = vunpack.c.l.b16 %v261
        %v963 = vunpack.c.h.b16 %v261
        %v964 = vunpack.c.l.b16 %v262
        %v965 = vunpack.c.h.b16 %v262
        %v966 = vunpack.c.l.b16 %v263
        %v967 = vunpack.c.h.b16 %v263
        %v968 = vunpack.c.l.b16 %v264
        %v969 = vunpack.c.h.b16 %v264
        %v970 = vunpack.c.l.b16 %v265
        %v971 = vunpack.c.h.b16 %v265
        %v972 = vunpack.c.l.b16 %v266
        %v973 = vunpack.c.h.b16 %v266
        %v974 = vunpack.c.l.b16 %v267
        %v975 = vunpack.c.h.b16 %v267
        %v976 = vunpack.c.l.b16 %v268
        %v977 = vunpack.c.h.b16 %v268
        %v978 = vunpack.c.l.b16 %v269
        %v979 = vunpack.c.h.b16 %v269
        %v980 = vunpack.c.l.b16 %v270
        %v981 = vunpack.c.h.b16 %v270
        %v982 = vunpack.c.l.b16 %v271
        %v983 = vunpack.c.h.b16 %v271
        %v984 = vunpack.c.l.b16 %v272
        %v985 = vunpack.c.h.b16 %v272
        %v986 = vunpack.c.l.b16 %v273
        %v987 = vunpack.c.h.b16 %v273
        %v988 = vunpack.c.l.b16 %v274
        %v989 = vunpack.c.h.b16 %v274
        %v990 = vunpack.c.l.b16 %v275
        %v991 = vunpack.c.h.b16 %v275
        %v992 = vunpack.c.l.b16 %v276
        %v993 = vunpack.c.h.b16 %v276
        %v994 = vunpack.c.l.b16 %v277
        %v995 = vunpack.c.h.b16 %v277
        %v996 = vunpack.c.l.b16 %v278
        %v997 = vunpack.c.h.b16 %v278
        %v998 = vunpack.c.l.b16 %v279
        %v999 = vunpack.c.h.b16 %v279
        %v1000 = vunpack.c.l.b16 %v280
        %v1001 = vunpack.c.h.b16 %v280
        %v1002 = vunpack.c.l.b16 %v281
        %v1003 = vunpack.c.h.b16 %v281
        %v1004 = vunpack.c.l.b16 %v282
        %v1005 = vunpack.c.h.b16 %v282
        %v1006 = vunpack.c.l.b16 %v283
        %v1007 = vunpack.c.h.b16 %v283
        %v1008 = vunpack.c.l.b16 %v284
        %v1009 = vunpack.c.h.b16 %v284
        %v1010 = vunpack.c.l.b16 %v285
        %v1011 = vunpack.c.h.b16 %v285
        %v1012 = vunpack.c.l.b16 %v286
        %v1013 = vunpack.c.h.b16 %v286
        %v1014 = vunpack.c.l.b16 %v287
        %v1015 = vunpack.c.h.b16 %v287
        %v1016 = vunpack.c.l.b16 %v288
        %v1017 = vunpack.c.h.b16 %v288
        %v1018 = vunpack.c.l.b16 %v289
        %v1019 = vunpack.c.h.b16 %v289
        %v1020 = vunpack.c.l.b16 %v290
        %v1021 = vunpack.c.h.b16 %v290
        %v1022 = vunpack.c.l.b16 %v291
        %v1023 = vunpack.c.h.b16 %v291
        %v1024 = vunpack.c.l.b16 %v292
        %v1025 = vunpack.c.h.b16 %v292
        %v1026 = vunpack.c.l.b16 %v293
        %v1027 = vunpack.c.h.b16 %v293
        %v1028 = vunpack.c.l.b16 %v294
        %v1029 = vunpack.c.h.b16 %v294
        %v1030 = vunpack.c.l.b16 %v295
        %v1031 = vunpack.c.h.b16 %v295
        %v1032 = vunpack.c.l.b16 %v296
        %v1033 = vunpack.c.h.b16 %v296
        %v1034 = vunpack.c.l.b16 %v297
        %v1035 = vunpack.c.h.b16 %v297
        %v1036 = vunpack.c.l.b16 %v298
        %v1037 = vunpack.c.h.b16 %v298
        %v1038 = vunpack.c.l.b16 %v299
        %v1039 = vunpack.c.h.b16 %v299
        %v1040 = vunpack.c.l.b16 %v300
        %v1041 = vunpack.c.h.b16 %v300
        %v1042 = vunpack.c.l.b16 %v301
        %v1043 = vunpack.c.h.b16 %v301
        %v1044 = vunpack.c.l.b16 %v302
        %v1045 = vunpack.c.h.b16 %v302
        %v1046 = vunpack.c.l.b16 %v303
        %v1047 = vunpack.c.h.b16 %v303
        %v1048 = vunpack.c.l.b16 %v304
        %v1049 = vunpack.c.h.b16 %v304
        %v1050 = vunpack.c.l.b16 %v305
        %v1051 = vunpack.c.h.b16 %v305
        %v1052 = vunpack.c.l.b16 %v306
        %v1053 = vunpack.c.h.b16 %v306
        %v1054 = vunpack.c.l.b16 %v307
        %v1055 = vunpack.c.h.b16 %v307
        %v1056 = vunpack.c.l.b16 %v308
        %v1057 = vunpack.c.h.b16 %v308
        %v1058 = vunpack.c.l.b16 %v309
        %v1059 = vunpack.c.h.b16 %v309
        %v1060 = vunpack.c.l.b16 %v310
        %v1061 = vunpack.c.h.b16 %v310
        %v1062 = vunpack.c.l.b16 %v311
        %v1063 = vunpack.c.h.b16 %v311
        %v1064 = vunpack.c.l.b16 %v312
        %v1065 = vunpack.c.h.b16 %v312
        %v1066 = vunpack.c.l.b16 %v313
        %v1067 = vunpack.c.h.b16 %v313
        %v1068 = vunpack.c.l.b16 %v314
        %v1069 = vunpack.c.h.b16 %v314
        %v1070 = vunpack.c.l.b16 %v315
        %v1071 = vunpack.c.h.b16 %v315
        %v1072 = vunpack.c.l.b16 %v316
        %v1073 = vunpack.c.h.b16 %v316
        %v1074 = vunpack.c.l.b16 %v317
        %v1075 = vunpack.c.h.b16 %v317
        %v1076 = vunpack.c.l.b16 %v318
        %v1077 = vunpack.c.h.b16 %v318
        %v1078 = vunpack.c.l.b16 %v319
        %v1079 = vunpack.c.h.b16 %v319
        %v1080 = vunpack.c.l.b16 %v320
        %v1081 = vunpack.c.h.b16 %v320
        %v1082 = vunpack.c.l.b16 %v321
        %v1083 = vunpack.c.h.b16 %v321
        %v1084 = vunpack.c.l.b16 %v322
        %v1085 = vunpack.c.h.b16 %v322
        %v1086 = vunpack.c.l.b16 %v323
        %v1087 = vunpack.c.h.b16 %v323
        %v1088 = vunpack.c.l.b16 %v324
        %v1089 = vunpack.c.h.b16 %v324
        %v1090 = vunpack.c.l.b16 %v325
        %v1091 = vunpack.c.h.b16 %v325
        %v1092 = vunpack.c.l.b16 %v326
        %v1093 = vunpack.c.h.b16 %v326
        %v1094 = vunpack.c.l.b16 %v327
        %v1095 = vunpack.c.h.b16 %v327
        %v1096 = vunpack.c.l.b16 %v328
        %v1097 = vunpack.c.h.b16 %v328
        %v1098 = vunpack.c.l.b16 %v329
        %v1099 = vunpack.c.h.b16 %v329
        %v1100 = vunpack.c.l.b16 %v330
        %v1101 = vunpack.c.h.b16 %v330
        %v1102 = vunpack.c.l.b16 %v331
        %v1103 = vunpack.c.h.b16 %v331
        %v1104 = vunpack.c.l.b16 %v332
        %v1105 = vunpack.c.h.b16 %v332
        %v1106 = vunpack.c.l.b16 %v333
        %v1107 = vunpack.c.h.b16 %v333
        %v1108 = vunpack.c.l.b16 %v334
        %v1109 = vunpack.c.h.b16 %v334
        %v1110 = vunpack.c.l.b16 %v335
        %v1111 = vunpack.c.h.b16 %v335
        %v1112 = vunpack.c.l.b16 %v336
        %v1113 = vunpack.c.h.b16 %v336
        %v1114 = vunpack.c.l.b16 %v337
        %v1115 = vunpack.c.h.b16 %v337
        %v1116 = vunpack.c.l.b16 %v338
        %v1117 = vunpack.c.h.b16 %v338
        %v1118 = vunpack.c.l.b16 %v339
        %v1119 = vunpack.c.h.b16 %v339
        %v1120 = vunpack.c.l.b16 %v340
        %v1121 = vunpack.c.h.b16 %v340
        %v1122 = vunpack.c.l.b16 %v341
        %v1123 = vunpack.c.h.b16 %v341
        %v1124 = vunpack.c.l.b16 %v342
        %v1125 = vunpack.c.h.b16 %v342
        %v1126 = vunpack.c.l.b16 %v343
        %v1127 = vunpack.c.h.b16 %v343
        %v1128 = vunpack.c.l.b16 %v344
        %v1129 = vunpack.c.h.b16 %v344
        %v1130 = vunpack.c.l.b16 %v345
        %v1131 = vunpack.c.h.b16 %v345
        %v1132 = vunpack.c.l.b16 %v346
        %v1133 = vunpack.c.h.b16 %v346
        %v1134 = vunpack.c.l.b16 %v347
        %v1135 = vunpack.c.h.b16 %v347
        %v1136 = vunpack.c.l.b16 %v348
        %v1137 = vunpack.c.h.b16 %v348
        %v1138 = vunpack.c.l.b16 %v349
        %v1139 = vunpack.c.h.b16 %v349
        %v1140 = vunpack.c.l.b16 %v350
        %v1141 = vunpack.c.h.b16 %v350
        %v1142 = vunpack.c.l.b16 %v351
        %v1143 = vunpack.c.h.b16 %v351
        %v1144 = vunpack.c.l.b16 %v352
        %v1145 = vunpack.c.h.b16 %v352
        %v1146 = vunpack.c.l.b16 %v353
        %v1147 = vunpack.c.h.b16 %v353
        %v1148 = vunpack.c.l.b16 %v354
        %v1149 = vunpack.c.h.b16 %v354
        %v1150 = vunpack.c.l.b16 %v355
        %v1151 = vunpack.c.h.b16 %v355
        %v1152 = vunpack.c.l.b16 %v356
        %v1153 = vunpack.c.h.b16 %v356
        %v1154 = vunpack.c.l.b16 %v357
        %v1155 = vunpack.c.h.b16 %v357
        %v1156 = vunpack.c.l.b16 %v358
        %v1157 = vunpack.c.h.b16 %v358
        %v1158 = vunpack.c.l.b16 %v359
        %v1159 = vunpack.c.h.b16 %v359
        %v1160 = vunpack.c.l.b16 %v360
        %v1161 = vunpack.c.h.b16 %v360
        %v1162 = vunpack.c.l.b16 %v361
        %v1163 = vunpack.c.h.b16 %v361
        %v1164 = vunpack.c.l.b16 %v362
        %v1165 = vunpack.c.h.b16 %v362
        %v1166 = vunpack.c.l.b16 %v363
        %v1167 = vunpack.c.h.b16 %v363
        %v1168 = vunpack.c.l.b16 %v364
        %v1169 = vunpack.c.h.b16 %v364
        %v1170 = vunpack.c.l.b16 %v365
        %v1171 = vunpack.c.h.b16 %v365
        %v1172 = vunpack.c.l.b16 %v366
        %v1173 = vunpack.c.h.b16 %v366
        %v1174 = vunpack.c.l.b16 %v367
        %v1175 = vunpack.c.h.b16 %v367
        %v1176 = vunpack.c.l.b16 %v368
        %v1177 = vunpack.c.h.b16 %v368
        %v1178 = vunpack.c.l.b16 %v369
        %v1179 = vunpack.c.h.b16 %v369
        %v1180 = vunpack.c.l.b16 %v370
        %v1181 = vunpack.c.h.b16 %v370
        %v1182 = vunpack.c.l.b16 %v371
        %v1183 = vunpack.c.h.b16 %v371
        %v1184 = vunpack.c.l.b16 %v372
        %v1185 = vunpack.c.h.b16 %v372
        %v1186 = vunpack.c.l.b16 %v373
        %v1187 = vunpack.c.h.b16 %v373
        %v1188 = vunpack.c.l.b16 %v374
        %v1189 = vunpack.c.h.b16 %v374
        %v1190 = vunpack.c.l.b16 %v375
        %v1191 = vunpack.c.h.b16 %v375
        %v1192 = vunpack.c.l.b16 %v376
        %v1193 = vunpack.c.h.b16 %v376
        %v1194 = vunpack.c.l.b16 %v377
        %v1195 = vunpack.c.h.b16 %v377
        %v1196 = vunpack.c.l.b16 %v378
        %v1197 = vunpack.c.h.b16 %v378
        %v1198 = vunpack.c.l.b16 %v379
        %v1199 = vunpack.c.h.b16 %v379
        %v1200 = vunpack.c.l.b16 %v380
        %v1201 = vunpack.c.h.b16 %v380
        %v1202 = vunpack.c.l.b16 %v381
        %v1203 = vunpack.c.h.b16 %v381
        %v1204 = vunpack.c.l.b16 %v382
        %v1205 = vunpack.c.h.b16 %v382
        %v1206 = vunpack.c.l.b16 %v383
        %v1207 = vunpack.c.h.b16 %v383
        %v1208 = vunpack.c.l.b16 %v384
        %v1209 = vunpack.c.h.b16 %v384
        %v1210 = vunpack.c.l.b16 %v385
        %v1211 = vunpack.c.h.b16 %v385
        %v1212 = vunpack.c.l.b16 %v386
        %v1213 = vunpack.c.h.b16 %v386
        %v1214 = vunpack.c.l.b16 %v387
        %v1215 = vunpack.c.h.b16 %v387
        %v1216 = vunpack.c.l.b16 %v388
        %v1217 = vunpack.c.h.b16 %v388
        %v1218 = vunpack.c.l.b16 %v389
        %v1219 = vunpack.c.h.b16 %v389
        %v1220 = vunpack.c.l.b16 %v390
        %v1221 = vunpack.c.h.b16 %v390
        %v1222 = vunpack.c.l.b16 %v391
        %v1223 = vunpack.c.h.b16 %v391
        %v1224 = vunpack.c.l.b16 %v392
        %v1225 = vunpack.c.h.b16 %v392
        %v1226 = vunpack.c.l.b16 %v393
        %v1227 = vunpack.c.h.b16 %v393
        %v1228 = vunpack.c.l.b16 %v394
        %v1229 = vunpack.c.h.b16 %v394
        %v1230 = vunpack.c.l.b16 %v395
        %v1231 = vunpack.c.h.b16 %v395
        %v1232 = vunpack.c.l.b16 %v396
        %v1233 = vunpack.c.h.b16 %v396
        %v1234 = vunpack.c.l.b16 %v397
        %v1235 = vunpack.c.h.b16 %v397
        %v1236 = vunpack.c.l.b16 %v398
        %v1237 = vunpack.c.h.b16 %v398
        %v1238 = vunpack.c.l.b16 %v399
        %v1239 = vunpack.c.h.b16 %v399
        %v1240 = vunpack.c.l.b16 %v400
        %v1241 = vunpack.c.h.b16 %v400
        %v1242 = vunpack.c.l.b16 %v401
        %v1243 = vunpack.c.h.b16 %v401
        %v1244 = vunpack.c.l.b16 %v402
        %v1245 = vunpack.c.h.b16 %v402
        %v1246 = vunpack.c.l.b16 %v403
        %v1247 = vunpack.c.h.b16 %v403
        %v1248 = vunpack.c.l.b16 %v404
        %v1249 = vunpack.c.h.b16 %v404
        %v1250 = vunpack.c.l.b16 %v405
        %v1251 = vunpack.c.h.b16 %v405
        %v1252 = vunpack.c.l.b16 %v406
        %v1253 = vunpack.c.h.b16 %v406
        %v1254 = vunpack.c.l.b16 %v407
        %v1255 = vunpack.c.h.b16 %v407
        %v1256 = vunpack.c.l.b16 %v408
        %v1257 = vunpack.c.h.b16 %v408
        %v1258 = vunpack.c.l.b16 %v409
        %v1259 = vunpack.c.h.b16 %v409
        %v1260 = vunpack.c.l.b16 %v410
        %v1261 = vunpack.c.h.b16 %v410
        %v1262 = vunpack.c.l.b16 %v411
        %v1263 = vunpack.c.h.b16 %v411
        %v1264 = vunpack.c.l.b16 %v412
        %v1265 = vunpack.c.h.b16 %v412
        %v1266 = vunpack.c.l.b16 %v413
        %v1267 = vunpack.c.h.b16 %v413
        %v1268 = vunpack.c.l.b16 %v414
        %v1269 = vunpack.c.h.b16 %v414
        %v1270 = vunpack.c.l.b16 %v415
        %v1271 = vunpack.c.h.b16 %v415
        %v1272 = vunpack.c.l.b16 %v416
        %v1273 = vunpack.c.h.b16 %v416
        %v1274 = vunpack.c.l.b16 %v417
        %v1275 = vunpack.c.h.b16 %v417
        %v1276 = vunpack.c.l.b16 %v418
        %v1277 = vunpack.c.h.b16 %v418
        %v1278 = vunpack.c.l.b16 %v419
        %v1279 = vunpack.c.h.b16 %v419
        %v1280 = vunpack.c.l.b16 %v420
        %v1281 = vunpack.c.h.b16 %v420
        %v1282 = vunpack.c.l.b16 %v421
        %v1283 = vunpack.c.h.b16 %v421
        %v1284 = vunpack.c.l.b16 %v422
        %v1285 = vunpack.c.h.b16 %v422
        %v1286 = vunpack.c.l.b16 %v423
        %v1287 = vunpack.c.h.b16 %v423
        %v1288 = vunpack.c.l.b16 %v424
        %v1289 = vunpack.c.h.b16 %v424
        %v1290 = vunpack.c.l.b16 %v425
        %v1291 = vunpack.c.h.b16 %v425
        %v1292 = vunpack.c.l.b16 %v426
        %v1293 = vunpack.c.h.b16 %v426
        %v1294 = vunpack.c.l.b16 %v427
        %v1295 = vunpack.c.h.b16 %v427
        %v1296 = vunpack.c.l.b16 %v428
        %v1297 = vunpack.c.h.b16 %v428
        %v1298 = vunpack.c.l.b16 %v429
        %v1299 = vunpack.c.h.b16 %v429
        %v1300 = vunpack.c.l.b16 %v430
        %v1301 = vunpack.c.h.b16 %v430
        %v1302 = vunpack.c.l.b16 %v431
        %v1303 = vunpack.c.h.b16 %v431
        %v1304 = vunpack.c.l.b16 %v432
        %v1305 = vunpack.c.h.b16 %v432
        %v1306 = vunpack.c.l.b16 %v433
        %v1307 = vunpack.c.h.b16 %v433
        %v1308 = vunpack.c.l.b16 %v434
        %v1309 = vunpack.c.h.b16 %v434
        %v1310 = vunpack.c.l.b16 %v435
        %v1311 = vunpack.c.h.b16 %v435
        %v1312 = vunpack.c.l.b16 %v436
        %v1313 = vunpack.c.h.b16 %v436
        %v1314 = vunpack.c.l.b16 %v437
        %v1315 = vunpack.c.h.b16 %v437
        %v1316 = vunpack.c.l.b16 %v438
        %v1317 = vunpack.c.h.b16 %v438
        %v1318 = vunpack.c.l.b16 %v439
        %v1319 = vunpack.c.h.b16 %v439
        %v1320 = vunpack.c.l.b16 %v440
        %v1321 = vunpack.c.h.b16 %v440
        %v1322 = vunpack.c.l.b16 %v441
        %v1323 = vunpack.c.h.b16 %v441
        %v1324 = vunpack.c.l.b16 %v442
        %v1325 = vunpack.c.h.b16 %v442
        %v1326 = vunpack.c.l.b16 %v443
        %v1327 = vunpack.c.h.b16 %v443
        %v1328 = vunpack.c.l.b16 %v444
        %v1329 = vunpack.c.h.b16 %v444
        %v1330 = vunpack.c.l.b16 %v445
        %v1331 = vunpack.c.h.b16 %v445
        %v1332 = vunpack.c.l.b16 %v446
        %v1333 = vunpack.c.h.b16 %v446
        %v1334 = vunpack.c.l.b16 %v447
        %v1335 = vunpack.c.h.b16 %v447
        %v1336 = vunpack.c.l.b16 %v448
        %v1337 = vunpack.c.h.b16 %v448
        %v1338 = vunpack.c.l.b16 %v449
        %v1339 = vunpack.c.h.b16 %v449
        %v1340 = vunpack.c.l.b16 %v450
        %v1341 = vunpack.c.h.b16 %v450
        %v1342 = vunpack.c.l.b16 %v451
        %v1343 = vunpack.c.h.b16 %v451
        %v1344 = vunpack.c.l.b16 %v452
        %v1345 = vunpack.c.h.b16 %v452
        %v1346 = vunpack.c.l.b16 %v453
        %v1347 = vunpack.c.h.b16 %v453
        %v1348 = vunpack.c.l.b16 %v454
        %v1349 = vunpack.c.h.b16 %v454
        %v1350 = vunpack.c.l.b16 %v455
        %v1351 = vunpack.c.h.b16 %v455
        %v1352 = vunpack.c.l.b16 %v456
        %v1353 = vunpack.c.h.b16 %v456
        %v1354 = vunpack.c.l.b16 %v457
        %v1355 = vunpack.c.h.b16 %v457
        %v1356 = vunpack.c.l.b16 %v458
        %v1357 = vunpack.c.h.b16 %v458
        %v1358 = vunpack.c.l.b16 %v459
        %v1359 = vunpack.c.h.b16 %v459
        %v1360 = vunpack.c.l.b16 %v460
        %v1361 = vunpack.c.h.b16 %v460
        %v1362 = vunpack.c.l.b16 %v461
        %v1363 = vunpack.c.h.b16 %v461
        %v1364 = vunpack.c.l.b16 %v462
        %v1365 = vunpack.c.h.b16 %v462
        %v1366 = vunpack.c.l.b16 %v463
        %v1367 = vunpack.c.h.b16 %v463
        %v1368 = vunpack.c.l.b16 %v464
        %v1369 = vunpack.c.h.b16 %v464
        %v1370 = vunpack.c.l.b16 %v465
        %v1371 = vunpack.c.h.b16 %v465
        %v1372 = vunpack.c.l.b16 %v466
        %v1373 = vunpack.c.h.b16 %v466
        %v1374 = vunpack.c.l.b16 %v467
        %v1375 = vunpack.c.h.b16 %v467
        %v1376 = vunpack.c.l.b16 %v468
        %v1377 = vunpack.c.h.b16 %v468
        %v1378 = vunpack.c.l.b16 %v469
        %v1379 = vunpack.c.h.b16 %v469
        %v1380 = vunpack.c.l.b16 %v470
        %v1381 = vunpack.c.h.b16 %v470
        %v1382 = vunpack.c.l.b16 %v471
        %v1383 = vunpack.c.h.b16 %v471
        %v1384 = vunpack.c.l.b16 %v472
        %v1385 = vunpack.c.h.b16 %v472
        %v1386 = vunpack.c.l.b16 %v473
        %v1387 = vunpack.c.h.b16 %v473
        %v1388 = vunpack.c.l.b16 %v474
        %v1389 = vunpack.c.h.b16 %v474
        %v1390 = vunpack.c.l.b16 %v475
        %v1391 = vunpack.c.h.b16 %v475
        %v1392 = vunpack.c.l.b16 %v476
        %v1393 = vunpack.c.h.b16 %v476
        %v1394 = vunpack.c.l.b16 %v477
        %v1395 = vunpack.c.h.b16 %v477
        %v1396 = vunpack.c.l.b16 %v478
        %v1397 = vunpack.c.h.b16 %v478
        %v1398 = vunpack.c.l.b16 %v479
        %v1399 = vunpack.c.h.b16 %v479
        %v1400 = vunpack.c.l.b16 %v480
        %v1401 = vunpack.c.h.b16 %v480
        %v1402 = vunpack.c.l.b16 %v481
        %v1403 = vunpack.c.h.b16 %v481
        %v1404 = vunpack.c.l.b16 %v482
        %v1405 = vunpack.c.h.b16 %v482
        %v1406 = vunpack.c.l.b16 %v483
        %v1407 = vunpack.c.h.b16 %v483
        %v1408 = vunpack.c.l.b16 %v484
        %v1409 = vunpack.c.h.b16 %v484
        %v1410 = vunpack.c.l.b16 %v485
        %v1411 = vunpack.c.h.b16 %v485
        %v1412 = vunpack.c.l.b16 %v486
        %v1413 = vunpack.c.h.b16 %v486
        %v1414 = vunpack.c.l.b16 %v487
        %v1415 = vunpack.c.h.b16 %v487
        %v1416 = vunpack.c.l.b16 %v488
        %v1417 = vunpack.c.h.b16 %v488
        %v1418 = vunpack.c.l.b16 %v489
        %v1419 = vunpack.c.h.b16 %v489
        %v1420 = vunpack.c.l.b16 %v490
        %v1421 = vunpack.c.h.b16 %v490
        %v1422 = vunpack.c.l.b16 %v491
        %v1423 = vunpack.c.h.b16 %v491
        %v1424 = vunpack.c.l.b16 %v492
        %v1425 = vunpack.c.h.b16 %v492
        %v1426 = vunpack.c.l.b16 %v493
        %v1427 = vunpack.c.h.b16 %v493
        %v1428 = vunpack.c.l.b16 %v494
        %v1429 = vunpack.c.h.b16 %v494
        %v1430 = vunpack.c.l.b16 %v495
        %v1431 = vunpack.c.h.b16 %v495
        %v1432 = vunpack.c.l.b16 %v496
        %v1433 = vunpack.c.h.b16 %v496
        %v1434 = vunpack.c.l.b16 %v497
        %v1435 = vunpack.c.h.b16 %v497
        %v1436 = vunpack.c.l.b16 %v498
        %v1437 = vunpack.c.h.b16 %v498
        %v1438 = vunpack.c.l.b16 %v499
        %v1439 = vunpack.c.h.b16 %v499
        %v1440 = vunpack.c.l.b16 %v500
        %v1441 = vunpack.c.h.b16 %v500
        %v1442 = vunpack.c.l.b16 %v501
        %v1443 = vunpack.c.h.b16 %v501
        %v1444 = vunpack.c.l.b16 %v502
        %v1445 = vunpack.c.h.b16 %v502
        %v1446 = vunpack.c.l.b16 %v503
        %v1447 = vunpack.c.h.b16 %v503
        %v1448 = vunpack.c.l.b16 %v504
        %v1449 = vunpack.c.h.b16 %v504
        %v1450 = vunpack.c.l.b16 %v505
        %v1451 = vunpack.c.h.b16 %v505
        %v1452 = vunpack.c.l.b16 %v506
        %v1453 = vunpack.c.h.b16 %v506
        %v1454 = vunpack.c.l.b16 %v507
        %v1455 = vunpack.c.h.b16 %v507
        %v1456 = vunpack.c.l.b16 %v508
        %v1457 = vunpack.c.h.b16 %v508
        %v1458 = vunpack.c.l.b16 %v509
        %v1459 = vunpack.c.h.b16 %v509
        %v1460 = vunpack.c.l.b16 %v510
        %v1461 = vunpack.c.h.b16 %v510
        %v1462 = vunpack.c.l.b16 %v511
        %v1463 = vunpack.c.h.b16 %v511
        %v1464 = vunpack.c.l.b16 %v512
        %v1465 = vunpack.c.h.b16 %v512
        %v1466 = vunpack.c.l.b16 %v513
        %v1467 = vunpack.c.h.b16 %v513
        %v1468 = vunpack.c.l.b16 %v514
        %v1469 = vunpack.c.h.b16 %v514
        %v1470 = vunpack.c.l.b16 %v515
        %v1471 = vunpack.c.h.b16 %v515
        %v1472 = vunpack.c.l.b16 %v516
        %v1473 = vunpack.c.h.b16 %v516
        %v1474 = vunpack.c.l.b16 %v517
        %v1475 = vunpack.c.h.b16 %v517
        %v1476 = vunpack.c.l.b16 %v518
        %v1477 = vunpack.c.h.b16 %v518
        %v1478 = vunpack.c.l.b16 %v519
        %v1479 = vunpack.c.h.b16 %v519
        %v1480 = vunpack.c.l.b16 %v520
        %v1481 = vunpack.c.h.b16 %v520
        %v1482 = vunpack.c.l.b16 %v521
        %v1483 = vunpack.c.h.b16 %v521
        %v1484 = vunpack.c.l.b16 %v522
        %v1485 = vunpack.c.h.b16 %v522
        %v1486 = vunpack.c.l.b16 %v523
        %v1487 = vunpack.c.h.b16 %v523
        %v1488 = vunpack.c.l.b16 %v524
        %v1489 = vunpack.c.h.b16 %v524
        %v1490 = vunpack.c.l.b16 %v525
        %v1491 = vunpack.c.h.b16 %v525
        %v1492 = vunpack.c.l.b16 %v526
        %v1493 = vunpack.c.h.b16 %v526
        %v1494 = vunpack.c.l.b16 %v527
        %v1495 = vunpack.c.h.b16 %v527
        %v1496 = vunpack.c.l.b16 %v528
        %v1497 = vunpack.c.h.b16 %v528
        %v1498 = vunpack.c.l.b16 %v529
        %v1499 = vunpack.c.h.b16 %v529
        %v1500 = vunpack.c.l.b16 %v530
        %v1501 = vunpack.c.h.b16 %v530
        %v1502 = vunpack.c.l.b16 %v531
        %v1503 = vunpack.c.h.b16 %v531
        %v1504 = vunpack.c.l.b16 %v532
        %v1505 = vunpack.c.h.b16 %v532
        %v1506 = vunpack.c.l.b16 %v533
        %v1507 = vunpack.c.h.b16 %v533
        %v1508 = vunpack.c.l.b16 %v534
        %v1509 = vunpack.c.h.b16 %v534
        %v1510 = vunpack.c.l.b16 %v535
        %v1511 = vunpack.c.h.b16 %v535
        %v1512 = vunpack.c.l.b16 %v536
        %v1513 = vunpack.c.h.b16 %v536
        %v1514 = vunpack.c.l.b16 %v537
        %v1515 = vunpack.c.h.b16 %v537
        %v1516 = vunpack.c.l.b16 %v538
        %v1517 = vunpack.c.h.b16 %v538
        %v1518 = vunpack.c.l.b16 %v539
        %v1519 = vunpack.c.h.b16 %v539
        %v1520 = vunpack.c.l.b16 %v540
        %v1521 = vunpack.c.h.b16 %v540
        %v1522 = vunpack.c.l.b16 %v541
        %v1523 = vunpack.c.h.b16 %v541
        %v1524 = vunpack.c.l.b16 %v542
        %v1525 = vunpack.c.h.b16 %v542
        %v1526 = vunpack.c.l.b16 %v543
        %v1527 = vunpack.c.h.b16 %v543
        %v1528 = vunpack.c.l.b16 %v544
        %v1529 = vunpack.c.h.b16 %v544
        %v1530 = vunpack.c.l.b16 %v545
        %v1531 = vunpack.c.h.b16 %v545
        %v1532 = vunpack.c.l.b16 %v546
        %v1533 = vunpack.c.h.b16 %v546
        %v1534 = vunpack.c.l.b16 %v547
        %v1535 = vunpack.c.h.b16 %v547
        %v1536 = vunpack.c.l.b16 %v548
        %v1537 = vunpack.c.h.b16 %v548
        %v1538 = vunpack.c.l.b16 %v549
        %v1539 = vunpack.c.h.b16 %v549
        %v1540 = vunpack.c.l.b16 %v550
        %v1541 = vunpack.c.h.b16 %v550
        %v1542 = vunpack.c.l.b16 %v551
        %v1543 = vunpack.c.h.b16 %v551
        %v1544 = vunpack.c.l.b16 %v552
        %v1545 = vunpack.c.h.b16 %v552
        %v1546 = vunpack.c.l.b16 %v553
        %v1547 = vunpack.c.h.b16 %v553
        %v1548 = vunpack.c.l.b16 %v554
        %v1549 = vunpack.c.h.b16 %v554
        %v1550 = vunpack.c.l.b16 %v555
        %v1551 = vunpack.c.h.b16 %v555
        %v1552 = vunpack.c.l.b16 %v556
        %v1553 = vunpack.c.h.b16 %v556
        %v1554 = vunpack.c.l.b16 %v557
        %v1555 = vunpack.c.h.b16 %v557
        %v1556 = vunpack.c.l.b16 %v558
        %v1557 = vunpack.c.h.b16 %v558
        %v1558 = vunpack.c.l.b16 %v559
        %v1559 = vunpack.c.h.b16 %v559
        %v1560 = vunpack.c.l.b16 %v560
        %v1561 = vunpack.c.h.b16 %v560
        %v1562 = vunpack.c.l.b16 %v561
        %v1563 = vunpack.c.h.b16 %v561
        %v1564 = vunpack.c.l.b16 %v562
        %v1565 = vunpack.c.h.b16 %v562
        %v1566 = vunpack.c.l.b16 %v563
        %v1567 = vunpack.c.h.b16 %v563
        %v1568 = vunpack.c.l.b16 %v564
        %v1569 = vunpack.c.h.b16 %v564
        %v1570 = vpack.c.b16 %v938, %v930
        %v1571 = vpack.c.b16 %v939, %v931
        %v1572 = vpack.c.b16 %v940, %v932
        %v1573 = vpack.c.b16 %v941, %v933
        %v1574 = vpack.c.b16 %v942, %v934
        %v1575 = vpack.c.b16 %v943, %v935
        %v1576 = vpack.c.b16 %v944, %v936
        %v1577 = vpack.c.b16 %v945, %v937
        %v1578 = vpack.c.b16 %v954, %v946
        %v1579 = vpack.c.b16 %v955, %v947
        %v1580 = vpack.c.b16 %v956, %v948
        %v1581 = vpack.c.b16 %v957, %v949
        %v1582 = vpack.c.b16 %v958, %v950
        %v1583 = vpack.c.b16 %v959, %v951
        %v1584 = vpack.c.b16 %v960, %v952
        %v1585 = vpack.c.b16 %v961, %v953
        %v1586 = vpack.c.b16 %v970, %v962
        %v1587 = vpack.c.b16 %v971, %v963
        %v1588 = vpack.c.b16 %v972, %v964
        %v1589 = vpack.c.b16 %v973, %v965
        %v1590 = vpack.c.b16 %v974, %v966
        %v1591 = vpack.c.b16 %v975, %v967
        %v1592 = vpack.c.b16 %v976, %v968
        %v1593 = vpack.c.b16 %v977, %v969
        %v1594 = vpack.c.b16 %v986, %v978
        %v1595 = vpack.c.b16 %v987, %v979
        %v1596 = vpack.c.b16 %v988, %v980
        %v1597 = vpack.c.b16 %v989, %v981
        %v1598 = vpack.c.b16 %v990, %v982
        %v1599 = vpack.c.b16 %v991, %v983
        %v1600 = vpack.c.b16 %v992, %v984
        %v1601 = vpack.c.b16 %v993, %v985
        %v1602 = vpack.c.b16 %v1002, %v994
        %v1603 = vpack.c.b16 %v1003, %v995
        %v1604 = vpack.c.b16 %v1004, %v996
        %v1605 = vpack.c.b16 %v1005, %v997
        %v1606 = vpack.c.b16 %v1006, %v998
        %v1607 = vpack.c.b16 %v1007, %v999
        %v1608 = vpack.c.b16 %v1008, %v1000
        %v1609 = vpack.c.b16 %v1009, %v1001
        %v1610 = vpack.c.b16 %v1018, %v1010
        %v1611 = vpack.c.b16 %v1019, %v1011
        %v1612 = vpack.c.b16 %v1020, %v1012
        %v1613 = vpack.c.b16 %v1021, %v1013
        %v1614 = vpack.c.b16 %v1022, %v1014
        %v1615 = vpack.c.b16 %v1023, %v1015
        %v1616 = vpack.c.b16 %v1024, %v1016
        %v1617 = vpack.c.b16 %v1025, %v1017
        %v1618 = vpack.c.b16 %v1034, %v1026
        %v1619 = vpack.c.b16 %v1035, %v1027
        %v1620 = vpack.c.b16 %v1036, %v1028
        %v1621 = vpack.c.b16 %v1037, %v1029
        %v1622 = vpack.c.b16 %v1038, %v1030
        %v1623 = vpack.c.b16 %v1039, %v1031
        %v1624 = vpack.c.b16 %v1040, %v1032
        %v1625 = vpack.c.b16 %v1041, %v1033
        %v1626 = vpack.c.b16 %v1050, %v1042
        %v1627 = vpack.c.b16 %v1051, %v1043
        %v1628 = vpack.c.b16 %v1052, %v1044
        %v1629 = vpack.c.b16 %v1053, %v1045
        %v1630 = vpack.c.b16 %v1054, %v1046
        %v1631 = vpack.c.b16 %v1055, %v1047
        %v1632 = vpack.c.b16 %v1056, %v1048
        %v1633 = vpack.c.b16 %v1057, %v1049
        %v1634 = vpack.c.b16 %v1066, %v1058
        %v1635 = vpack.c.b16 %v1067, %v1059
        %v1636 = vpack.c.b16 %v1068, %v1060
        %v1637 = vpack.c.b16 %v1069, %v1061
        %v1638 = vpack.c.b16 %v1070, %v1062
        %v1639 = vpack.c.b16 %v1071, %v1063
        %v1640 = vpack.c.b16 %v1072, %v1064
        %v1641 = vpack.c.b16 %v1073, %v1065
        %v1642 = vpack.c.b16 %v1082, %v1074
        %v1643 = vpack.c.b16 %v1083, %v1075
        %v1644 = vpack.c.b16 %v1084, %v1076
        %v1645 = vpack.c.b16 %v1085, %v1077
        %v1646 = vpack.c.b16 %v1086, %v1078
        %v1647 = vpack.c.b16 %v1087, %v1079
        %v1648 = vpack.c.b16 %v1088, %v1080
        %v1649 = vpack.c.b16 %v1089, %v1081
        %v1650 = vpack.c.b16 %v1098, %v1090
        %v1651 = vpack.c.b16 %v1099, %v1091
        %v1652 = vpack.c.b16 %v1100, %v1092
        %v1653 = vpack.c.b16 %v1101, %v1093
        %v1654 = vpack.c.b16 %v1102, %v1094
        %v1655 = vpack.c.b16 %v1103, %v1095
        %v1656 = vpack.c.b16 %v1104, %v1096
        %v1657 = vpack.c.b16 %v1105, %v1097
        %v1658 = vpack.c.b16 %v1114, %v1106
        %v1659 = vpack.c.b16 %v1115, %v1107
        %v1660 = vpack.c.b16 %v1116, %v1108
        %v1661 = vpack.c.b16 %v1117, %v1109
        %v1662 = vpack.c.b16 %v1118, %v1110
        %v1663 = vpack.c.b16 %v1119, %v1111
        %v1664 = vpack.c.b16 %v1120, %v1112
        %v1665 = vpack.c.b16 %v1121, %v1113
        %v1666 = vpack.c.b16 %v1130, %v1122
        %v1667 = vpack.c.b16 %v1131, %v1123
        %v1668 = vpack.c.b16 %v1132, %v1124
        %v1669 = vpack.c.b16 %v1133, %v1125
        %v1670 = vpack.c.b16 %v1134, %v1126
        %v1671 = vpack.c.b16 %v1135, %v1127
        %v1672 = vpack.c.b16 %v1136, %v1128
        %v1673 = vpack.c.b16 %v1137, %v1129
        %v1674 = vpack.c.b16 %v1146, %v1138
        %v1675 = vpack.c.b16 %v1147, %v1139
        %v1676 = vpack.c.b16 %v1148, %v1140
        %v1677 = vpack.c.b16 %v1149, %v1141
        %v1678 = vpack.c.b16 %v1150, %v1142
        %v1679 = vpack.c.b16 %v1151, %v1143
        %v1680 = vpack.c.b16 %v1152, %v1144
        %v1681 = vpack.c.b16 %v1153, %v1145
        %v1682 = vpack.c.b16 %v1162, %v1154
        %v1683 = vpack.c.b16 %v1163, %v1155
        %v1684 = vpack.c.b16 %v1164, %v1156
        %v1685 = vpack.c.b16 %v1165, %v1157
        %v1686 = vpack.c.b16 %v1166, %v1158
        %v1687 = vpack.c.b16 %v1167, %v1159
        %v1688 = vpack.c.b16 %v1168, %v1160
        %v1689 = vpack.c.b16 %v1169, %v1161
        %v1690 = vpack.c.b16 %v1178, %v1170
        %v1691 = vpack.c.b16 %v1179, %v1171
        %v1692 = vpack.c.b16 %v1180, %v1172
        %v1693 = vpack.c.b16 %v1181, %v1173
        %v1694 = vpack.c.b16 %v1182, %v1174
        %v1695 = vpack.c.b16 %v1183, %v1175
        %v1696 = vpack.c.b16 %v1184, %v1176
        %v1697 = vpack.c.b16 %v1185, %v1177
        %v1698 = vpack.c.b16 %v1194, %v1186
        %v1699 = vpack.c.b16 %v1195, %v1187
        %v1700 = vpack.c.b16 %v1196, %v1188
        %v1701 = vpack.c.b16 %v1197, %v1189
        %v1702 = vpack.c.b16 %v1198, %v1190
        %v1703 = vpack.c.b16 %v1199, %v1191
        %v1704 = vpack.c.b16 %v1200, %v1192
        %v1705 = vpack.c.b16 %v1201, %v1193
        %v1706 = vpack.c.b16 %v1210, %v1202
        %v1707 = vpack.c.b16 %v1211, %v1203
        %v1708 = vpack.c.b16 %v1212, %v1204
        %v1709 = vpack.c.b16 %v1213, %v1205
        %v1710 = vpack.c.b16 %v1214, %v1206
        %v1711 = vpack.c.b16 %v1215, %v1207
        %v1712 = vpack.c.b16 %v1216, %v1208
        %v1713 = vpack.c.b16 %v1217, %v1209
        %v1714 = vpack.c.b16 %v1226, %v1218
        %v1715 = vpack.c.b16 %v1227, %v1219
        %v1716 = vpack.c.b16 %v1228, %v1220
        %v1717 = vpack.c.b16 %v1229, %v1221
        %v1718 = vpack.c.b16 %v1230, %v1222
        %v1719 = vpack.c.b16 %v1231, %v1223
        %v1720 = vpack.c.b16 %v1232, %v1224
        %v1721 = vpack.c.b16 %v1233, %v1225
        %v1722 = vpack.c.b16 %v1242, %v1234
        %v1723 = vpack.c.b16 %v1243, %v1235
        %v1724 = vpack.c.b16 %v1244, %v1236
        %v1725 = vpack.c.b16 %v1245, %v1237
        %v1726 = vpack.c.b16 %v1246, %v1238
        %v1727 = vpack.c.b16 %v1247, %v1239
        %v1728 = vpack.c.b16 %v1248, %v1240
        %v1729 = vpack.c.b16 %v1249, %v1241
        %v1730 = vpack.c.b16 %v1258, %v1250
        %v1731 = vpack.c.b16 %v1259, %v1251
        %v1732 = vpack.c.b16 %v1260, %v1252
        %v1733 = vpack.c.b16 %v1261, %v1253
        %v1734 = vpack.c.b16 %v1262, %v1254
        %v1735 = vpack.c.b16 %v1263, %v1255
        %v1736 = vpack.c.b16 %v1264, %v1256
        %v1737 = vpack.c.b16 %v1265, %v1257
        %v1738 = vpack.c.b16 %v1274, %v1266
        %v1739 = vpack.c.b16 %v1275, %v1267
        %v1740 = vpack.c.b16 %v1276, %v1268
        %v1741 = vpack.c.b16 %v1277, %v1269
        %v1742 = vpack.c.b16 %v1278, %v1270
        %v1743 = vpack.c.b16 %v1279, %v1271
        %v1744 = vpack.c.b16 %v1280, %v1272
        %v1745 = vpack.c.b16 %v1281, %v1273
        %v1746 = vpack.c.b16 %v1290, %v1282
        %v1747 = vpack.c.b16 %v1291, %v1283
        %v1748 = vpack.c.b16 %v1292, %v1284
        %v1749 = vpack.c.b16 %v1293, %v1285
        %v1750 = vpack.c.b16 %v1294, %v1286
        %v1751 = vpack.c.b16 %v1295, %v1287
        %v1752 = vpack.c.b16 %v1296, %v1288
        %v1753 = vpack.c.b16 %v1297, %v1289
        %v1754 = vpack.c.b16 %v1306, %v1298
        %v1755 = vpack.c.b16 %v1307, %v1299
        %v1756 = vpack.c.b16 %v1308, %v1300
        %v1757 = vpack.c.b16 %v1309, %v1301
        %v1758 = vpack.c.b16 %v1310, %v1302
        %v1759 = vpack.c.b16 %v1311, %v1303
        %v1760 = vpack.c.b16 %v1312, %v1304
        %v1761 = vpack.c.b16 %v1313, %v1305
        %v1762 = vpack.c.b16 %v1322, %v1314
        %v1763 = vpack.c.b16 %v1323, %v1315
        %v1764 = vpack.c.b16 %v1324, %v1316
        %v1765 = vpack.c.b16 %v1325, %v1317
        %v1766 = vpack.c.b16 %v1326, %v1318
        %v1767 = vpack.c.b16 %v1327, %v1319
        %v1768 = vpack.c.b16 %v1328, %v1320
        %v1769 = vpack.c.b16 %v1329, %v1321
        %v1770 = vpack.c.b16 %v1338, %v1330
        %v1771 = vpack.c.b16 %v1339, %v1331
        %v1772 = vpack.c.b16 %v1340, %v1332
        %v1773 = vpack.c.b16 %v1341, %v1333
        %v1774 = vpack.c.b16 %v1342, %v1334
        %v1775 = vpack.c.b16 %v1343, %v1335
        %v1776 = vpack.c.b16 %v1344, %v1336
        %v1777 = vpack.c.b16 %v1345, %v1337
        %v1778 = vpack.c.b16 %v1354, %v1346
        %v1779 = vpack.c.b16 %v1355, %v1347
        %v1780 = vpack.c.b16 %v1356, %v1348
        %v1781 = vpack.c.b16 %v1357, %v1349
        %v1782 = vpack.c.b16 %v1358, %v1350
        %v1783 = vpack.c.b16 %v1359, %v1351
        %v1784 = vpack.c.b16 %v1360, %v1352
        %v1785 = vpack.c.b16 %v1361, %v1353
        %v1786 = vpack.c.b16 %v1370, %v1362
        %v1787 = vpack.c.b16 %v1371, %v1363
        %v1788 = vpack.c.b16 %v1372, %v1364
        %v1789 = vpack.c.b16 %v1373, %v1365
        %v1790 = vpack.c.b16 %v1374, %v1366
        %v1791 = vpack.c.b16 %v1375, %v1367
        %v1792 = vpack.c.b16 %v1376, %v1368
        %v1793 = vpack.c.b16 %v1377, %v1369
        %v1794 = vpack.c.b16 %v1386, %v1378
        %v1795 = vpack.c.b16 %v1387, %v1379
        %v1796 = vpack.c.b16 %v1388, %v1380
        %v1797 = vpack.c.b16 %v1389, %v1381
        %v1798 = vpack.c.b16 %v1390, %v1382
        %v1799 = vpack.c.b16 %v1391, %v1383
        %v1800 = vpack.c.b16 %v1392, %v1384
        %v1801 = vpack.c.b16 %v1393, %v1385
        %v1802 = vpack.c.b16 %v1402, %v1394
        %v1803 = vpack.c.b16 %v1403, %v1395
        %v1804 = vpack.c.b16 %v1404, %v1396
        %v1805 = vpack.c.b16 %v1405, %v1397
        %v1806 = vpack.c.b16 %v1406, %v1398
        %v1807 = vpack.c.b16 %v1407, %v1399
        %v1808 = vpack.c.b16 %v1408, %v1400
        %v1809 = vpack.c.b16 %v1409, %v1401
        %v1810 = vpack.c.b16 %v1418, %v1410
        %v1811 = vpack.c.b16 %v1419, %v1411
        %v1812 = vpack.c.b16 %v1420, %v1412
        %v1813 = vpack.c.b16 %v1421, %v1413
        %v1814 = vpack.c.b16 %v1422, %v1414
        %v1815 = vpack.c.b16 %v1423, %v1415
        %v1816 = vpack.c.b16 %v1424, %v1416
        %v1817 = vpack.c.b16 %v1425, %v1417
        %v1818 = vpack.c.b16 %v1434, %v1426
        %v1819 = vpack.c.b16 %v1435, %v1427
        %v1820 = vpack.c.b16 %v1436, %v1428
        %v1821 = vpack.c.b16 %v1437, %v1429
        %v1822 = vpack.c.b16 %v1438, %v1430
        %v1823 = vpack.c.b16 %v1439, %v1431
        %v1824 = vpack.c.b16 %v1440, %v1432
        %v1825 = vpack.c.b16 %v1441, %v1433
        %v1826 = vpack.c.b16 %v1450, %v1442
        %v1827 = vpack.c.b16 %v1451, %v1443
        %v1828 = vpack.c.b16 %v1452, %v1444
        %v1829 = vpack.c.b16 %v1453, %v1445
        %v1830 = vpack.c.b16 %v1454, %v1446
        %v1831 = vpack.c.b16 %v1455, %v1447
        %v1832 = vpack.c.b16 %v1456, %v1448
        %v1833 = vpack.c.b16 %v1457, %v1449
        %v1834 = vpack.c.b16 %v1466, %v1458
        %v1835 = vpack.c.b16 %v1467, %v1459
        %v1836 = vpack.c.b16 %v1468, %v1460
        %v1837 = vpack.c.b16 %v1469, %v1461
        %v1838 = vpack.c.b16 %v1470, %v1462
        %v1839 = vpack.c.b16 %v1471, %v1463
        %v1840 = vpack.c.b16 %v1472, %v1464
        %v1841 = vpack.c.b16 %v1473, %v1465
        %v1842 = vpack.c.b16 %v1482, %v1474
        %v1843 = vpack.c.b16 %v1483, %v1475
        %v1844 = vpack.c.b16 %v1484, %v1476
        %v1845 = vpack.c.b16 %v1485, %v1477
        %v1846 = vpack.c.b16 %v1486, %v1478
        %v1847 = vpack.c.b16 %v1487, %v1479
        %v1848 = vpack.c.b16 %v1488, %v1480
        %v1849 = vpack.c.b16 %v1489, %v1481
        %v1850 = vpack.c.b16 %v1498, %v1490
        %v1851 = vpack.c.b16 %v1499, %v1491
        %v1852 = vpack.c.b16 %v1500, %v1492
        %v1853 = vpack.c.b16 %v1501, %v1493
        %v1854 = vpack.c.b16 %v1502, %v1494
        %v1855 = vpack.c.b16 %v1503, %v1495
        %v1856 = vpack.c.b16 %v1504, %v1496
        %v1857 = vpack.c.b16 %v1505, %v1497
        %v1858 = vpack.c.b16 %v1514, %v1506
        %v1859 = vpack.c.b16 %v1515, %v1507
        %v1860 = vpack.c.b16 %v1516, %v1508
        %v1861 = vpack.c.b16 %v1517, %v1509
        %v1862 = vpack.c.b16 %v1518, %v1510
        %v1863 = vpack.c.b16 %v1519, %v1511
        %v1864 = vpack.c.b16 %v1520, %v1512
        %v1865 = vpack.c.b16 %v1521, %v1513
        %v1866 = vpack.c.b16 %v1530, %v1522
        %v1867 = vpack.c.b16 %v1531, %v1523
        %v1868 = vpack.c.b16 %v1532, %v1524
        %v1869 = vpack.c.b16 %v1533, %v1525
        %v1870 = vpack.c.b16 %v1534, %v1526
        %v1871 = vpack.c.b16 %v1535, %v1527
        %v1872 = vpack.c.b16 %v1536, %v1528
        %v1873 = vpack.c.b16 %v1537, %v1529
        %v1874 = vpack.c.b16 %v1546, %v1538
        %v1875 = vpack.c.b16 %v1547, %v1539
        %v1876 = vpack.c.b16 %v1548, %v1540
        %v1877 = vpack.c.b16 %v1549, %v1541
        %v1878 = vpack.c.b16 %v1550, %v1542
        %v1879 = vpack.c.b16 %v1551, %v1543
        %v1880 = vpack.c.b16 %v1552, %v1544
        %v1881 = vpack.c.b16 %v1553, %v1545
        %v1882 = vpack.c.b16 %v1562, %v1554
        %v1883 = vpack.c.b16 %v1563, %v1555
        %v1884 = vpack.c.b16 %v1564, %v1556
        %v1885 = vpack.c.b16 %v1565, %v1557
        %v1886 = vpack.c.b16 %v1566, %v1558
        %v1887 = vpack.c.b16 %v1567, %v1559
        %v1888 = vpack.c.b16 %v1568, %v1560
        %v1889 = vpack.c.b16 %v1569, %v1561
        %2210 = vmatprep.subr.bf16.mxu0 %v1571
        %2211 = vmatpush1.bf16.msra.mxu0 %v1570
        %2212 = vmatprep.subr.bf16.mxu0 %v1579
        %2213 = vmatpush1.bf16.msra.mxu0 %v1578
        %2214 = vmatprep.subr.bf16.mxu0 %v1587
        %2215 = vmatpush1.bf16.msra.mxu0 %v1586
        %2216 = vmatprep.subr.bf16.mxu0 %v1595
        %2217 = vmatpush1.bf16.msra.mxu0 %v1594
        %2218 = vmatprep.subr.bf16.mxu0 %v1603
        %2219 = vmatpush1.bf16.msra.mxu0 %v1602
        %2220 = vmatprep.subr.bf16.mxu0 %v1611
        %2221 = vmatpush1.bf16.msra.mxu0 %v1610
        %2222 = vmatprep.subr.bf16.mxu0 %v1619
        %2223 = vmatpush1.bf16.msra.mxu0 %v1618
        %2224 = vmatprep.subr.bf16.mxu0 %v1627
        %2225 = vmatpush1.bf16.msra.mxu0 %v1626
        %2226 = vmatprep.subr.bf16.mxu0 %v1635
        %2227 = vmatpush1.bf16.msra.mxu0 %v1634
        %2228 = vmatprep.subr.bf16.mxu0 %v1643
        %2229 = vmatpush1.bf16.msra.mxu0 %v1642
        %2230 = vmatprep.subr.bf16.mxu0 %v1651
        %2231 = vmatpush1.bf16.msra.mxu0 %v1650
        %2232 = vmatprep.subr.bf16.mxu0 %v1659
        %2233 = vmatpush1.bf16.msra.mxu0 %v1658
        %2234 = vmatprep.subr.bf16.mxu0 %v1667
        %2235 = vmatpush1.bf16.msra.mxu0 %v1666
        %2236 = vmatprep.subr.bf16.mxu0 %v1675
        %2237 = vmatpush1.bf16.msra.mxu0 %v1674
        %2238 = vmatprep.subr.bf16.mxu0 %v1683
        %2239 = vmatpush1.bf16.msra.mxu0 %v1682
        %2240 = vmatprep.subr.bf16.mxu0 %v1691
        %2241 = vmatpush1.bf16.msra.mxu0 %v1690
        %2242 = vmatprep.mubr.bf16.mxu0 %v602
        %2243 = vmatmul.mubr.bf16.gmra.mrb[0].mxu0 %v588
        %v2244 = vpop.f32.mrb[0].mxu0
        %v2245 = vadd.f32 0.0, %v2244
        %v2246 = vpop.f32.mrb[0].mxu0
        %v2247 = vadd.f32 0.0, %v2246
        %v2248 = vpop.f32.mrb[0].mxu0
        %v2249 = vpop.f32.mrb[0].mxu0
        %2250 = vdwg.mxu0
        %2251 = vmatprep.subr.bf16.mxu0 %v1699
        %2252 = vmatpush1.bf16.msra.mxu0 %v1698
        %2253 = vmatprep.subr.bf16.mxu0 %v1707
        %2254 = vmatpush1.bf16.msra.mxu0 %v1706
        %2255 = vmatprep.subr.bf16.mxu0 %v1715
        %2256 = vmatpush1.bf16.msra.mxu0 %v1714
        %2257 = vmatprep.subr.bf16.mxu0 %v1723
        %2258 = vmatpush1.bf16.msra.mxu0 %v1722
        %2259 = vmatprep.subr.bf16.mxu0 %v1731
        %2260 = vmatpush1.bf16.msra.mxu0 %v1730
        %2261 = vmatprep.subr.bf16.mxu0 %v1739
        %2262 = vmatpush1.bf16.msra.mxu0 %v1738
        %2263 = vmatprep.subr.bf16.mxu0 %v1747
        %2264 = vmatpush1.bf16.msra.mxu0 %v1746
        %2265 = vmatprep.subr.bf16.mxu0 %v1755
        %2266 = vmatpush1.bf16.msra.mxu0 %v1754
        %2267 = vmatprep.subr.bf16.mxu0 %v1763
        %2268 = vmatpush1.bf16.msra.mxu0 %v1762
        %2269 = vmatprep.subr.bf16.mxu0 %v1771
        %2270 = vmatpush1.bf16.msra.mxu0 %v1770
        %2271 = vmatprep.subr.bf16.mxu0 %v1779
        %2272 = vmatpush1.bf16.msra.mxu0 %v1778
        %2273 = vmatprep.subr.bf16.mxu0 %v1787
        %2274 = vmatpush1.bf16.msra.mxu0 %v1786
        %2275 = vmatprep.subr.bf16.mxu0 %v1795
        %2276 = vmatpush1.bf16.msra.mxu0 %v1794
        %2277 = vmatprep.subr.bf16.mxu0 %v1803
        %2278 = vmatpush1.bf16.msra.mxu0 %v1802
        %2279 = vmatprep.subr.bf16.mxu0 %v1811
        %2280 = vmatpush1.bf16.msra.mxu0 %v1810
        %2281 = vmatprep.subr.bf16.mxu0 %v1819
        %2282 = vmatpush1.bf16.msra.mxu0 %v1818
        %2283 = vmatprep.mubr.bf16.mxu0 %v604
        %2284 = vmatmul.mubr.bf16.gmra.mrb[0].mxu0 %v603
        %v2285 = vpop.f32.mrb[0].mxu0
        %v2286 = vadd.f32 %v2245, %v2285
        %v2287 = vpop.f32.mrb[0].mxu0
        %v2288 = vadd.f32 %v2247, %v2287
        %v2289 = vpop.f32.mrb[0].mxu0
        %v2290 = vpop.f32.mrb[0].mxu0
        %2291 = vdwg.mxu0
        %2292 = vmatprep.subr.bf16.mxu0 %v1827
        %2293 = vmatpush1.bf16.msra.mxu0 %v1826
        %2294 = vmatprep.subr.bf16.mxu0 %v1835
        %2295 = vmatpush1.bf16.msra.mxu0 %v1834
        %2296 = vmatprep.subr.bf16.mxu0 %v1843
        %2297 = vmatpush1.bf16.msra.mxu0 %v1842
        %2298 = vmatprep.subr.bf16.mxu0 %v1851
        %2299 = vmatpush1.bf16.msra.mxu0 %v1850
        %2300 = vmatprep.subr.bf16.mxu0 %v1859
        %2301 = vmatpush1.bf16.msra.mxu0 %v1858
        %2302 = vmatprep.subr.bf16.mxu0 %v1867
        %2303 = vmatpush1.bf16.msra.mxu0 %v1866
        %2304 = vmatprep.subr.bf16.mxu0 %v1875
        %2305 = vmatpush1.bf16.msra.mxu0 %v1874
        %2306 = vmatprep.subr.bf16.mxu0 %v1883
        %2307 = vmatpush1.bf16.msra.mxu0 %v1882
        %2308 = vmatprep.subr.bf16.mxu0 0
        %2309 = vmatpush1.bf16.msra.mxu0 0
        %2310 = vmatprep.subr.bf16.mxu0 0
        %2311 = vmatpush1.bf16.msra.mxu0 0
        %2312 = vmatprep.subr.bf16.mxu0 0
        %2313 = vmatpush1.bf16.msra.mxu0 0
        %2314 = vmatprep.subr.bf16.mxu0 0
        %2315 = vmatpush1.bf16.msra.mxu0 0
        %2316 = vmatprep.subr.bf16.mxu0 0
        %2317 = vmatpush1.bf16.msra.mxu0 0
        %2318 = vmatprep.subr.bf16.mxu0 0
        %2319 = vmatpush1.bf16.msra.mxu0 0
        %2320 = vmatprep.subr.bf16.mxu0 0
        %2321 = vmatpush1.bf16.msra.mxu0 0
        %2322 = vmatprep.subr.bf16.mxu0 0
        %2323 = vmatpush1.bf16.msra.mxu0 0
        %2324 = vmatprep.mubr.bf16.mxu0 0
        %2325 = vmatmul.mubr.bf16.gmra.mrb[0].mxu0 %v595
        %v2326 = vpop.f32.mrb[0].mxu0
        %v2327 = vadd.f32 %v2286, %v2326
        %v2328 = vpop.f32.mrb[0].mxu0
        %v2329 = vadd.f32 %v2288, %v2328
        %v2330 = vpop.f32.mrb[0].mxu0
        %v2331 = vpop.f32.mrb[0].mxu0
        %2332 = vdwg.mxu0
        %2333 = vmatprep.subr.bf16.mxu0 %v1573
        %2334 = vmatpush1.bf16.msra.mxu0 %v1572
        %2335 = vmatprep.subr.bf16.mxu0 %v1581
        %2336 = vmatpush1.bf16.msra.mxu0 %v1580
        %2337 = vmatprep.subr.bf16.mxu0 %v1589
        %2338 = vmatpush1.bf16.msra.mxu0 %v1588
        %2339 = vmatprep.subr.bf16.mxu0 %v1597
        %2340 = vmatpush1.bf16.msra.mxu0 %v1596
        %2341 = vmatprep.subr.bf16.mxu0 %v1605
        %2342 = vmatpush1.bf16.msra.mxu0 %v1604
        %2343 = vmatprep.subr.bf16.mxu0 %v1613
        %2344 = vmatpush1.bf16.msra.mxu0 %v1612
        %2345 = vmatprep.subr.bf16.mxu0 %v1621
        %2346 = vmatpush1.bf16.msra.mxu0 %v1620
        %2347 = vmatprep.subr.bf16.mxu0 %v1629
        %2348 = vmatpush1.bf16.msra.mxu0 %v1628
        %2349 = vmatprep.subr.bf16.mxu0 %v1637
        %2350 = vmatpush1.bf16.msra.mxu0 %v1636
        %2351 = vmatprep.subr.bf16.mxu0 %v1645
        %2352 = vmatpush1.bf16.msra.mxu0 %v1644
        %2353 = vmatprep.subr.bf16.mxu0 %v1653
        %2354 = vmatpush1.bf16.msra.mxu0 %v1652
        %2355 = vmatprep.subr.bf16.mxu0 %v1661
        %2356 = vmatpush1.bf16.msra.mxu0 %v1660
        %2357 = vmatprep.subr.bf16.mxu0 %v1669
        %2358 = vmatpush1.bf16.msra.mxu0 %v1668
        %2359 = vmatprep.subr.bf16.mxu0 %v1677
        %2360 = vmatpush1.bf16.msra.mxu0 %v1676
        %2361 = vmatprep.subr.bf16.mxu0 %v1685
        %2362 = vmatpush1.bf16.msra.mxu0 %v1684
        %2363 = vmatprep.subr.bf16.mxu0 %v1693
        %2364 = vmatpush1.bf16.msra.mxu0 %v1692
        %2365 = vmatprep.mubr.bf16.mxu0 %v602
        %2366 = vmatmul.mubr.bf16.gmra.mrb[0].mxu0 %v588
        %v2367 = vpop.f32.mrb[0].mxu0
        %v2368 = vadd.f32 0.0, %v2367
        %v2369 = vpop.f32.mrb[0].mxu0
        %v2370 = vadd.f32 0.0, %v2369
        %v2371 = vpop.f32.mrb[0].mxu0
        %v2372 = vpop.f32.mrb[0].mxu0
        %2373 = vdwg.mxu0
        %2374 = vmatprep.subr.bf16.mxu0 %v1701
        %2375 = vmatpush1.bf16.msra.mxu0 %v1700
        %2376 = vmatprep.subr.bf16.mxu0 %v1709
        %2377 = vmatpush1.bf16.msra.mxu0 %v1708
        %2378 = vmatprep.subr.bf16.mxu0 %v1717
        %2379 = vmatpush1.bf16.msra.mxu0 %v1716
        %2380 = vmatprep.subr.bf16.mxu0 %v1725
        %2381 = vmatpush1.bf16.msra.mxu0 %v1724
        %2382 = vmatprep.subr.bf16.mxu0 %v1733
        %2383 = vmatpush1.bf16.msra.mxu0 %v1732
        %2384 = vmatprep.subr.bf16.mxu0 %v1741
        %2385 = vmatpush1.bf16.msra.mxu0 %v1740
        %2386 = vmatprep.subr.bf16.mxu0 %v1749
        %2387 = vmatpush1.bf16.msra.mxu0 %v1748
        %2388 = vmatprep.subr.bf16.mxu0 %v1757
        %2389 = vmatpush1.bf16.msra.mxu0 %v1756
        %2390 = vmatprep.subr.bf16.mxu0 %v1765
        %2391 = vmatpush1.bf16.msra.mxu0 %v1764
        %2392 = vmatprep.subr.bf16.mxu0 %v1773
        %2393 = vmatpush1.bf16.msra.mxu0 %v1772
        %2394 = vmatprep.subr.bf16.mxu0 %v1781
        %2395 = vmatpush1.bf16.msra.mxu0 %v1780
        %2396 = vmatprep.subr.bf16.mxu0 %v1789
        %2397 = vmatpush1.bf16.msra.mxu0 %v1788
        %2398 = vmatprep.subr.bf16.mxu0 %v1797
        %2399 = vmatpush1.bf16.msra.mxu0 %v1796
        %2400 = vmatprep.subr.bf16.mxu0 %v1805
        %2401 = vmatpush1.bf16.msra.mxu0 %v1804
        %2402 = vmatprep.subr.bf16.mxu0 %v1813
        %2403 = vmatpush1.bf16.msra.mxu0 %v1812
        %2404 = vmatprep.subr.bf16.mxu0 %v1821
        %2405 = vmatpush1.bf16.msra.mxu0 %v1820
        %2406 = vmatprep.mubr.bf16.mxu0 %v604
        %2407 = vmatmul.mubr.bf16.gmra.mrb[0].mxu0 %v603
        %v2408 = vpop.f32.mrb[0].mxu0
        %v2409 = vadd.f32 %v2368, %v2408
        %v2410 = vpop.f32.mrb[0].mxu0
        %v2411 = vadd.f32 %v2370, %v2410
        %v2412 = vpop.f32.mrb[0].mxu0
        %v2413 = vpop.f32.mrb[0].mxu0
        %2414 = vdwg.mxu0
        %2415 = vmatprep.subr.bf16.mxu0 %v1829
        %2416 = vmatpush1.bf16.msra.mxu0 %v1828
        %2417 = vmatprep.subr.bf16.mxu0 %v1837
        %2418 = vmatpush1.bf16.msra.mxu0 %v1836
        %2419 = vmatprep.subr.bf16.mxu0 %v1845
        %2420 = vmatpush1.bf16.msra.mxu0 %v1844
        %2421 = vmatprep.subr.bf16.mxu0 %v1853
        %2422 = vmatpush1.bf16.msra.mxu0 %v1852
        %2423 = vmatprep.subr.bf16.mxu0 %v1861
        %2424 = vmatpush1.bf16.msra.mxu0 %v1860
        %2425 = vmatprep.subr.bf16.mxu0 %v1869
        %2426 = vmatpush1.bf16.msra.mxu0 %v1868
        %2427 = vmatprep.subr.bf16.mxu0 %v1877
        %2428 = vmatpush1.bf16.msra.mxu0 %v1876
        %2429 = vmatprep.subr.bf16.mxu0 %v1885
        %2430 = vmatpush1.bf16.msra.mxu0 %v1884
        %2431 = vmatprep.subr.bf16.mxu0 0
        %2432 = vmatpush1.bf16.msra.mxu0 0
        %2433 = vmatprep.subr.bf16.mxu0 0
        %2434 = vmatpush1.bf16.msra.mxu0 0
        %2435 = vmatprep.subr.bf16.mxu0 0
        %2436 = vmatpush1.bf16.msra.mxu0 0
        %2437 = vmatprep.subr.bf16.mxu0 0
        %2438 = vmatpush1.bf16.msra.mxu0 0
        %2439 = vmatprep.subr.bf16.mxu0 0
        %2440 = vmatpush1.bf16.msra.mxu0 0
        %2441 = vmatprep.subr.bf16.mxu0 0
        %2442 = vmatpush1.bf16.msra.mxu0 0
        %2443 = vmatprep.subr.bf16.mxu0 0
        %2444 = vmatpush1.bf16.msra.mxu0 0
        %2445 = vmatprep.subr.bf16.mxu0 0
        %2446 = vmatpush1.bf16.msra.mxu0 0
        %2447 = vmatprep.mubr.bf16.mxu0 0
        %2448 = vmatmul.mubr.bf16.gmra.mrb[0].mxu0 %v595
        %v2449 = vpop.f32.mrb[0].mxu0
        %v2450 = vadd.f32 %v2409, %v2449
        %v2451 = vpop.f32.mrb[0].mxu0
        %v2452 = vadd.f32 %v2411, %v2451
        %v2453 = vpop.f32.mrb[0].mxu0
        %v2454 = vpop.f32.mrb[0].mxu0
        %2455 = vdwg.mxu0
        %2456 = vmatprep.subr.bf16.mxu0 %v1575
        %2457 = vmatpush1.bf16.msra.mxu0 %v1574
        %2458 = vmatprep.subr.bf16.mxu0 %v1583
        %2459 = vmatpush1.bf16.msra.mxu0 %v1582
        %2460 = vmatprep.subr.bf16.mxu0 %v1591
        %2461 = vmatpush1.bf16.msra.mxu0 %v1590
        %2462 = vmatprep.subr.bf16.mxu0 %v1599
        %2463 = vmatpush1.bf16.msra.mxu0 %v1598
        %2464 = vmatprep.subr.bf16.mxu0 %v1607
        %2465 = vmatpush1.bf16.msra.mxu0 %v1606
        %2466 = vmatprep.subr.bf16.mxu0 %v1615
        %2467 = vmatpush1.bf16.msra.mxu0 %v1614
        %2468 = vmatprep.subr.bf16.mxu0 %v1623
        %2469 = vmatpush1.bf16.msra.mxu0 %v1622
        %2470 = vmatprep.subr.bf16.mxu0 %v1631
        %2471 = vmatpush1.bf16.msra.mxu0 %v1630
        %2472 = vmatprep.subr.bf16.mxu0 %v1639
        %2473 = vmatpush1.bf16.msra.mxu0 %v1638
        %2474 = vmatprep.subr.bf16.mxu0 %v1647
        %2475 = vmatpush1.bf16.msra.mxu0 %v1646
        %2476 = vmatprep.subr.bf16.mxu0 %v1655
        %2477 = vmatpush1.bf16.msra.mxu0 %v1654
        %2478 = vmatprep.subr.bf16.mxu0 %v1663
        %2479 = vmatpush1.bf16.msra.mxu0 %v1662
        %2480 = vmatprep.subr.bf16.mxu0 %v1671
        %2481 = vmatpush1.bf16.msra.mxu0 %v1670
        %2482 = vmatprep.subr.bf16.mxu0 %v1679
        %2483 = vmatpush1.bf16.msra.mxu0 %v1678
        %2484 = vmatprep.subr.bf16.mxu0 %v1687
        %2485 = vmatpush1.bf16.msra.mxu0 %v1686
        %2486 = vmatprep.subr.bf16.mxu0 %v1695
        %2487 = vmatpush1.bf16.msra.mxu0 %v1694
        %2488 = vmatprep.mubr.bf16.mxu0 %v602
        %2489 = vmatmul.mubr.bf16.gmra.mrb[0].mxu0 %v588
        %v2490 = vpop.f32.mrb[0].mxu0
        %v2491 = vadd.f32 0.0, %v2490
        %v2492 = vpop.f32.mrb[0].mxu0
        %v2493 = vadd.f32 0.0, %v2492
        %v2494 = vpop.f32.mrb[0].mxu0
        %v2495 = vpop.f32.mrb[0].mxu0
        %2496 = vdwg.mxu0
        %2497 = vmatprep.subr.bf16.mxu0 %v1703
        %2498 = vmatpush1.bf16.msra.mxu0 %v1702
        %2499 = vmatprep.subr.bf16.mxu0 %v1711
        %2500 = vmatpush1.bf16.msra.mxu0 %v1710
        %2501 = vmatprep.subr.bf16.mxu0 %v1719
        %2502 = vmatpush1.bf16.msra.mxu0 %v1718
        %2503 = vmatprep.subr.bf16.mxu0 %v1727
        %2504 = vmatpush1.bf16.msra.mxu0 %v1726
        %2505 = vmatprep.subr.bf16.mxu0 %v1735
        %2506 = vmatpush1.bf16.msra.mxu0 %v1734
        %2507 = vmatprep.subr.bf16.mxu0 %v1743
        %2508 = vmatpush1.bf16.msra.mxu0 %v1742
        %2509 = vmatprep.subr.bf16.mxu0 %v1751
        %2510 = vmatpush1.bf16.msra.mxu0 %v1750
        %2511 = vmatprep.subr.bf16.mxu0 %v1759
        %2512 = vmatpush1.bf16.msra.mxu0 %v1758
        %2513 = vmatprep.subr.bf16.mxu0 %v1767
        %2514 = vmatpush1.bf16.msra.mxu0 %v1766
        %2515 = vmatprep.subr.bf16.mxu0 %v1775
        %2516 = vmatpush1.bf16.msra.mxu0 %v1774
        %2517 = vmatprep.subr.bf16.mxu0 %v1783
        %2518 = vmatpush1.bf16.msra.mxu0 %v1782
        %2519 = vmatprep.subr.bf16.mxu0 %v1791
        %2520 = vmatpush1.bf16.msra.mxu0 %v1790
        %2521 = vmatprep.subr.bf16.mxu0 %v1799
        %2522 = vmatpush1.bf16.msra.mxu0 %v1798
        %2523 = vmatprep.subr.bf16.mxu0 %v1807
        %2524 = vmatpush1.bf16.msra.mxu0 %v1806
        %2525 = vmatprep.subr.bf16.mxu0 %v1815
        %2526 = vmatpush1.bf16.msra.mxu0 %v1814
        %2527 = vmatprep.subr.bf16.mxu0 %v1823
        %2528 = vmatpush1.bf16.msra.mxu0 %v1822
        %2529 = vmatprep.mubr.bf16.mxu0 %v604
        %2530 = vmatmul.mubr.bf16.gmra.mrb[0].mxu0 %v603
        %v2531 = vpop.f32.mrb[0].mxu0
        %v2532 = vadd.f32 %v2491, %v2531
        %v2533 = vpop.f32.mrb[0].mxu0
        %v2534 = vadd.f32 %v2493, %v2533
        %v2535 = vpop.f32.mrb[0].mxu0
        %v2536 = vpop.f32.mrb[0].mxu0
        %2537 = vdwg.mxu0
        %2538 = vmatprep.subr.bf16.mxu0 %v1831
        %2539 = vmatpush1.bf16.msra.mxu0 %v1830
        %2540 = vmatprep.subr.bf16.mxu0 %v1839
        %2541 = vmatpush1.bf16.msra.mxu0 %v1838
        %2542 = vmatprep.subr.bf16.mxu0 %v1847
        %2543 = vmatpush1.bf16.msra.mxu0 %v1846
        %2544 = vmatprep.subr.bf16.mxu0 %v1855
        %2545 = vmatpush1.bf16.msra.mxu0 %v1854
        %2546 = vmatprep.subr.bf16.mxu0 %v1863
        %2547 = vmatpush1.bf16.msra.mxu0 %v1862
        %2548 = vmatprep.subr.bf16.mxu0 %v1871
        %2549 = vmatpush1.bf16.msra.mxu0 %v1870
        %2550 = vmatprep.subr.bf16.mxu0 %v1879
        %2551 = vmatpush1.bf16.msra.mxu0 %v1878
        %2552 = vmatprep.subr.bf16.mxu0 %v1887
        %2553 = vmatpush1.bf16.msra.mxu0 %v1886
        %2554 = vmatprep.subr.bf16.mxu0 0
        %2555 = vmatpush1.bf16.msra.mxu0 0
        %2556 = vmatprep.subr.bf16.mxu0 0
        %2557 = vmatpush1.bf16.msra.mxu0 0
        %2558 = vmatprep.subr.bf16.mxu0 0
        %2559 = vmatpush1.bf16.msra.mxu0 0
        %2560 = vmatprep.subr.bf16.mxu0 0
        %2561 = vmatpush1.bf16.msra.mxu0 0
        %2562 = vmatprep.subr.bf16.mxu0 0
        %2563 = vmatpush1.bf16.msra.mxu0 0
        %2564 = vmatprep.subr.bf16.mxu0 0
        %2565 = vmatpush1.bf16.msra.mxu0 0
        %2566 = vmatprep.subr.bf16.mxu0 0
        %2567 = vmatpush1.bf16.msra.mxu0 0
        %2568 = vmatprep.subr.bf16.mxu0 0
        %2569 = vmatpush1.bf16.msra.mxu0 0
        %2570 = vmatprep.mubr.bf16.mxu0 0
        %2571 = vmatmul.mubr.bf16.gmra.mrb[0].mxu0 %v595
        %v2572 = vpop.f32.mrb[0].mxu0
        %v2573 = vadd.f32 %v2532, %v2572
        %v2574 = vpop.f32.mrb[0].mxu0
        %v2575 = vadd.f32 %v2534, %v2574
        %v2576 = vpop.f32.mrb[0].mxu0
        %v2577 = vpop.f32.mrb[0].mxu0
        %2578 = vdwg.mxu0
        %2579 = vmatprep.subr.bf16.mxu0 %v1577
        %2580 = vmatpush1.bf16.msra.mxu0 %v1576
        %2581 = vmatprep.subr.bf16.mxu0 %v1585
        %2582 = vmatpush1.bf16.msra.mxu0 %v1584
        %2583 = vmatprep.subr.bf16.mxu0 %v1593
        %2584 = vmatpush1.bf16.msra.mxu0 %v1592
        %2585 = vmatprep.subr.bf16.mxu0 %v1601
        %2586 = vmatpush1.bf16.msra.mxu0 %v1600
        %2587 = vmatprep.subr.bf16.mxu0 %v1609
        %2588 = vmatpush1.bf16.msra.mxu0 %v1608
        %2589 = vmatprep.subr.bf16.mxu0 %v1617
        %2590 = vmatpush1.bf16.msra.mxu0 %v1616
        %2591 = vmatprep.subr.bf16.mxu0 %v1625
        %2592 = vmatpush1.bf16.msra.mxu0 %v1624
        %2593 = vmatprep.subr.bf16.mxu0 %v1633
        %2594 = vmatpush1.bf16.msra.mxu0 %v1632
        %2595 = vmatprep.subr.bf16.mxu0 %v1641
        %2596 = vmatpush1.bf16.msra.mxu0 %v1640
        %2597 = vmatprep.subr.bf16.mxu0 %v1649
        %2598 = vmatpush1.bf16.msra.mxu0 %v1648
        %2599 = vmatprep.subr.bf16.mxu0 %v1657
        %2600 = vmatpush1.bf16.msra.mxu0 %v1656
        %2601 = vmatprep.subr.bf16.mxu0 %v1665
        %2602 = vmatpush1.bf16.msra.mxu0 %v1664
        %2603 = vmatprep.subr.bf16.mxu0 %v1673
        %2604 = vmatpush1.bf16.msra.mxu0 %v1672
        %2605 = vmatprep.subr.bf16.mxu0 %v1681
        %2606 = vmatpush1.bf16.msra.mxu0 %v1680
        %2607 = vmatprep.subr.bf16.mxu0 %v1689
        %2608 = vmatpush1.bf16.msra.mxu0 %v1688
        %2609 = vmatprep.subr.bf16.mxu0 %v1697
        %2610 = vmatpush1.bf16.msra.mxu0 %v1696
        %2611 = vmatprep.mubr.bf16.mxu0 %v602
        %2612 = vmatmul.mubr.bf16.gmra.mrb[0].mxu0 %v588
        %v2613 = vpop.f32.mrb[0].mxu0
        %v2614 = vadd.f32 0.0, %v2613
        %v2615 = vpop.f32.mrb[0].mxu0
        %v2616 = vadd.f32 0.0, %v2615
        %v2617 = vpop.f32.mrb[0].mxu0
        %v2618 = vpop.f32.mrb[0].mxu0
        %2619 = vdwg.mxu0
        %2620 = vmatprep.subr.bf16.mxu0 %v1705
        %2621 = vmatpush1.bf16.msra.mxu0 %v1704
        %2622 = vmatprep.subr.bf16.mxu0 %v1713
        %2623 = vmatpush1.bf16.msra.mxu0 %v1712
        %2624 = vmatprep.subr.bf16.mxu0 %v1721
        %2625 = vmatpush1.bf16.msra.mxu0 %v1720
        %2626 = vmatprep.subr.bf16.mxu0 %v1729
        %2627 = vmatpush1.bf16.msra.mxu0 %v1728
        %2628 = vmatprep.subr.bf16.mxu0 %v1737
        %2629 = vmatpush1.bf16.msra.mxu0 %v1736
        %2630 = vmatprep.subr.bf16.mxu0 %v1745
        %2631 = vmatpush1.bf16.msra.mxu0 %v1744
        %2632 = vmatprep.subr.bf16.mxu0 %v1753
        %2633 = vmatpush1.bf16.msra.mxu0 %v1752
        %2634 = vmatprep.subr.bf16.mxu0 %v1761
        %2635 = vmatpush1.bf16.msra.mxu0 %v1760
        %2636 = vmatprep.subr.bf16.mxu0 %v1769
        %2637 = vmatpush1.bf16.msra.mxu0 %v1768
        %2638 = vmatprep.subr.bf16.mxu0 %v1777
        %2639 = vmatpush1.bf16.msra.mxu0 %v1776
        %2640 = vmatprep.subr.bf16.mxu0 %v1785
        %2641 = vmatpush1.bf16.msra.mxu0 %v1784
        %2642 = vmatprep.subr.bf16.mxu0 %v1793
        %2643 = vmatpush1.bf16.msra.mxu0 %v1792
        %2644 = vmatprep.subr.bf16.mxu0 %v1801
        %2645 = vmatpush1.bf16.msra.mxu0 %v1800
        %2646 = vmatprep.subr.bf16.mxu0 %v1809
        %2647 = vmatpush1.bf16.msra.mxu0 %v1808
        %2648 = vmatprep.subr.bf16.mxu0 %v1817
        %2649 = vmatpush1.bf16.msra.mxu0 %v1816
        %2650 = vmatprep.subr.bf16.mxu0 %v1825
        %2651 = vmatpush1.bf16.msra.mxu0 %v1824
        %2652 = vmatprep.mubr.bf16.mxu0 %v604
        %2653 = vmatmul.mubr.bf16.gmra.mrb[0].mxu0 %v603
        %v2654 = vpop.f32.mrb[0].mxu0
        %v2655 = vadd.f32 %v2614, %v2654
        %v2656 = vpop.f32.mrb[0].mxu0
        %v2657 = vadd.f32 %v2616, %v2656
        %v2658 = vpop.f32.mrb[0].mxu0
        %v2659 = vpop.f32.mrb[0].mxu0
        %2660 = vdwg.mxu0
        %2661 = vmatprep.subr.bf16.mxu0 %v1833
        %2662 = vmatpush1.bf16.msra.mxu0 %v1832
        %2663 = vmatprep.subr.bf16.mxu0 %v1841
        %2664 = vmatpush1.bf16.msra.mxu0 %v1840
        %2665 = vmatprep.subr.bf16.mxu0 %v1849
        %2666 = vmatpush1.bf16.msra.mxu0 %v1848
        %2667 = vmatprep.subr.bf16.mxu0 %v1857
        %2668 = vmatpush1.bf16.msra.mxu0 %v1856
        %2669 = vmatprep.subr.bf16.mxu0 %v1865
        %2670 = vmatpush1.bf16.msra.mxu0 %v1864
        %2671 = vmatprep.subr.bf16.mxu0 %v1873
        %2672 = vmatpush1.bf16.msra.mxu0 %v1872
        %2673 = vmatprep.subr.bf16.mxu0 %v1881
        %2674 = vmatpush1.bf16.msra.mxu0 %v1880
        %2675 = vmatprep.subr.bf16.mxu0 %v1889
        %2676 = vmatpush1.bf16.msra.mxu0 %v1888
        %2677 = vmatprep.subr.bf16.mxu0 0
        %2678 = vmatpush1.bf16.msra.mxu0 0
        %2679 = vmatprep.subr.bf16.mxu0 0
        %2680 = vmatpush1.bf16.msra.mxu0 0
        %2681 = vmatprep.subr.bf16.mxu0 0
        %2682 = vmatpush1.bf16.msra.mxu0 0
        %2683 = vmatprep.subr.bf16.mxu0 0
        %2684 = vmatpush1.bf16.msra.mxu0 0
        %2685 = vmatprep.subr.bf16.mxu0 0
        %2686 = vmatpush1.bf16.msra.mxu0 0
        %2687 = vmatprep.subr.bf16.mxu0 0
        %2688 = vmatpush1.bf16.msra.mxu0 0
        %2689 = vmatprep.subr.bf16.mxu0 0
        %2690 = vmatpush1.bf16.msra.mxu0 0
        %2691 = vmatprep.subr.bf16.mxu0 0
        %2692 = vmatpush1.bf16.msra.mxu0 0
        %2693 = vmatprep.mubr.bf16.mxu0 0
        %2694 = vmatmul.mubr.bf16.gmra.mrb[0].mxu0 %v595
        %v2695 = vpop.f32.mrb[0].mxu0
        %v2696 = vadd.f32 %v2655, %v2695
        %v2697 = vpop.f32.mrb[0].mxu0
        %v2698 = vadd.f32 %v2657, %v2697
        %v2699 = vpop.f32.mrb[0].mxu0
        %v2700 = vpop.f32.mrb[0].mxu0
        %2701 = vdwg.mxu0
        %v2710 = vcombine.low %v2327, %v2329
        %v2711 = vcombine.low %v2450, %v2452
        %v2713 = vunpack.c.l.s4 1983009808
        %v2714 = vunpack.c.0.s8 %v2713
        %v2715 = vlaneseq
        %v2716 = vshrl.u32 %v2715, 7
        %v2717 = vsub.s32 %v2714, %v2716
        %v2718 = vrot.slane %v2710, %v2717
        %v2720 = vunpack.c.l.s4 1983009808
        %v2721 = vunpack.c.0.s8 %v2720
        %v2722 = vlaneseq
        %v2723 = vshrl.u32 %v2722, 7
        %v2724 = vsub.s32 %v2721, %v2723
        %v2725 = vrot.slane %v2711, %v2724
        %v2726 = vcombine.low %v2718, %v2725
        %v2727 = vcombine.low %v2573, %v2575
        %v2728 = vcombine.low %v2696, %v2698
        %v2730 = vunpack.c.l.s4 1983009808
        %v2731 = vunpack.c.0.s8 %v2730
        %v2732 = vlaneseq
        %v2733 = vshrl.u32 %v2732, 7
        %v2734 = vsub.s32 %v2731, %v2733
        %v2735 = vrot.slane %v2727, %v2734
        %v2737 = vunpack.c.l.s4 1983009808
        %v2738 = vunpack.c.0.s8 %v2737
        %v2739 = vlaneseq
        %v2740 = vshrl.u32 %v2739, 7
        %v2741 = vsub.s32 %v2738, %v2740
        %v2742 = vrot.slane %v2728, %v2741
        %v2743 = vcombine.low %v2735, %v2742
        %v2746 = vadd.f32 %v242, %v2726
        %v2747 = vadd.f32 %v243, %v2743
        %2748 = vst [vmem:[#allocation2] sm:$0xff] %v2746
        %2749 = vst [vmem:[#allocation2 + $0x8] sm:$0xff] %v2747
        %p2750 = scmp.eq.s32.totalorder %s17, 4
        // Predicated region
        $region45: #{dueling_dqn_forward.7} parent=39 // pred_check
          %p2751 = pneg %p2750
        $region46: #{dueling_dqn_forward.7} parent=39 // pred_check_branch
          %2753 = sbr.rel (%p2751) target = $region48
        $region47: #{dueling_dqn_forward.7} parent=39 // pred_region
          %v2754 = vld [vmem:[#allocation2] sm:$0xff]
          %v2755 = vld [vmem:[#allocation2 + $0x8] sm:$0xff]
          %v2756 = vld [vmem:[%s2] sm:$0xff]
          %v2758 = vlaneseq
          %v2759 = vshrl.u32 %v2758, 7
          %v2760 = vsub.s32 0, %v2759
          %v2761 = vrot.slane %v2756, %v2760
          %v2762 = vlaneseq
          %v2763 = vshrl.u32 %v2762, 7
          %v2764 = vsub.s32 1, %v2763
          %v2765 = vrot.slane %v2756, %v2764
          %v2766 = vlaneseq
          %v2767 = vshrl.u32 %v2766, 7
          %v2768 = vsub.s32 2, %v2767
          %v2769 = vrot.slane %v2756, %v2768
          %v2770 = vlaneseq
          %v2771 = vshrl.u32 %v2770, 7
          %v2772 = vsub.s32 3, %v2771
          %v2773 = vrot.slane %v2756, %v2772
          %v2774 = vlaneseq
          %v2775 = vshrl.u32 %v2774, 7
          %v2776 = vsub.s32 4, %v2775
          %v2777 = vrot.slane %v2756, %v2776
          %v2778 = vlaneseq
          %v2779 = vshrl.u32 %v2778, 7
          %v2780 = vsub.s32 5, %v2779
          %v2781 = vrot.slane %v2756, %v2780
          %v2782 = vlaneseq
          %v2783 = vshrl.u32 %v2782, 7
          %v2784 = vsub.s32 6, %v2783
          %v2785 = vrot.slane %v2756, %v2784
          %v2786 = vlaneseq
          %v2787 = vshrl.u32 %v2786, 7
          %v2788 = vsub.s32 7, %v2787
          %v2789 = vrot.slane %v2756, %v2788
          %v2790 = vcombine.low %v2761, %v2765
          %v2791 = vcombine.low %v2769, %v2773
          %v2793 = vunpack.c.l.s4 1983009808
          %v2794 = vunpack.c.0.s8 %v2793
          %v2795 = vlaneseq
          %v2796 = vshrl.u32 %v2795, 7
          %v2797 = vsub.s32 %v2794, %v2796
          %v2798 = vrot.slane %v2790, %v2797
          %v2800 = vunpack.c.l.s4 1983009808
          %v2801 = vunpack.c.0.s8 %v2800
          %v2802 = vlaneseq
          %v2803 = vshrl.u32 %v2802, 7
          %v2804 = vsub.s32 %v2801, %v2803
          %v2805 = vrot.slane %v2791, %v2804
          %v2806 = vcombine.low %v2798, %v2805
          %v2807 = vcombine.low %v2777, %v2781
          %v2808 = vcombine.low %v2785, %v2789
          %v2810 = vunpack.c.l.s4 1983009808
          %v2811 = vunpack.c.0.s8 %v2810
          %v2812 = vlaneseq
          %v2813 = vshrl.u32 %v2812, 7
          %v2814 = vsub.s32 %v2811, %v2813
          %v2815 = vrot.slane %v2807, %v2814
          %v2817 = vunpack.c.l.s4 1983009808
          %v2818 = vunpack.c.0.s8 %v2817
          %v2819 = vlaneseq
          %v2820 = vshrl.u32 %v2819, 7
          %v2821 = vsub.s32 %v2818, %v2820
          %v2822 = vrot.slane %v2808, %v2821
          %v2823 = vcombine.low %v2815, %v2822
          %v2826 = vadd.f32 %v2754, %v2806
          %v2827 = vadd.f32 %v2755, %v2823
          %v2828 = vmax.f32 %v2826, 0.0
          %v2829 = vmax.f32 %v2827, 0.0
          %v2830 = vld [vmem:[%s3] sm:$0xff]
          %v2831 = vld [vmem:[%s3 + $0x8] sm:$0xff]
          %v2832 = vld [vmem:[%s3 + $0x10] sm:$0xff]
          %v2833 = vld [vmem:[%s3 + $0x18] sm:$0xff]
          %v2834 = vld [vmem:[%s3 + $0x20] sm:$0xff]
          %v2835 = vld [vmem:[%s3 + $0x28] sm:$0xff]
          %v2836 = vld [vmem:[%s3 + $0x30] sm:$0xff]
          %v2837 = vld [vmem:[%s3 + $0x38] sm:$0xff]
          %v2838 = vld [vmem:[%s3 + $0x40] sm:$0xff]
          %v2839 = vld [vmem:[%s3 + $0x48] sm:$0xff]
          %v2840 = vld [vmem:[%s3 + $0x50] sm:$0xff]
          %v2841 = vld [vmem:[%s3 + $0x58] sm:$0xff]
          %v2842 = vld [vmem:[%s3 + $0x60] sm:$0xff]
          %v2843 = vld [vmem:[%s3 + $0x68] sm:$0xff]
          %v2844 = vld [vmem:[%s3 + $0x70] sm:$0xff]
          %v2845 = vld [vmem:[%s3 + $0x78] sm:$0xff]
          %v2846 = vld [vmem:[%s3 + $0x80] sm:$0xff]
          %v2847 = vld [vmem:[%s3 + $0x88] sm:$0xff]
          %v2848 = vld [vmem:[%s3 + $0x90] sm:$0xff]
          %v2849 = vld [vmem:[%s3 + $0x98] sm:$0xff]
          %v2850 = vld [vmem:[%s3 + $0xa0] sm:$0xff]
          %v2851 = vld [vmem:[%s3 + $0xa8] sm:$0xff]
          %v2852 = vld [vmem:[%s3 + $0xb0] sm:$0xff]
          %v2853 = vld [vmem:[%s3 + $0xb8] sm:$0xff]
          %v2854 = vld [vmem:[%s3 + $0xc0] sm:$0xff]
          %v2855 = vld [vmem:[%s3 + $0xc8] sm:$0xff]
          %v2856 = vld [vmem:[%s3 + $0xd0] sm:$0xff]
          %v2857 = vld [vmem:[%s3 + $0xd8] sm:$0xff]
          %v2858 = vld [vmem:[%s3 + $0xe0] sm:$0xff]
          %v2859 = vld [vmem:[%s3 + $0xe8] sm:$0xff]
          %v2860 = vld [vmem:[%s3 + $0xf0] sm:$0xff]
          %v2861 = vld [vmem:[%s3 + $0xf8] sm:$0xff]
          %v2862 = vld [vmem:[%s3 + $0x100] sm:$0xff]
          %v2863 = vld [vmem:[%s3 + $0x108] sm:$0xff]
          %v2864 = vld [vmem:[%s3 + $0x110] sm:$0xff]
          %v2865 = vld [vmem:[%s3 + $0x118] sm:$0xff]
          %v2866 = vld [vmem:[%s3 + $0x120] sm:$0xff]
          %v2867 = vld [vmem:[%s3 + $0x128] sm:$0xff]
          %v2868 = vld [vmem:[%s3 + $0x130] sm:$0xff]
          %v2869 = vld [vmem:[%s3 + $0x138] sm:$0xff]
          %v2870 = vld [vmem:[%s3 + $0x140] sm:$0xff]
          %v2871 = vld [vmem:[%s3 + $0x148] sm:$0xff]
          %v2872 = vld [vmem:[%s3 + $0x150] sm:$0xff]
          %v2873 = vld [vmem:[%s3 + $0x158] sm:$0xff]
          %v2874 = vld [vmem:[%s3 + $0x160] sm:$0xff]
          %v2875 = vld [vmem:[%s3 + $0x168] sm:$0xff]
          %v2876 = vld [vmem:[%s3 + $0x170] sm:$0xff]
          %v2877 = vld [vmem:[%s3 + $0x178] sm:$0xff]
          %v2878 = vld [vmem:[%s3 + $0x180] sm:$0xff]
          %v2879 = vld [vmem:[%s3 + $0x188] sm:$0xff]
          %v2880 = vld [vmem:[%s3 + $0x190] sm:$0xff]
          %v2881 = vld [vmem:[%s3 + $0x198] sm:$0xff]
          %v2882 = vld [vmem:[%s3 + $0x1a0] sm:$0xff]
          %v2883 = vld [vmem:[%s3 + $0x1a8] sm:$0xff]
          %v2884 = vld [vmem:[%s3 + $0x1b0] sm:$0xff]
          %v2885 = vld [vmem:[%s3 + $0x1b8] sm:$0xff]
          %v2886 = vld [vmem:[%s3 + $0x1c0] sm:$0xff]
          %v2887 = vld [vmem:[%s3 + $0x1c8] sm:$0xff]
          %v2888 = vld [vmem:[%s3 + $0x1d0] sm:$0xff]
          %v2889 = vld [vmem:[%s3 + $0x1d8] sm:$0xff]
          %v2890 = vld [vmem:[%s3 + $0x1e0] sm:$0xff]
          %v2891 = vld [vmem:[%s3 + $0x1e8] sm:$0xff]
          %v2892 = vld [vmem:[%s3 + $0x1f0] sm:$0xff]
          %v2893 = vld [vmem:[%s3 + $0x1f8] sm:$0xff]
          %v2894 = vld [vmem:[%s3 + $0x200] sm:$0xff]
          %v2895 = vld [vmem:[%s3 + $0x208] sm:$0xff]
          %v2896 = vld [vmem:[%s3 + $0x210] sm:$0xff]
          %v2897 = vld [vmem:[%s3 + $0x218] sm:$0xff]
          %v2898 = vld [vmem:[%s3 + $0x220] sm:$0xff]
          %v2899 = vld [vmem:[%s3 + $0x228] sm:$0xff]
          %v2900 = vld [vmem:[%s3 + $0x230] sm:$0xff]
          %v2901 = vld [vmem:[%s3 + $0x238] sm:$0xff]
          %v2902 = vld [vmem:[%s3 + $0x240] sm:$0xff]
          %v2903 = vld [vmem:[%s3 + $0x248] sm:$0xff]
          %v2904 = vld [vmem:[%s3 + $0x250] sm:$0xff]
          %v2905 = vld [vmem:[%s3 + $0x258] sm:$0xff]
          %v2906 = vld [vmem:[%s3 + $0x260] sm:$0xff]
          %v2907 = vld [vmem:[%s3 + $0x268] sm:$0xff]
          %v2908 = vld [vmem:[%s3 + $0x270] sm:$0xff]
          %v2909 = vld [vmem:[%s3 + $0x278] sm:$0xff]
          %v2910 = vld [vmem:[%s3 + $0x280] sm:$0xff]
          %v2911 = vld [vmem:[%s3 + $0x288] sm:$0xff]
          %v2912 = vld [vmem:[%s3 + $0x290] sm:$0xff]
          %v2913 = vld [vmem:[%s3 + $0x298] sm:$0xff]
          %v2914 = vld [vmem:[%s3 + $0x2a0] sm:$0xff]
          %v2915 = vld [vmem:[%s3 + $0x2a8] sm:$0xff]
          %v2916 = vld [vmem:[%s3 + $0x2b0] sm:$0xff]
          %v2917 = vld [vmem:[%s3 + $0x2b8] sm:$0xff]
          %v2918 = vld [vmem:[%s3 + $0x2c0] sm:$0xff]
          %v2919 = vld [vmem:[%s3 + $0x2c8] sm:$0xff]
          %v2920 = vld [vmem:[%s3 + $0x2d0] sm:$0xff]
          %v2921 = vld [vmem:[%s3 + $0x2d8] sm:$0xff]
          %v2922 = vld [vmem:[%s3 + $0x2e0] sm:$0xff]
          %v2923 = vld [vmem:[%s3 + $0x2e8] sm:$0xff]
          %v2924 = vld [vmem:[%s3 + $0x2f0] sm:$0xff]
          %v2925 = vld [vmem:[%s3 + $0x2f8] sm:$0xff]
          %v2926 = vld [vmem:[%s3 + $0x300] sm:$0xff]
          %v2927 = vld [vmem:[%s3 + $0x308] sm:$0xff]
          %v2928 = vld [vmem:[%s3 + $0x310] sm:$0xff]
          %v2929 = vld [vmem:[%s3 + $0x318] sm:$0xff]
          %v2930 = vld [vmem:[%s3 + $0x320] sm:$0xff]
          %v2931 = vld [vmem:[%s3 + $0x328] sm:$0xff]
          %v2932 = vld [vmem:[%s3 + $0x330] sm:$0xff]
          %v2933 = vld [vmem:[%s3 + $0x338] sm:$0xff]
          %v2934 = vld [vmem:[%s3 + $0x340] sm:$0xff]
          %v2935 = vld [vmem:[%s3 + $0x348] sm:$0xff]
          %v2936 = vld [vmem:[%s3 + $0x350] sm:$0xff]
          %v2937 = vld [vmem:[%s3 + $0x358] sm:$0xff]
          %v2938 = vld [vmem:[%s3 + $0x360] sm:$0xff]
          %v2939 = vld [vmem:[%s3 + $0x368] sm:$0xff]
          %v2940 = vld [vmem:[%s3 + $0x370] sm:$0xff]
          %v2941 = vld [vmem:[%s3 + $0x378] sm:$0xff]
          %v2942 = vld [vmem:[%s3 + $0x380] sm:$0xff]
          %v2943 = vld [vmem:[%s3 + $0x388] sm:$0xff]
          %v2944 = vld [vmem:[%s3 + $0x390] sm:$0xff]
          %v2945 = vld [vmem:[%s3 + $0x398] sm:$0xff]
          %v2946 = vld [vmem:[%s3 + $0x3a0] sm:$0xff]
          %v2947 = vld [vmem:[%s3 + $0x3a8] sm:$0xff]
          %v2948 = vld [vmem:[%s3 + $0x3b0] sm:$0xff]
          %v2949 = vld [vmem:[%s3 + $0x3b8] sm:$0xff]
          %v2950 = vld [vmem:[%s3 + $0x3c0] sm:$0xff]
          %v2951 = vld [vmem:[%s3 + $0x3c8] sm:$0xff]
          %v2952 = vld [vmem:[%s3 + $0x3d0] sm:$0xff]
          %v2953 = vld [vmem:[%s3 + $0x3d8] sm:$0xff]
          %v2954 = vld [vmem:[%s3 + $0x3e0] sm:$0xff]
          %v2955 = vld [vmem:[%s3 + $0x3e8] sm:$0xff]
          %v2956 = vld [vmem:[%s3 + $0x3f0] sm:$0xff]
          %v2957 = vld [vmem:[%s3 + $0x3f8] sm:$0xff]
          %v2958 = vld [vmem:[%s4] sm:$0x1]
          %v2960 = vlaneseq
          %v2961 = vshrl.u32 %v2960, 7
          %v2962 = vsub.s32 0, %v2961
          %v2963 = vrot.slane %v2958, %v2962
          %v2967 = vcombine.high %v2828, %v2828
          %v2969 = vunpack.c.l.s4 1983009808
          %v2970 = vunpack.c.0.s8 %v2969
          %v2971 = vlaneseq
          %v2972 = vshrl.u32 %v2971, 7
          %v2973 = vsub.s32 %v2970, %v2972
          %v2974 = vrot.slane %v2828, %v2973
          %v2976 = vunpack.c.l.s4 1983009808
          %v2977 = vunpack.c.0.s8 %v2976
          %v2978 = vlaneseq
          %v2979 = vshrl.u32 %v2978, 7
          %v2980 = vsub.s32 %v2977, %v2979
          %v2981 = vrot.slane %v2967, %v2980
          %v2982 = vcombine.high %v2974, %v2974
          %v2983 = vcombine.high %v2981, %v2981
          %v2984 = vcombine.high %v2829, %v2829
          %v2986 = vunpack.c.l.s4 1983009808
          %v2987 = vunpack.c.0.s8 %v2986
          %v2988 = vlaneseq
          %v2989 = vshrl.u32 %v2988, 7
          %v2990 = vsub.s32 %v2987, %v2989
          %v2991 = vrot.slane %v2829, %v2990
          %v2993 = vunpack.c.l.s4 1983009808
          %v2994 = vunpack.c.0.s8 %v2993
          %v2995 = vlaneseq
          %v2996 = vshrl.u32 %v2995, 7
          %v2997 = vsub.s32 %v2994, %v2996
          %v2998 = vrot.slane %v2984, %v2997
          %v2999 = vcombine.high %v2991, %v2991
          %v3000 = vcombine.high %v2998, %v2998
          %3009 = vmatprep.subr.mxu0 0.0
          %3010 = vmatpush1.msra.mxu0 %v2830
          %3011 = vmatprep.subr.mxu0 0.0
          %3012 = vmatpush1.msra.mxu0 %v2831
          %3013 = vmatprep.subr.mxu0 0.0
          %3014 = vmatpush1.msra.mxu0 %v2832
          %3015 = vmatprep.subr.mxu0 0.0
          %3016 = vmatpush1.msra.mxu0 %v2833
          %3017 = vmatprep.subr.mxu0 0.0
          %3018 = vmatpush1.msra.mxu0 %v2834
          %3019 = vmatprep.subr.mxu0 0.0
          %3020 = vmatpush1.msra.mxu0 %v2835
          %3021 = vmatprep.subr.mxu0 0.0
          %3022 = vmatpush1.msra.mxu0 %v2836
          %3023 = vmatprep.subr.mxu0 0.0
          %3024 = vmatpush1.msra.mxu0 %v2837
          %3025 = vmatprep.subr.mxu0 0.0
          %3026 = vmatpush1.msra.mxu0 %v2838
          %3027 = vmatprep.subr.mxu0 0.0
          %3028 = vmatpush1.msra.mxu0 %v2839
          %3029 = vmatprep.subr.mxu0 0.0
          %3030 = vmatpush1.msra.mxu0 %v2840
          %3031 = vmatprep.subr.mxu0 0.0
          %3032 = vmatpush1.msra.mxu0 %v2841
          %3033 = vmatprep.subr.mxu0 0.0
          %3034 = vmatpush1.msra.mxu0 %v2842
          %3035 = vmatprep.subr.mxu0 0.0
          %3036 = vmatpush1.msra.mxu0 %v2843
          %3037 = vmatprep.subr.mxu0 0.0
          %3038 = vmatpush1.msra.mxu0 %v2844
          %3039 = vmatprep.subr.mxu0 0.0
          %3040 = vmatpush1.msra.mxu0 %v2845
          %3041 = vmatprep.subr.mxu0 0.0
          %3042 = vmatpush1.msra.mxu0 %v2846
          %3043 = vmatprep.subr.mxu0 0.0
          %3044 = vmatpush1.msra.mxu0 %v2847
          %3045 = vmatprep.subr.mxu0 0.0
          %3046 = vmatpush1.msra.mxu0 %v2848
          %3047 = vmatprep.subr.mxu0 0.0
          %3048 = vmatpush1.msra.mxu0 %v2849
          %3049 = vmatprep.subr.mxu0 0.0
          %3050 = vmatpush1.msra.mxu0 %v2850
          %3051 = vmatprep.subr.mxu0 0.0
          %3052 = vmatpush1.msra.mxu0 %v2851
          %3053 = vmatprep.subr.mxu0 0.0
          %3054 = vmatpush1.msra.mxu0 %v2852
          %3055 = vmatprep.subr.mxu0 0.0
          %3056 = vmatpush1.msra.mxu0 %v2853
          %3057 = vmatprep.subr.mxu0 0.0
          %3058 = vmatpush1.msra.mxu0 %v2854
          %3059 = vmatprep.subr.mxu0 0.0
          %3060 = vmatpush1.msra.mxu0 %v2855
          %3061 = vmatprep.subr.mxu0 0.0
          %3062 = vmatpush1.msra.mxu0 %v2856
          %3063 = vmatprep.subr.mxu0 0.0
          %3064 = vmatpush1.msra.mxu0 %v2857
          %3065 = vmatprep.subr.mxu0 0.0
          %3066 = vmatpush1.msra.mxu0 %v2858
          %3067 = vmatprep.subr.mxu0 0.0
          %3068 = vmatpush1.msra.mxu0 %v2859
          %3069 = vmatprep.subr.mxu0 0.0
          %3070 = vmatpush1.msra.mxu0 %v2860
          %3071 = vmatprep.subr.mxu0 0.0
          %3072 = vmatpush1.msra.mxu0 %v2861
          %3073 = vmatprep.mubr.f32.mxu0 %v2982
          %3074 = vmatmul.mubr.f32.gmra.mrb[0].mxu0 %v2974
          %v3075 = vpop.f32.mrb[0].mxu0
          %v3076 = vadd.f32 %v2963, %v3075
          %v3077 = vpop.f32.mrb[0].mxu0
          %3078 = vdwg.mxu0
          %3079 = vmatprep.subr.mxu0 0.0
          %3080 = vmatpush1.msra.mxu0 %v2862
          %3081 = vmatprep.subr.mxu0 0.0
          %3082 = vmatpush1.msra.mxu0 %v2863
          %3083 = vmatprep.subr.mxu0 0.0
          %3084 = vmatpush1.msra.mxu0 %v2864
          %3085 = vmatprep.subr.mxu0 0.0
          %3086 = vmatpush1.msra.mxu0 %v2865
          %3087 = vmatprep.subr.mxu0 0.0
          %3088 = vmatpush1.msra.mxu0 %v2866
          %3089 = vmatprep.subr.mxu0 0.0
          %3090 = vmatpush1.msra.mxu0 %v2867
          %3091 = vmatprep.subr.mxu0 0.0
          %3092 = vmatpush1.msra.mxu0 %v2868
          %3093 = vmatprep.subr.mxu0 0.0
          %3094 = vmatpush1.msra.mxu0 %v2869
          %3095 = vmatprep.subr.mxu0 0.0
          %3096 = vmatpush1.msra.mxu0 %v2870
          %3097 = vmatprep.subr.mxu0 0.0
          %3098 = vmatpush1.msra.mxu0 %v2871
          %3099 = vmatprep.subr.mxu0 0.0
          %3100 = vmatpush1.msra.mxu0 %v2872
          %3101 = vmatprep.subr.mxu0 0.0
          %3102 = vmatpush1.msra.mxu0 %v2873
          %3103 = vmatprep.subr.mxu0 0.0
          %3104 = vmatpush1.msra.mxu0 %v2874
          %3105 = vmatprep.subr.mxu0 0.0
          %3106 = vmatpush1.msra.mxu0 %v2875
          %3107 = vmatprep.subr.mxu0 0.0
          %3108 = vmatpush1.msra.mxu0 %v2876
          %3109 = vmatprep.subr.mxu0 0.0
          %3110 = vmatpush1.msra.mxu0 %v2877
          %3111 = vmatprep.subr.mxu0 0.0
          %3112 = vmatpush1.msra.mxu0 %v2878
          %3113 = vmatprep.subr.mxu0 0.0
          %3114 = vmatpush1.msra.mxu0 %v2879
          %3115 = vmatprep.subr.mxu0 0.0
          %3116 = vmatpush1.msra.mxu0 %v2880
          %3117 = vmatprep.subr.mxu0 0.0
          %3118 = vmatpush1.msra.mxu0 %v2881
          %3119 = vmatprep.subr.mxu0 0.0
          %3120 = vmatpush1.msra.mxu0 %v2882
          %3121 = vmatprep.subr.mxu0 0.0
          %3122 = vmatpush1.msra.mxu0 %v2883
          %3123 = vmatprep.subr.mxu0 0.0
          %3124 = vmatpush1.msra.mxu0 %v2884
          %3125 = vmatprep.subr.mxu0 0.0
          %3126 = vmatpush1.msra.mxu0 %v2885
          %3127 = vmatprep.subr.mxu0 0.0
          %3128 = vmatpush1.msra.mxu0 %v2886
          %3129 = vmatprep.subr.mxu0 0.0
          %3130 = vmatpush1.msra.mxu0 %v2887
          %3131 = vmatprep.subr.mxu0 0.0
          %3132 = vmatpush1.msra.mxu0 %v2888
          %3133 = vmatprep.subr.mxu0 0.0
          %3134 = vmatpush1.msra.mxu0 %v2889
          %3135 = vmatprep.subr.mxu0 0.0
          %3136 = vmatpush1.msra.mxu0 %v2890
          %3137 = vmatprep.subr.mxu0 0.0
          %3138 = vmatpush1.msra.mxu0 %v2891
          %3139 = vmatprep.subr.mxu0 0.0
          %3140 = vmatpush1.msra.mxu0 %v2892
          %3141 = vmatprep.subr.mxu0 0.0
          %3142 = vmatpush1.msra.mxu0 %v2893
          %3143 = vmatprep.mubr.f32.mxu0 %v2983
          %3144 = vmatmul.mubr.f32.gmra.mrb[0].mxu0 %v2981
          %v3145 = vpop.f32.mrb[0].mxu0
          %v3146 = vadd.f32 %v3076, %v3145
          %v3147 = vpop.f32.mrb[0].mxu0
          %3148 = vdwg.mxu0
          %3149 = vmatprep.subr.mxu0 0.0
          %3150 = vmatpush1.msra.mxu0 %v2894
          %3151 = vmatprep.subr.mxu0 0.0
          %3152 = vmatpush1.msra.mxu0 %v2895
          %3153 = vmatprep.subr.mxu0 0.0
          %3154 = vmatpush1.msra.mxu0 %v2896
          %3155 = vmatprep.subr.mxu0 0.0
          %3156 = vmatpush1.msra.mxu0 %v2897
          %3157 = vmatprep.subr.mxu0 0.0
          %3158 = vmatpush1.msra.mxu0 %v2898
          %3159 = vmatprep.subr.mxu0 0.0
          %3160 = vmatpush1.msra.mxu0 %v2899
          %3161 = vmatprep.subr.mxu0 0.0
          %3162 = vmatpush1.msra.mxu0 %v2900
          %3163 = vmatprep.subr.mxu0 0.0
          %3164 = vmatpush1.msra.mxu0 %v2901
          %3165 = vmatprep.subr.mxu0 0.0
          %3166 = vmatpush1.msra.mxu0 %v2902
          %3167 = vmatprep.subr.mxu0 0.0
          %3168 = vmatpush1.msra.mxu0 %v2903
          %3169 = vmatprep.subr.mxu0 0.0
          %3170 = vmatpush1.msra.mxu0 %v2904
          %3171 = vmatprep.subr.mxu0 0.0
          %3172 = vmatpush1.msra.mxu0 %v2905
          %3173 = vmatprep.subr.mxu0 0.0
          %3174 = vmatpush1.msra.mxu0 %v2906
          %3175 = vmatprep.subr.mxu0 0.0
          %3176 = vmatpush1.msra.mxu0 %v2907
          %3177 = vmatprep.subr.mxu0 0.0
          %3178 = vmatpush1.msra.mxu0 %v2908
          %3179 = vmatprep.subr.mxu0 0.0
          %3180 = vmatpush1.msra.mxu0 %v2909
          %3181 = vmatprep.subr.mxu0 0.0
          %3182 = vmatpush1.msra.mxu0 %v2910
          %3183 = vmatprep.subr.mxu0 0.0
          %3184 = vmatpush1.msra.mxu0 %v2911
          %3185 = vmatprep.subr.mxu0 0.0
          %3186 = vmatpush1.msra.mxu0 %v2912
          %3187 = vmatprep.subr.mxu0 0.0
          %3188 = vmatpush1.msra.mxu0 %v2913
          %3189 = vmatprep.subr.mxu0 0.0
          %3190 = vmatpush1.msra.mxu0 %v2914
          %3191 = vmatprep.subr.mxu0 0.0
          %3192 = vmatpush1.msra.mxu0 %v2915
          %3193 = vmatprep.subr.mxu0 0.0
          %3194 = vmatpush1.msra.mxu0 %v2916
          %3195 = vmatprep.subr.mxu0 0.0
          %3196 = vmatpush1.msra.mxu0 %v2917
          %3197 = vmatprep.subr.mxu0 0.0
          %3198 = vmatpush1.msra.mxu0 %v2918
          %3199 = vmatprep.subr.mxu0 0.0
          %3200 = vmatpush1.msra.mxu0 %v2919
          %3201 = vmatprep.subr.mxu0 0.0
          %3202 = vmatpush1.msra.mxu0 %v2920
          %3203 = vmatprep.subr.mxu0 0.0
          %3204 = vmatpush1.msra.mxu0 %v2921
          %3205 = vmatprep.subr.mxu0 0.0
          %3206 = vmatpush1.msra.mxu0 %v2922
          %3207 = vmatprep.subr.mxu0 0.0
          %3208 = vmatpush1.msra.mxu0 %v2923
          %3209 = vmatprep.subr.mxu0 0.0
          %3210 = vmatpush1.msra.mxu0 %v2924
          %3211 = vmatprep.subr.mxu0 0.0
          %3212 = vmatpush1.msra.mxu0 %v2925
          %3213 = vmatprep.mubr.f32.mxu0 %v2999
          %3214 = vmatmul.mubr.f32.gmra.mrb[0].mxu0 %v2991
          %v3215 = vpop.f32.mrb[0].mxu0
          %v3216 = vadd.f32 %v3146, %v3215
          %v3217 = vpop.f32.mrb[0].mxu0
          %3218 = vdwg.mxu0
          %3219 = vmatprep.subr.mxu0 0.0
          %3220 = vmatpush1.msra.mxu0 %v2926
          %3221 = vmatprep.subr.mxu0 0.0
          %3222 = vmatpush1.msra.mxu0 %v2927
          %3223 = vmatprep.subr.mxu0 0.0
          %3224 = vmatpush1.msra.mxu0 %v2928
          %3225 = vmatprep.subr.mxu0 0.0
          %3226 = vmatpush1.msra.mxu0 %v2929
          %3227 = vmatprep.subr.mxu0 0.0
          %3228 = vmatpush1.msra.mxu0 %v2930
          %3229 = vmatprep.subr.mxu0 0.0
          %3230 = vmatpush1.msra.mxu0 %v2931
          %3231 = vmatprep.subr.mxu0 0.0
          %3232 = vmatpush1.msra.mxu0 %v2932
          %3233 = vmatprep.subr.mxu0 0.0
          %3234 = vmatpush1.msra.mxu0 %v2933
          %3235 = vmatprep.subr.mxu0 0.0
          %3236 = vmatpush1.msra.mxu0 %v2934
          %3237 = vmatprep.subr.mxu0 0.0
          %3238 = vmatpush1.msra.mxu0 %v2935
          %3239 = vmatprep.subr.mxu0 0.0
          %3240 = vmatpush1.msra.mxu0 %v2936
          %3241 = vmatprep.subr.mxu0 0.0
          %3242 = vmatpush1.msra.mxu0 %v2937
          %3243 = vmatprep.subr.mxu0 0.0
          %3244 = vmatpush1.msra.mxu0 %v2938
          %3245 = vmatprep.subr.mxu0 0.0
          %3246 = vmatpush1.msra.mxu0 %v2939
          %3247 = vmatprep.subr.mxu0 0.0
          %3248 = vmatpush1.msra.mxu0 %v2940
          %3249 = vmatprep.subr.mxu0 0.0
          %3250 = vmatpush1.msra.mxu0 %v2941
          %3251 = vmatprep.subr.mxu0 0.0
          %3252 = vmatpush1.msra.mxu0 %v2942
          %3253 = vmatprep.subr.mxu0 0.0
          %3254 = vmatpush1.msra.mxu0 %v2943
          %3255 = vmatprep.subr.mxu0 0.0
          %3256 = vmatpush1.msra.mxu0 %v2944
          %3257 = vmatprep.subr.mxu0 0.0
          %3258 = vmatpush1.msra.mxu0 %v2945
          %3259 = vmatprep.subr.mxu0 0.0
          %3260 = vmatpush1.msra.mxu0 %v2946
          %3261 = vmatprep.subr.mxu0 0.0
          %3262 = vmatpush1.msra.mxu0 %v2947
          %3263 = vmatprep.subr.mxu0 0.0
          %3264 = vmatpush1.msra.mxu0 %v2948
          %3265 = vmatprep.subr.mxu0 0.0
          %3266 = vmatpush1.msra.mxu0 %v2949
          %3267 = vmatprep.subr.mxu0 0.0
          %3268 = vmatpush1.msra.mxu0 %v2950
          %3269 = vmatprep.subr.mxu0 0.0
          %3270 = vmatpush1.msra.mxu0 %v2951
          %3271 = vmatprep.subr.mxu0 0.0
          %3272 = vmatpush1.msra.mxu0 %v2952
          %3273 = vmatprep.subr.mxu0 0.0
          %3274 = vmatpush1.msra.mxu0 %v2953
          %3275 = vmatprep.subr.mxu0 0.0
          %3276 = vmatpush1.msra.mxu0 %v2954
          %3277 = vmatprep.subr.mxu0 0.0
          %3278 = vmatpush1.msra.mxu0 %v2955
          %3279 = vmatprep.subr.mxu0 0.0
          %3280 = vmatpush1.msra.mxu0 %v2956
          %3281 = vmatprep.subr.mxu0 0.0
          %3282 = vmatpush1.msra.mxu0 %v2957
          %3283 = vmatprep.mubr.f32.mxu0 %v3000
          %3284 = vmatmul.mubr.f32.gmra.mrb[0].mxu0 %v2998
          %v3285 = vpop.f32.mrb[0].mxu0
          %v3286 = vadd.f32 %v3216, %v3285
          %v3287 = vpop.f32.mrb[0].mxu0
          %3288 = vdwg.mxu0
          %3290 = vset.pattern.permute.xlu0 4
          %3291 = vperm.xlu0 %3290, %v3286
          %v3292 = vpop.permute.xlu0 %3291
          %v3294 = vadd.f32 %v3292, %v3286
          %vm3295 = vcmask 25600
          %v3296 = vsel %vm3295, %v3286, 0.0
          %3297 = vadd.xlane.f32.xlu0 %v3296
          %v3298 = vpop.xlane.xlu0 %3297
          %v3299 = vrot.slane %v3298, 4
          %v3300 = vadd.f32 %v3298, %v3299
          %v3301 = vrot.slane %v3300, 2
          %v3302 = vadd.f32 %v3300, %v3301
          %v3303 = vrot.slane %v3302, 1
          %v3304 = vadd.f32 %v3302, %v3303
          %s3305 = vtos %v3304
          %v3306 = vrcp.pop 8.0
          %s3307 = vtos %v3306
          %s3308 = smul.f32 %s3305, %s3307
          %v3309 = vstv %s3308
          %v3310 = vsub.f32 %v3294, %v3309
          %3311 = vst.msk [vmem:[#allocation3] sm:$0x3] %vm3295, %v3310
        $region48: #{dueling_dqn_forward.7} parent=39 // pred_fallthru
          _
        // Predicated region
        $region49: #{dueling_dqn_forward.7} parent=39 // pred_check
          %p3312 = pneg %p145
        $region50: #{dueling_dqn_forward.7} parent=39 // pred_check_branch
          %3314 = sbr.rel (%p3312) target = $region52
        $region51: #{dueling_dqn_forward.7} parent=39 // pred_region
          %s3316 = ssub.s32 32, 32
          %3317 = vsyncadd [#allocation4], %s3316
          %s3319 = sshll.u32 [#allocation3], 4
          %s3320 = int_to_ptr.vmem [resolvable:$true] %s3319
          %3322 = dma.vmem_to_hbm [thread:$0]  %s3320, 32, %s5, [#allocation4]
        $region52: #{dueling_dqn_forward.7} parent=39 // pred_fallthru
          _
        // Predicated region
        $region53: #{dueling_dqn_forward.7} parent=39 // pred_check
          %p3323 = pneg %p145
        $region54: #{dueling_dqn_forward.7} parent=39 // pred_check_branch
          %3325 = sbr.rel (%p3323) target = $region56
        $region55: #{dueling_dqn_forward.7} parent=39 // pred_region
          %3326 = dma.done [#allocation4], 32
        $region56: #{dueling_dqn_forward.7} parent=39 // pred_fallthru
          _
      $region40: #{dueling_dqn_forward.7} parent=5 // pred_fallthru
        _
      %p3327 = scmp.le.s32.totalorder 2, %s12
      // Predicated region
      $region57: #{dueling_dqn_forward.7} parent=5 // pred_check
        %p3328 = pneg %p3327
      $region58: #{dueling_dqn_forward.7} parent=5 // pred_check_branch
        %3330 = sbr.rel (%p3328) target = $region60
      $region59: #{dueling_dqn_forward.7} parent=5 // pred_region
        %s3331 = ssub.s32 %s12, 2
      $region60: #{dueling_dqn_forward.7} parent=5 // pred_fallthru
        _
    $region6: #{dueling_dqn_forward.7} parent=1 // loop_footer
      %s16 = sadd.s32 1, %s12
    $region7: #{dueling_dqn_forward.7} parent=1 // loop_footer_branch
      %11 = sbr.rel target = $region3
    $region8: #{dueling_dqn_forward.7} parent=1 // loop_exit
      _
    %3332 = vsyncpa [#allocation4], 1
    %s3333 = scalar_lea.sflag [#allocation4], 1
    %3334 = vsyncpa %s3333, 1

</llo_original>
